<compile_context>
chip_gen: v5e
topology: v5e:2x2
jax: 0.10.0
libtpu: 0.0.40
codegen_flags: <defaults>
</compile_context>

<pallas_src>
import jax
import jax.numpy as jnp
from jax.experimental import pallas as pl
from jax.experimental.pallas import tpu as pltpu


def _round_up(x, m):
    return (x + m - 1) // m * m


# ---------------------------------------------------------------------------
# Pallas kernels: in-VMEM im2col -> MXU matmul -> +shift [+residual] -> ReLU
# ---------------------------------------------------------------------------
def _conv3x3_bn_relu_kernel(x_ref, w_ref, shift_ref, out_ref):
    hp, wp, cp = x_ref.shape                 # (H+2, W+2, Cp)
    h, w = hp - 2, wp - 2
    x = x_ref[...]                           # bf16 halo block, lives in VMEM
    cols = [x[kh:kh + h, kw:kw + w, :].reshape(h * w, cp)
            for kh in range(3) for kw in range(3)]   # in-VMEM im2col
    patches = jnp.concatenate(cols, axis=1)          # (H*W, 9*Cp)
    y = jnp.dot(patches, w_ref[...], preferred_element_type=jnp.float32)
    y = y + shift_ref[...]                           # folded-BN shift
    out_ref[...] = jnp.maximum(y, 0.0).astype(out_ref.dtype)


def _conv3x3_bn_add_relu_kernel(x_ref, w_ref, shift_ref, res_ref, out_ref):
    hp, wp, cp = x_ref.shape
    h, w = hp - 2, wp - 2
    x = x_ref[...]
    cols = [x[kh:kh + h, kw:kw + w, :].reshape(h * w, cp)
            for kh in range(3) for kw in range(3)]
    patches = jnp.concatenate(cols, axis=1)
    y = jnp.dot(patches, w_ref[...], preferred_element_type=jnp.float32)
    y = y + shift_ref[...] + res_ref[...].astype(jnp.float32)   # BN shift + identity
    out_ref[...] = jnp.maximum(y, 0.0).astype(out_ref.dtype)


# ---------------------------------------------------------------------------
# pallas_call wrapper: one grid step == one image (rows = H*W per matmul)
# ---------------------------------------------------------------------------
def _fused_conv3x3(x_pad, w2d, shift, residual=None, out_dtype=jnp.bfloat16):
    """x_pad: (N, H+2, W+2, Cp) bf16 (spatial+channel padded)
       w2d:   (9*Cp, CoutP) bf16, BN scale already folded in
       shift: (1, CoutP) f32
       residual: optional (N, H*W, CoutP) bf16
       returns (N, H, W, CoutP) in out_dtype."""
    n, hp, wp, cp = x_pad.shape
    h, w = hp - 2, wp - 2
    k, cout_p = w2d.shape

    in_specs = [
        pl.BlockSpec((None, hp, wp, cp), lambda i: (i, 0, 0, 0)),   # halo block
        pl.BlockSpec((k, cout_p), lambda i: (0, 0)),                # weights (resident)
        pl.BlockSpec((1, cout_p), lambda i: (0, 0)),                # BN shift
    ]
    args = [x_pad, w2d, shift]
    if residual is None:
        kernel = _conv3x3_bn_relu_kernel
    else:
        in_specs.append(pl.BlockSpec((None, h * w, cout_p), lambda i: (i, 0, 0)))
        args.append(residual)
        kernel = _conv3x3_bn_add_relu_kernel

    out = pl.pallas_call(
        kernel,
        out_shape=jax.ShapeDtypeStruct((n, h * w, cout_p), out_dtype),
        grid=(n,),
        in_specs=in_specs,
        out_specs=pl.BlockSpec((None, h * w, cout_p), lambda i: (i, 0, 0)),
        compiler_params=pltpu.CompilerParams(
            dimension_semantics=("parallel",),
            vmem_limit_bytes=48 * 1024 * 1024,
        ),
    )(*args)
    return out.reshape(n, h, w, cout_p)


# ---------------------------------------------------------------------------
# Parameter prep (host-side, one-time): BN fold, layout, padding, bf16
# ---------------------------------------------------------------------------
def _fold_bn(gamma, beta, mean, var, eps=1e-5):
    scale = gamma * jax.lax.rsqrt(var + eps)
    shift = beta - mean * scale
    return scale, shift


def _prep_weight(w_oihw, scale, cin_p, cout_p):
    # OIHW -> HWIO, fold BN scale into output channels, pad channels, flatten.
    w = jnp.transpose(w_oihw, (2, 3, 1, 0)).astype(jnp.float32)     # (3,3,Cin,Cout)
    w = w * scale.reshape(1, 1, 1, -1)
    cin, cout = w.shape[2], w.shape[3]
    w = jnp.pad(w, ((0, 0), (0, 0), (0, cin_p - cin), (0, cout_p - cout)))
    return w.reshape(9 * cin_p, cout_p).astype(jnp.bfloat16)


def _prep_shift(shift, cout_p):
    cout = shift.shape[0]
    return jnp.pad(shift.astype(jnp.float32), (0, cout_p - cout)).reshape(1, cout_p)


# ---------------------------------------------------------------------------
# BasicBlock forward (stride=1, downsample=None)
# ---------------------------------------------------------------------------
def basic_block_forward(x_nchw, params, eps=1e-5):
    n, cin, h, w = x_nchw.shape
    cout = params["conv1_w"].shape[0]
    assert params["conv1_w"].shape[1] == cin
    assert params["conv2_w"].shape[:2] == (cout, cout)
    assert cin == cout, "identity residual requires inplanes == planes"
    cp = _round_up(cout, 128)                # lane-dense channel padding

    s1, b1 = _fold_bn(params["bn1_gamma"], params["bn1_beta"],
                      params["bn1_mean"], params["bn1_var"], eps)
    s2, b2 = _fold_bn(params["bn2_gamma"], params["bn2_beta"],
                      params["bn2_mean"], params["bn2_var"], eps)
    w1 = _prep_weight(params["conv1_w"], s1, cp, cp)
    w2 = _prep_weight(params["conv2_w"], s2, cp, cp)
    shift1 = _prep_shift(b1, cp)
    shift2 = _prep_shift(b2, cp)

    # NCHW -> NHWC, channel-pad to Cp, cast bf16 (single cheap HBM pass).
    x_nhwc = jnp.transpose(x_nchw, (0, 2, 3, 1)).astype(jnp.float32)
    x_cp = jnp.pad(x_nhwc, ((0, 0), (0, 0), (0, 0), (0, cp - cin))).astype(jnp.bfloat16)

    x1 = jnp.pad(x_cp, ((0, 0), (1, 1), (1, 1), (0, 0)))           # halo pad
    res = x_cp.reshape(n, h * w, cp)                               # identity (bf16)

    out1 = _fused_conv3x3(x1, w1, shift1, out_dtype=jnp.bfloat16)  # conv1+bn1+relu
    out1_p = jnp.pad(out1, ((0, 0), (1, 1), (1, 1), (0, 0)))
    out2 = _fused_conv3x3(out1_p, w2, shift2, residual=res,
                          out_dtype=jnp.float32)                   # conv2+bn2+id+relu

    out = out2[..., :cout]                                         # drop channel pad
    return jnp.transpose(out, (0, 3, 1, 2))                        # back to NCHW


# ---------------------------------------------------------------------------
# Pure-JAX f32 reference (module semantics) for correctness check
# ---------------------------------------------------------------------------
def basic_block_reference(x_nchw, params):
    def conv(x, w):  # NCHW, OIHW, stride 1, pad 1
        return jax.lax.conv_general_dilated(
            x, w, window_strides=(1, 1), padding=((1, 1), (1, 1)),
            dimension_numbers=("NCHW", "OIHW", "NCHW"))

    def bn(x, g, b, m, v, eps=1e-5):
        g, b, m, v = (a.reshape(1, -1, 1, 1) for a in (g, b, m, v))
        return (x - m) * jax.lax.rsqrt(v + eps) * g + b

    out = conv(x_nchw, params["conv1_w"])
    out = jnp.maximum(bn(out, params["bn1_gamma"], params["bn1_beta"],
                         params["bn1_mean"], params["bn1_var"]), 0.0)
    out = conv(out, params["conv2_w"])
    out = bn(out, params["bn2_gamma"], params["bn2_beta"],
             params["bn2_mean"], params["bn2_var"])
    return jnp.maximum(out + x_nchw, 0.0)


# ---------------------------------------------------------------------------
# Main
# ---------------------------------------------------------------------------
if __name__ == "__main__":
    key = jax.random.PRNGKey(0)
    batch, inplanes, planes, hw = 2, 4, 4, 16   # stride=1, downsample=None

    ks = jax.random.split(key, 10)
    params = {
        "conv1_w": 0.1 * jax.random.normal(ks[0], (planes, inplanes, 3, 3), jnp.float32),
        "conv2_w": 0.1 * jax.random.normal(ks[1], (planes, planes, 3, 3), jnp.float32),
        "bn1_gamma": 1.0 + 0.1 * jax.random.normal(ks[2], (planes,), jnp.float32),
        "bn1_beta": 0.1 * jax.random.normal(ks[3], (planes,), jnp.float32),
        "bn1_mean": 0.1 * jax.random.normal(ks[4], (planes,), jnp.float32),
        "bn1_var": jnp.abs(jax.random.normal(ks[5], (planes,), jnp.float32)) + 0.5,
        "bn2_gamma": 1.0 + 0.1 * jax.random.normal(ks[6], (planes,), jnp.float32),
        "bn2_beta": 0.1 * jax.random.normal(ks[7], (planes,), jnp.float32),
        "bn2_mean": 0.1 * jax.random.normal(ks[8], (planes,), jnp.float32),
        "bn2_var": jnp.abs(jax.random.normal(ks[9], (planes,), jnp.float32)) + 0.5,
    }

    x = jax.random.normal(key, (batch, inplanes, hw, hw), jnp.float32)

    fwd = jax.jit(basic_block_forward)
    y = jax.block_until_ready(fwd(x, params))
    y_ref = jax.block_until_ready(basic_block_reference(x, params))

    assert y.shape == x.shape
    max_err = float(jnp.max(jnp.abs(y - y_ref)))
    # bf16 operands (f32 accumulation) -> loosened tolerance vs f32 reference.
    assert jnp.allclose(y, y_ref, atol=5e-2, rtol=5e-2), max_err
    print("KERNEL_OK")
</pallas_src>

<mosaic_0001>
module attributes {stable_mosaic.version = 11 : i64} {
  func.func @_conv3x3_bn_relu_kernel(%arg0: i32, %arg1: memref<1x18x18x128xbf16, #tpu.memory_space<vmem>>, %arg2: memref<1152x128xbf16, #tpu.memory_space<vmem>>, %arg3: memref<1x128xf32, #tpu.memory_space<vmem>>, %arg4: memref<1x256x128xbf16, #tpu.memory_space<vmem>>) attributes {dimension_semantics = [#tpu.dimension_semantics<parallel>], iteration_bounds = array<i64: 2>, scalar_prefetch = 0 : i64, scratch_operands = 0 : i64, tpu.core_type = #tpu.core_type<tc>, window_params = [{transform_indices = @transform_0, window_bounds = array<i64: 1, 18, 18, 128>}, {pipeline_mode = #tpu.pipeline_mode<synchronous>, transform_indices = @transform_1, window_bounds = array<i64: 1152, 128>}, {pipeline_mode = #tpu.pipeline_mode<synchronous>, transform_indices = @transform_2, window_bounds = array<i64: 1, 128>}, {transform_indices = @transform_3, window_bounds = array<i64: 1, 256, 128>}]} {
    %c0 = arith.constant 0 : index
    %c0_0 = arith.constant 0 : index
    %c0_1 = arith.constant 0 : index
    %c0_2 = arith.constant 0 : index
    %0 = vector.load %arg1[%c0, %c0_0, %c0_1, %c0_2] : memref<1x18x18x128xbf16, #tpu.memory_space<vmem>>, vector<1x18x18x128xbf16>
    %1 = vector.shape_cast %0 : vector<1x18x18x128xbf16> to vector<18x18x128xbf16>
    %2 = vector.extract_strided_slice %1 {offsets = [0, 0, 0], sizes = [16, 16, 128], strides = [1, 1, 1]} : vector<18x18x128xbf16> to vector<16x16x128xbf16>
    %3 = vector.shape_cast %2 : vector<16x16x128xbf16> to vector<256x128xbf16>
    %4 = vector.extract_strided_slice %1 {offsets = [0, 1, 0], sizes = [16, 16, 128], strides = [1, 1, 1]} : vector<18x18x128xbf16> to vector<16x16x128xbf16>
    %5 = vector.shape_cast %4 : vector<16x16x128xbf16> to vector<256x128xbf16>
    %6 = vector.extract_strided_slice %1 {offsets = [0, 2, 0], sizes = [16, 16, 128], strides = [1, 1, 1]} : vector<18x18x128xbf16> to vector<16x16x128xbf16>
    %7 = vector.shape_cast %6 : vector<16x16x128xbf16> to vector<256x128xbf16>
    %8 = vector.extract_strided_slice %1 {offsets = [1, 0, 0], sizes = [16, 16, 128], strides = [1, 1, 1]} : vector<18x18x128xbf16> to vector<16x16x128xbf16>
    %9 = vector.shape_cast %8 : vector<16x16x128xbf16> to vector<256x128xbf16>
    %10 = vector.extract_strided_slice %1 {offsets = [1, 1, 0], sizes = [16, 16, 128], strides = [1, 1, 1]} : vector<18x18x128xbf16> to vector<16x16x128xbf16>
    %11 = vector.shape_cast %10 : vector<16x16x128xbf16> to vector<256x128xbf16>
    %12 = vector.extract_strided_slice %1 {offsets = [1, 2, 0], sizes = [16, 16, 128], strides = [1, 1, 1]} : vector<18x18x128xbf16> to vector<16x16x128xbf16>
    %13 = vector.shape_cast %12 : vector<16x16x128xbf16> to vector<256x128xbf16>
    %14 = vector.extract_strided_slice %1 {offsets = [2, 0, 0], sizes = [16, 16, 128], strides = [1, 1, 1]} : vector<18x18x128xbf16> to vector<16x16x128xbf16>
    %15 = vector.shape_cast %14 : vector<16x16x128xbf16> to vector<256x128xbf16>
    %16 = vector.extract_strided_slice %1 {offsets = [2, 1, 0], sizes = [16, 16, 128], strides = [1, 1, 1]} : vector<18x18x128xbf16> to vector<16x16x128xbf16>
    %17 = vector.shape_cast %16 : vector<16x16x128xbf16> to vector<256x128xbf16>
    %18 = vector.extract_strided_slice %1 {offsets = [2, 2, 0], sizes = [16, 16, 128], strides = [1, 1, 1]} : vector<18x18x128xbf16> to vector<16x16x128xbf16>
    %19 = vector.shape_cast %18 : vector<16x16x128xbf16> to vector<256x128xbf16>
    %20 = tpu.concatenate %3, %5, %7, %9, %11, %13, %15, %17, %19 in 1 : vector<256x128xbf16>, vector<256x128xbf16>, vector<256x128xbf16>, vector<256x128xbf16>, vector<256x128xbf16>, vector<256x128xbf16>, vector<256x128xbf16>, vector<256x128xbf16>, vector<256x128xbf16> -> vector<256x1152xbf16>
    %c0_3 = arith.constant 0 : index
    %c0_4 = arith.constant 0 : index
    %21 = vector.load %arg2[%c0_3, %c0_4] : memref<1152x128xbf16, #tpu.memory_space<vmem>>, vector<1152x128xbf16>
    %cst = arith.constant dense<0.000000e+00> : vector<256x128xf32>
    %22 = tpu.matmul %20, %21, %cst {dimension_numbers = #tpu.dot_dimension_numbers<[1], [0], [0], [1], [0, 0, 1, 1], [], []>} : vector<256x1152xbf16>, vector<1152x128xbf16>, vector<256x128xf32> -> vector<256x128xf32>
    %c0_5 = arith.constant 0 : index
    %c0_6 = arith.constant 0 : index
    %23 = vector.load %arg3[%c0_5, %c0_6] : memref<1x128xf32, #tpu.memory_space<vmem>>, vector<1x128xf32>
    %24 = vector.broadcast %23 : vector<1x128xf32> to vector<256x128xf32>
    %25 = arith.addf %22, %24 : vector<256x128xf32>
    %cst_7 = arith.constant 0.000000e+00 : f32
    %26 = vector.broadcast %cst_7 : f32 to vector<256x128xf32>
    %27 = arith.maximumf %25, %26 : vector<256x128xf32>
    %28 = arith.truncf %27 : vector<256x128xf32> to vector<256x128xbf16>
    %c0_8 = arith.constant 0 : index
    %c0_9 = arith.constant 0 : index
    %c0_10 = arith.constant 0 : index
    %29 = vector.load %arg4[%c0_8, %c0_9, %c0_10] : memref<1x256x128xbf16, #tpu.memory_space<vmem>>, vector<1x256x128xbf16>
    %30 = vector.shape_cast %29 : vector<1x256x128xbf16> to vector<256x128xbf16>
    %31 = vector.shape_cast %28 : vector<256x128xbf16> to vector<1x256x128xbf16>
    tpu.vector_store %arg4[%c0_8, %c0_9, %c0_10], %31 {strides = array<i32>} : memref<1x256x128xbf16, #tpu.memory_space<vmem>>, vector<1x256x128xbf16>,
    return
  }
  func.func @transform_0(%arg0: i32) -> (i32, i32, i32, i32) {
    %c0_i32 = arith.constant 0 : i32
    %c0_i32_0 = arith.constant 0 : i32
    %c0_i32_1 = arith.constant 0 : i32
    %c0_i32_2 = arith.constant 0 : i32
    return %arg0, %c0_i32, %c0_i32_0, %c0_i32_1 : i32, i32, i32, i32
  }
  func.func @transform_1(%arg0: i32) -> (i32, i32) {
    %c0_i32 = arith.constant 0 : i32
    %c0_i32_0 = arith.constant 0 : i32
    %c0_i32_1 = arith.constant 0 : i32
    return %c0_i32, %c0_i32_0 : i32, i32
  }
  func.func @transform_2(%arg0: i32) -> (i32, i32) {
    %c0_i32 = arith.constant 0 : i32
    %c0_i32_0 = arith.constant 0 : i32
    %c0_i32_1 = arith.constant 0 : i32
    return %c0_i32, %c0_i32_0 : i32, i32
  }
  func.func @transform_3(%arg0: i32) -> (i32, i32, i32) {
    %c0_i32 = arith.constant 0 : i32
    %c0_i32_0 = arith.constant 0 : i32
    %c0_i32_1 = arith.constant 0 : i32
    return %arg0, %c0_i32, %c0_i32_0 : i32, i32, i32
  }
}

module attributes {stable_mosaic.version = 11 : i64} {
  func.func @_conv3x3_bn_add_relu_kernel(%arg0: i32, %arg1: memref<1x18x18x128xbf16, #tpu.memory_space<vmem>>, %arg2: memref<1152x128xbf16, #tpu.memory_space<vmem>>, %arg3: memref<1x128xf32, #tpu.memory_space<vmem>>, %arg4: memref<1x256x128xbf16, #tpu.memory_space<vmem>>, %arg5: memref<1x256x128xf32, #tpu.memory_space<vmem>>) attributes {dimension_semantics = [#tpu.dimension_semantics<parallel>], iteration_bounds = array<i64: 2>, scalar_prefetch = 0 : i64, scratch_operands = 0 : i64, tpu.core_type = #tpu.core_type<tc>, window_params = [{transform_indices = @transform_0, window_bounds = array<i64: 1, 18, 18, 128>}, {pipeline_mode = #tpu.pipeline_mode<synchronous>, transform_indices = @transform_1, window_bounds = array<i64: 1152, 128>}, {pipeline_mode = #tpu.pipeline_mode<synchronous>, transform_indices = @transform_2, window_bounds = array<i64: 1, 128>}, {transform_indices = @transform_3, window_bounds = array<i64: 1, 256, 128>}, {transform_indices = @transform_4, window_bounds = array<i64: 1, 256, 128>}]} {
    %c0 = arith.constant 0 : index
    %c0_0 = arith.constant 0 : index
    %c0_1 = arith.constant 0 : index
    %c0_2 = arith.constant 0 : index
    %0 = vector.load %arg1[%c0, %c0_0, %c0_1, %c0_2] : memref<1x18x18x128xbf16, #tpu.memory_space<vmem>>, vector<1x18x18x128xbf16>
    %1 = vector.shape_cast %0 : vector<1x18x18x128xbf16> to vector<18x18x128xbf16>
    %2 = vector.extract_strided_slice %1 {offsets = [0, 0, 0], sizes = [16, 16, 128], strides = [1, 1, 1]} : vector<18x18x128xbf16> to vector<16x16x128xbf16>
    %3 = vector.shape_cast %2 : vector<16x16x128xbf16> to vector<256x128xbf16>
    %4 = vector.extract_strided_slice %1 {offsets = [0, 1, 0], sizes = [16, 16, 128], strides = [1, 1, 1]} : vector<18x18x128xbf16> to vector<16x16x128xbf16>
    %5 = vector.shape_cast %4 : vector<16x16x128xbf16> to vector<256x128xbf16>
    %6 = vector.extract_strided_slice %1 {offsets = [0, 2, 0], sizes = [16, 16, 128], strides = [1, 1, 1]} : vector<18x18x128xbf16> to vector<16x16x128xbf16>
    %7 = vector.shape_cast %6 : vector<16x16x128xbf16> to vector<256x128xbf16>
    %8 = vector.extract_strided_slice %1 {offsets = [1, 0, 0], sizes = [16, 16, 128], strides = [1, 1, 1]} : vector<18x18x128xbf16> to vector<16x16x128xbf16>
    %9 = vector.shape_cast %8 : vector<16x16x128xbf16> to vector<256x128xbf16>
    %10 = vector.extract_strided_slice %1 {offsets = [1, 1, 0], sizes = [16, 16, 128], strides = [1, 1, 1]} : vector<18x18x128xbf16> to vector<16x16x128xbf16>
    %11 = vector.shape_cast %10 : vector<16x16x128xbf16> to vector<256x128xbf16>
    %12 = vector.extract_strided_slice %1 {offsets = [1, 2, 0], sizes = [16, 16, 128], strides = [1, 1, 1]} : vector<18x18x128xbf16> to vector<16x16x128xbf16>
    %13 = vector.shape_cast %12 : vector<16x16x128xbf16> to vector<256x128xbf16>
    %14 = vector.extract_strided_slice %1 {offsets = [2, 0, 0], sizes = [16, 16, 128], strides = [1, 1, 1]} : vector<18x18x128xbf16> to vector<16x16x128xbf16>
    %15 = vector.shape_cast %14 : vector<16x16x128xbf16> to vector<256x128xbf16>
    %16 = vector.extract_strided_slice %1 {offsets = [2, 1, 0], sizes = [16, 16, 128], strides = [1, 1, 1]} : vector<18x18x128xbf16> to vector<16x16x128xbf16>
    %17 = vector.shape_cast %16 : vector<16x16x128xbf16> to vector<256x128xbf16>
    %18 = vector.extract_strided_slice %1 {offsets = [2, 2, 0], sizes = [16, 16, 128], strides = [1, 1, 1]} : vector<18x18x128xbf16> to vector<16x16x128xbf16>
    %19 = vector.shape_cast %18 : vector<16x16x128xbf16> to vector<256x128xbf16>
    %20 = tpu.concatenate %3, %5, %7, %9, %11, %13, %15, %17, %19 in 1 : vector<256x128xbf16>, vector<256x128xbf16>, vector<256x128xbf16>, vector<256x128xbf16>, vector<256x128xbf16>, vector<256x128xbf16>, vector<256x128xbf16>, vector<256x128xbf16>, vector<256x128xbf16> -> vector<256x1152xbf16>
    %c0_3 = arith.constant 0 : index
    %c0_4 = arith.constant 0 : index
    %21 = vector.load %arg2[%c0_3, %c0_4] : memref<1152x128xbf16, #tpu.memory_space<vmem>>, vector<1152x128xbf16>
    %cst = arith.constant dense<0.000000e+00> : vector<256x128xf32>
    %22 = tpu.matmul %20, %21, %cst {dimension_numbers = #tpu.dot_dimension_numbers<[1], [0], [0], [1], [0, 0, 1, 1], [], []>} : vector<256x1152xbf16>, vector<1152x128xbf16>, vector<256x128xf32> -> vector<256x128xf32>
    %c0_5 = arith.constant 0 : index
    %c0_6 = arith.constant 0 : index
    %23 = vector.load %arg3[%c0_5, %c0_6] : memref<1x128xf32, #tpu.memory_space<vmem>>, vector<1x128xf32>
    %24 = vector.broadcast %23 : vector<1x128xf32> to vector<256x128xf32>
    %25 = arith.addf %22, %24 : vector<256x128xf32>
    %c0_7 = arith.constant 0 : index
    %c0_8 = arith.constant 0 : index
    %c0_9 = arith.constant 0 : index
    %26 = vector.load %arg4[%c0_7, %c0_8, %c0_9] : memref<1x256x128xbf16, #tpu.memory_space<vmem>>, vector<1x256x128xbf16>
    %27 = vector.shape_cast %26 : vector<1x256x128xbf16> to vector<256x128xbf16>
    %28 = arith.extf %27 : vector<256x128xbf16> to vector<256x128xf32>
    %29 = arith.addf %25, %28 : vector<256x128xf32>
    %cst_10 = arith.constant 0.000000e+00 : f32
    %30 = vector.broadcast %cst_10 : f32 to vector<256x128xf32>
    %31 = arith.maximumf %29, %30 : vector<256x128xf32>
    %c0_11 = arith.constant 0 : index
    %c0_12 = arith.constant 0 : index
    %c0_13 = arith.constant 0 : index
    %32 = vector.load %arg5[%c0_11, %c0_12, %c0_13] : memref<1x256x128xf32, #tpu.memory_space<vmem>>, vector<1x256x128xf32>
    %33 = vector.shape_cast %32 : vector<1x256x128xf32> to vector<256x128xf32>
    %34 = vector.shape_cast %31 : vector<256x128xf32> to vector<1x256x128xf32>
    tpu.vector_store %arg5[%c0_11, %c0_12, %c0_13], %34 {strides = array<i32>} : memref<1x256x128xf32, #tpu.memory_space<vmem>>, vector<1x256x128xf32>,
    return
  }
  func.func @transform_0(%arg0: i32) -> (i32, i32, i32, i32) {
    %c0_i32 = arith.constant 0 : i32
    %c0_i32_0 = arith.constant 0 : i32
    %c0_i32_1 = arith.constant 0 : i32
    %c0_i32_2 = arith.constant 0 : i32
    return %arg0, %c0_i32, %c0_i32_0, %c0_i32_1 : i32, i32, i32, i32
  }
  func.func @transform_1(%arg0: i32) -> (i32, i32) {
    %c0_i32 = arith.constant 0 : i32
    %c0_i32_0 = arith.constant 0 : i32
    %c0_i32_1 = arith.constant 0 : i32
    return %c0_i32, %c0_i32_0 : i32, i32
  }
  func.func @transform_2(%arg0: i32) -> (i32, i32) {
    %c0_i32 = arith.constant 0 : i32
    %c0_i32_0 = arith.constant 0 : i32
    %c0_i32_1 = arith.constant 0 : i32
    return %c0_i32, %c0_i32_0 : i32, i32
  }
  func.func @transform_3(%arg0: i32) -> (i32, i32, i32) {
    %c0_i32 = arith.constant 0 : i32
    %c0_i32_0 = arith.constant 0 : i32
    %c0_i32_1 = arith.constant 0 : i32
    return %arg0, %c0_i32, %c0_i32_0 : i32, i32, i32
  }
  func.func @transform_4(%arg0: i32) -> (i32, i32, i32) {
    %c0_i32 = arith.constant 0 : i32
    %c0_i32_0 = arith.constant 0 : i32
    %c0_i32_1 = arith.constant 0 : i32
    return %arg0, %c0_i32, %c0_i32_0 : i32, i32, i32
  }
}

</mosaic_0001>

<llo_original>
// kernel: basic_block_forward.2
$region0: #{basic_block_forward.2}
  #allocation0 [shape = 'u32[]', space=smem, size = 0x4, offset = 0x4, fixed_abs, tag = 'smem constant byte address 0x4 - core index']
  #allocation1 [shape = 'u32[72,128]{1,0:T(1,128)}', space=vmem, size = 0x9000, scoped, tag = 'internal scratch']
  %s0 = inlined_call_operand.vmem [shape: bf16[2,18,18,128], index: 0, kind: input, shape index: {}]
  %s1 = inlined_call_operand.vmem [shape: bf16[1152,128], index: 1, kind: input, shape index: {}]
  %s2 = inlined_call_operand.vmem [shape: f32[1,128], index: 2, kind: input, shape index: {}]
  %s3 = inlined_call_operand.vmem [shape: bf16[2,256,128], index: 3, kind: output, shape index: {}]
  %s4 = sld [smem:[#allocation0]]
  $region45: #{basic_block_forward.2} parent=0
    _
  %s6 = ssub.s32 1, %s4
  %s7 = scalar_select 0, %s6, %s4
  loop: start=0, step=1, limit=4
  $region2: #{basic_block_forward.2} parent=0 // loop_pre_header
    _
  $region3: #{basic_block_forward.2} parent=0 // loop_header
    %s9 = sphi 0, %s13
    %p10 = scmp.ge.s32.totalorder %s9, 4
    %s19 = sphi 0, %s21
    %s22 = sphi 0, %s19
    %s23 = sphi 0, %s22
    %s39 = sphi 0, %s23
    %s43 = sphi 0, %s43
    %s45 = sphi 0, %s43
    %s46 = sphi 0, %s45
    %s60 = sphi 0, %s46
    %s64 = sphi 0, %s64
    %s66 = sphi 0, %s64
    %s67 = sphi 0, %s66
    %s81 = sphi 0, %s67
    %s87 = sphi 0, %s89
    %s90 = sphi 0, %s87
    %s91 = sphi 0, %s90
    %s107 = sphi 0, %s91
  $region4: #{basic_block_forward.2} parent=0 // loop_header_branch
    %12 = sbr.rel (%p10) target = $region8
  $region5: #{basic_block_forward.2} parent=0 // loop_body
    %s14 = ssub.s32 %s9, 1
    %s15 = ssub.s32 %s9, 2
    %s16 = sadd.s32 %s9, 1
    %s17 = ssub.s32 %s9, %s16
    %p18 = scmp.eq.s32.totalorder %s17, 0
    %s20 = sadd.s32 %s19, 1
    %s21 = scalar_select %p18, %s19, %s20
    %p24 = pneg %p18
    %p25 = scmp.eq.s32.totalorder %s9, 1
    %p26 = por %p24, %p25
    %p27 = scmp.ne.s32.totalorder %s19, %s22
    %p28 = scmp.eq.s32.totalorder %s9, 0
    %p29 = por %p27, %p28
    %p30 = scmp.ne.s32.totalorder %s19, %s22
    %p31 = scmp.eq.s32.totalorder %s14, 1
    %p32 = por %p30, %p31
    %p33 = scmp.ne.s32.totalorder %s22, %s23
    %p34 = scmp.eq.s32.totalorder %s14, 0
    %p35 = por %p33, %p34
    %p36 = scmp.ne.s32.totalorder %s22, %s23
    %p37 = scmp.eq.s32.totalorder %s15, 1
    %p38 = por %p36, %p37
    %p40 = scmp.ne.s32.totalorder %s23, %s39
    %p41 = scmp.eq.s32.totalorder %s15, 0
    %p42 = por %p40, %p41
    %s44 = sadd.s32 %s43, 1
    %p47 = scmp.eq.s32.totalorder %s9, 1
    %p48 = scmp.ne.s32.totalorder %s43, %s45
    %p49 = scmp.eq.s32.totalorder %s9, 0
    %p50 = por %p48, %p49
    %p51 = scmp.ne.s32.totalorder %s43, %s45
    %p52 = scmp.eq.s32.totalorder %s14, 1
    %p53 = por %p51, %p52
    %p54 = scmp.ne.s32.totalorder %s45, %s46
    %p55 = scmp.eq.s32.totalorder %s14, 0
    %p56 = por %p54, %p55
    %p57 = scmp.ne.s32.totalorder %s45, %s46
    %p58 = scmp.eq.s32.totalorder %s15, 1
    %p59 = por %p57, %p58
    %p61 = scmp.ne.s32.totalorder %s46, %s60
    %p62 = scmp.eq.s32.totalorder %s15, 0
    %p63 = por %p61, %p62
    %s65 = sadd.s32 %s64, 1
    %p68 = scmp.eq.s32.totalorder %s9, 1
    %p69 = scmp.ne.s32.totalorder %s64, %s66
    %p70 = scmp.eq.s32.totalorder %s9, 0
    %p71 = por %p69, %p70
    %p72 = scmp.ne.s32.totalorder %s64, %s66
    %p73 = scmp.eq.s32.totalorder %s14, 1
    %p74 = por %p72, %p73
    %p75 = scmp.ne.s32.totalorder %s66, %s67
    %p76 = scmp.eq.s32.totalorder %s14, 0
    %p77 = por %p75, %p76
    %p78 = scmp.ne.s32.totalorder %s66, %s67
    %p79 = scmp.eq.s32.totalorder %s15, 1
    %p80 = por %p78, %p79
    %p82 = scmp.ne.s32.totalorder %s67, %s81
    %p83 = scmp.eq.s32.totalorder %s15, 0
    %p84 = por %p82, %p83
    %s85 = ssub.s32 %s9, %s16
    %p86 = scmp.eq.s32.totalorder %s85, 0
    %s88 = sadd.s32 %s87, 1
    %s89 = scalar_select %p86, %s87, %s88
    %p92 = pneg %p86
    %p93 = scmp.eq.s32.totalorder %s9, 1
    %p94 = por %p92, %p93
    %p95 = scmp.ne.s32.totalorder %s87, %s90
    %p96 = scmp.eq.s32.totalorder %s9, 0
    %p97 = por %p95, %p96
    %p98 = scmp.ne.s32.totalorder %s87, %s90
    %p99 = scmp.eq.s32.totalorder %s14, 1
    %p100 = por %p98, %p99
    %p101 = scmp.ne.s32.totalorder %s90, %s91
    %p102 = scmp.eq.s32.totalorder %s14, 0
    %p103 = por %p101, %p102
    %p104 = scmp.ne.s32.totalorder %s90, %s91
    %p105 = scmp.eq.s32.totalorder %s15, 1
    %p106 = por %p104, %p105
    %p108 = scmp.ne.s32.totalorder %s91, %s107
    %p109 = scmp.eq.s32.totalorder %s15, 0
    %p110 = por %p108, %p109
    %p111 = scmp.le.s32.totalorder 1, %s9
    %p112 = scmp.lt.s32.totalorder %s9, 3
    %p113 = pnand %p111, %p112
    %p114 = pneg %p113
    // Predicated region
    $region9: #{basic_block_forward.2} parent=5 // pred_check
      _
    $region10: #{basic_block_forward.2} parent=5 // pred_check_branch
      %116 = sbr.rel (%p113) target = $region12
    $region11: #{basic_block_forward.2} parent=5 // pred_region
      %s117 = ssub.s32 %s9, 1
      // Predicated region
      $region13: #{basic_block_forward.2} parent=11 // pred_check
        %p118 = pneg %p56
      $region14: #{basic_block_forward.2} parent=11 // pred_check_branch
        %120 = sbr.rel (%p118) target = $region16
      $region15: #{basic_block_forward.2} parent=11 // pred_region
        _
      $region16: #{basic_block_forward.2} parent=11 // pred_fallthru
        _
      // Predicated region
      $region17: #{basic_block_forward.2} parent=11 // pred_check
        %p121 = pneg %p77
      $region18: #{basic_block_forward.2} parent=11 // pred_check_branch
        %123 = sbr.rel (%p121) target = $region20
      $region19: #{basic_block_forward.2} parent=11 // pred_region
        _
      $region20: #{basic_block_forward.2} parent=11 // pred_fallthru
        _
    $region12: #{basic_block_forward.2} parent=5 // pred_fallthru
      _
    %p124 = scmp.lt.s32.totalorder %s9, 2
    // Predicated region
    $region21: #{basic_block_forward.2} parent=5 // pred_check
      %p125 = pneg %p124
    $region22: #{basic_block_forward.2} parent=5 // pred_check_branch
      %127 = sbr.rel (%p125) target = $region24
    $region23: #{basic_block_forward.2} parent=5 // pred_region
      // Predicated region
      $region25: #{basic_block_forward.2} parent=23 // pred_check
        %p128 = pneg %p29
      $region26: #{basic_block_forward.2} parent=23 // pred_check_branch
        %130 = sbr.rel (%p128) target = $region28
      $region27: #{basic_block_forward.2} parent=23 // pred_region
        %p131 = scmp.lt.s32.totalorder %s9, 1
        %s132 = scalar_select %p131, %s9, 1
        %s133 = smul.addr %s132, 54
        %s134 = smul.addr %s133, 4
        %s135 = scalar_lea.vmem %s0, %s134
      $region28: #{basic_block_forward.2} parent=23 // pred_fallthru
        _
    $region24: #{basic_block_forward.2} parent=5 // pred_fallthru
      _
    %p136 = scmp.le.s32.totalorder 1, %s9
    %p137 = scmp.lt.s32.totalorder %s9, 3
    %p138 = pnand %p136, %p137
    %p139 = pneg %p138
    // Predicated region
    $region29: #{basic_block_forward.2} parent=5 // pred_check
      _
    $region30: #{basic_block_forward.2} parent=5 // pred_check_branch
      %141 = sbr.rel (%p138) target = $region32
    $region31: #{basic_block_forward.2} parent=5 // pred_region
      %s142 = ssub.s32 %s9, 1
      %p143 = scmp.lt.s32.totalorder %s14, 1
      %s144 = scalar_select %p143, %s14, 1
      %s145 = smul.addr %s144, 54
      %s146 = smul.addr %s145, 4
      %s147 = scalar_lea.vmem %s0, %s146
      %p148 = pneg %p35
      %p149 = pneg %p32
      %p150 = pneg %p56
      %p151 = pneg %p53
      %p152 = pneg %p77
      %p153 = pneg %p74
      %p154 = pneg %p103
      %p155 = pneg %p100
      %p156 = scmp.lt.s32.totalorder %s14, 1
      %s157 = scalar_select %p156, %s14, 1
      %s158 = smul.addr %s157, 32
      %s159 = smul.addr %s158, 4
      %s160 = scalar_lea.vmem %s3, %s159
      %p161 = scmp.lt.s32.totalorder %s14, 1
      %s162 = scalar_select %p161, %s14, 1
      %s163 = smul.addr %s162, 54
      %s164 = smul.addr %s163, 4
      %s165 = scalar_lea.vmem %s0, %s164
      %p166 = scmp.lt.s32.totalorder %s14, 1
      %s167 = scalar_select %p166, %s14, 1
      %s168 = smul.addr %s167, 32
      %s169 = smul.addr %s168, 4
      %s170 = scalar_lea.vmem %s3, %s169
      %v171 = vld [vmem:[%s165] sm:$0xf]
      %v172 = vld [vmem:[%s165 + $0x4] sm:$0xf]
      %v173 = vld [vmem:[%s165 + $0x8] sm:$0x1]
      %v174 = vld [vmem:[%s165 + $0xc] sm:$0xf]
      %v175 = vld [vmem:[%s165 + $0x10] sm:$0xf]
      %v176 = vld [vmem:[%s165 + $0x14] sm:$0x1]
      %v177 = vld [vmem:[%s165 + $0x18] sm:$0xf]
      %v178 = vld [vmem:[%s165 + $0x1c] sm:$0xf]
      %v179 = vld [vmem:[%s165 + $0x20] sm:$0x1]
      %v180 = vld [vmem:[%s165 + $0x24] sm:$0xf]
      %v181 = vld [vmem:[%s165 + $0x28] sm:$0xf]
      %v182 = vld [vmem:[%s165 + $0x2c] sm:$0x1]
      %v183 = vld [vmem:[%s165 + $0x30] sm:$0xf]
      %v184 = vld [vmem:[%s165 + $0x34] sm:$0xf]
      %v185 = vld [vmem:[%s165 + $0x38] sm:$0x1]
      %v186 = vld [vmem:[%s165 + $0x3c] sm:$0xf]
      %v187 = vld [vmem:[%s165 + $0x40] sm:$0xf]
      %v188 = vld [vmem:[%s165 + $0x44] sm:$0x1]
      %v189 = vld [vmem:[%s165 + $0x48] sm:$0xf]
      %v190 = vld [vmem:[%s165 + $0x4c] sm:$0xf]
      %v191 = vld [vmem:[%s165 + $0x50] sm:$0x1]
      %v192 = vld [vmem:[%s165 + $0x54] sm:$0xf]
      %v193 = vld [vmem:[%s165 + $0x58] sm:$0xf]
      %v194 = vld [vmem:[%s165 + $0x5c] sm:$0x1]
      %v195 = vld [vmem:[%s165 + $0x60] sm:$0xf]
      %v196 = vld [vmem:[%s165 + $0x64] sm:$0xf]
      %v197 = vld [vmem:[%s165 + $0x68] sm:$0x1]
      %v198 = vld [vmem:[%s165 + $0x6c] sm:$0xf]
      %v199 = vld [vmem:[%s165 + $0x70] sm:$0xf]
      %v200 = vld [vmem:[%s165 + $0x74] sm:$0x1]
      %v201 = vld [vmem:[%s165 + $0x78] sm:$0xf]
      %v202 = vld [vmem:[%s165 + $0x7c] sm:$0xf]
      %v203 = vld [vmem:[%s165 + $0x80] sm:$0x1]
      %v204 = vld [vmem:[%s165 + $0x84] sm:$0xf]
      %v205 = vld [vmem:[%s165 + $0x88] sm:$0xf]
      %v206 = vld [vmem:[%s165 + $0x8c] sm:$0x1]
      %v207 = vld [vmem:[%s165 + $0x90] sm:$0xf]
      %v208 = vld [vmem:[%s165 + $0x94] sm:$0xf]
      %v209 = vld [vmem:[%s165 + $0x98] sm:$0x1]
      %v210 = vld [vmem:[%s165 + $0x9c] sm:$0xf]
      %v211 = vld [vmem:[%s165 + $0xa0] sm:$0xf]
      %v212 = vld [vmem:[%s165 + $0xa4] sm:$0x1]
      %v213 = vld [vmem:[%s165 + $0xa8] sm:$0xf]
      %v214 = vld [vmem:[%s165 + $0xac] sm:$0xf]
      %v215 = vld [vmem:[%s165 + $0xb0] sm:$0x1]
      %v216 = vld [vmem:[%s165 + $0xb4] sm:$0xf]
      %v217 = vld [vmem:[%s165 + $0xb8] sm:$0xf]
      %v218 = vld [vmem:[%s165 + $0xbc] sm:$0x1]
      %v219 = vld [vmem:[%s165 + $0xc0] sm:$0xf]
      %v220 = vld [vmem:[%s165 + $0xc4] sm:$0xf]
      %v221 = vld [vmem:[%s165 + $0xc8] sm:$0x1]
      %v222 = vld [vmem:[%s165 + $0xcc] sm:$0xf]
      %v223 = vld [vmem:[%s165 + $0xd0] sm:$0xf]
      %v224 = vld [vmem:[%s165 + $0xd4] sm:$0x1]
      %vm225 = vsmask.f32 3328
      %vm226 = vsmask.f32 7440
      %vm227 = vmor %vm225, %vm226
      %v229 = vshrl.u32 %v171, 16
      %v231 = vrot.slane %v229, 4
      %v232 = vshll.u32 %v171, 16
      %v234 = vrot.slane %v232, 5
      %v235 = vor.u32 %v231, %v234
      %v236 = vrot.slane %v235, 4
      %v238 = vshll.u32 %v172, 16
      %v240 = vrot.slane %v238, 5
      %v241 = vsel %vm227, %v236, %v240
      %v242 = vshrl.u32 %v172, 16
      %v244 = vrot.slane %v242, 4
      %v245 = vor.u32 %v244, %v240
      %v246 = vrot.slane %v245, 4
      %v248 = vshll.u32 %v173, 16
      %v250 = vrot.slane %v248, 5
      %v251 = vsel %vm227, %v246, %v250
      %v253 = vshrl.u32 %v174, 16
      %v255 = vrot.slane %v253, 4
      %v256 = vshll.u32 %v174, 16
      %v258 = vrot.slane %v256, 5
      %v259 = vor.u32 %v255, %v258
      %v260 = vrot.slane %v259, 4
      %v262 = vshll.u32 %v175, 16
      %v264 = vrot.slane %v262, 5
      %v265 = vsel %vm227, %v260, %v264
      %v266 = vshrl.u32 %v175, 16
      %v268 = vrot.slane %v266, 4
      %v269 = vor.u32 %v268, %v264
      %v270 = vrot.slane %v269, 4
      %v272 = vshll.u32 %v176, 16
      %v274 = vrot.slane %v272, 5
      %v275 = vsel %vm227, %v270, %v274
      %v277 = vshrl.u32 %v177, 16
      %v279 = vrot.slane %v277, 4
      %v280 = vshll.u32 %v177, 16
      %v282 = vrot.slane %v280, 5
      %v283 = vor.u32 %v279, %v282
      %v284 = vrot.slane %v283, 4
      %v286 = vshll.u32 %v178, 16
      %v288 = vrot.slane %v286, 5
      %v289 = vsel %vm227, %v284, %v288
      %v290 = vshrl.u32 %v178, 16
      %v292 = vrot.slane %v290, 4
      %v293 = vor.u32 %v292, %v288
      %v294 = vrot.slane %v293, 4
      %v296 = vshll.u32 %v179, 16
      %v298 = vrot.slane %v296, 5
      %v299 = vsel %vm227, %v294, %v298
      %v301 = vshrl.u32 %v180, 16
      %v303 = vrot.slane %v301, 4
      %v304 = vshll.u32 %v180, 16
      %v306 = vrot.slane %v304, 5
      %v307 = vor.u32 %v303, %v306
      %v308 = vrot.slane %v307, 4
      %v310 = vshll.u32 %v181, 16
      %v312 = vrot.slane %v310, 5
      %v313 = vsel %vm227, %v308, %v312
      %v314 = vshrl.u32 %v181, 16
      %v316 = vrot.slane %v314, 4
      %v317 = vor.u32 %v316, %v312
      %v318 = vrot.slane %v317, 4
      %v320 = vshll.u32 %v182, 16
      %v322 = vrot.slane %v320, 5
      %v323 = vsel %vm227, %v318, %v322
      %v325 = vshrl.u32 %v183, 16
      %v327 = vrot.slane %v325, 4
      %v328 = vshll.u32 %v183, 16
      %v330 = vrot.slane %v328, 5
      %v331 = vor.u32 %v327, %v330
      %v332 = vrot.slane %v331, 4
      %v334 = vshll.u32 %v184, 16
      %v336 = vrot.slane %v334, 5
      %v337 = vsel %vm227, %v332, %v336
      %v338 = vshrl.u32 %v184, 16
      %v340 = vrot.slane %v338, 4
      %v341 = vor.u32 %v340, %v336
      %v342 = vrot.slane %v341, 4
      %v344 = vshll.u32 %v185, 16
      %v346 = vrot.slane %v344, 5
      %v347 = vsel %vm227, %v342, %v346
      %v349 = vshrl.u32 %v186, 16
      %v351 = vrot.slane %v349, 4
      %v352 = vshll.u32 %v186, 16
      %v354 = vrot.slane %v352, 5
      %v355 = vor.u32 %v351, %v354
      %v356 = vrot.slane %v355, 4
      %v358 = vshll.u32 %v187, 16
      %v360 = vrot.slane %v358, 5
      %v361 = vsel %vm227, %v356, %v360
      %v362 = vshrl.u32 %v187, 16
      %v364 = vrot.slane %v362, 4
      %v365 = vor.u32 %v364, %v360
      %v366 = vrot.slane %v365, 4
      %v368 = vshll.u32 %v188, 16
      %v370 = vrot.slane %v368, 5
      %v371 = vsel %vm227, %v366, %v370
      %v373 = vshrl.u32 %v189, 16
      %v375 = vrot.slane %v373, 4
      %v376 = vshll.u32 %v189, 16
      %v378 = vrot.slane %v376, 5
      %v379 = vor.u32 %v375, %v378
      %v380 = vrot.slane %v379, 4
      %v382 = vshll.u32 %v190, 16
      %v384 = vrot.slane %v382, 5
      %v385 = vsel %vm227, %v380, %v384
      %v386 = vshrl.u32 %v190, 16
      %v388 = vrot.slane %v386, 4
      %v389 = vor.u32 %v388, %v384
      %v390 = vrot.slane %v389, 4
      %v392 = vshll.u32 %v191, 16
      %v394 = vrot.slane %v392, 5
      %v395 = vsel %vm227, %v390, %v394
      %v397 = vshrl.u32 %v192, 16
      %v399 = vrot.slane %v397, 4
      %v400 = vshll.u32 %v192, 16
      %v402 = vrot.slane %v400, 5
      %v403 = vor.u32 %v399, %v402
      %v404 = vrot.slane %v403, 4
      %v406 = vshll.u32 %v193, 16
      %v408 = vrot.slane %v406, 5
      %v409 = vsel %vm227, %v404, %v408
      %v410 = vshrl.u32 %v193, 16
      %v412 = vrot.slane %v410, 4
      %v413 = vor.u32 %v412, %v408
      %v414 = vrot.slane %v413, 4
      %v416 = vshll.u32 %v194, 16
      %v418 = vrot.slane %v416, 5
      %v419 = vsel %vm227, %v414, %v418
      %v421 = vshrl.u32 %v195, 16
      %v423 = vrot.slane %v421, 4
      %v424 = vshll.u32 %v195, 16
      %v426 = vrot.slane %v424, 5
      %v427 = vor.u32 %v423, %v426
      %v428 = vrot.slane %v427, 4
      %v430 = vshll.u32 %v196, 16
      %v432 = vrot.slane %v430, 5
      %v433 = vsel %vm227, %v428, %v432
      %v434 = vshrl.u32 %v196, 16
      %v436 = vrot.slane %v434, 4
      %v437 = vor.u32 %v436, %v432
      %v438 = vrot.slane %v437, 4
      %v440 = vshll.u32 %v197, 16
      %v442 = vrot.slane %v440, 5
      %v443 = vsel %vm227, %v438, %v442
      %v445 = vshrl.u32 %v198, 16
      %v447 = vrot.slane %v445, 4
      %v448 = vshll.u32 %v198, 16
      %v450 = vrot.slane %v448, 5
      %v451 = vor.u32 %v447, %v450
      %v452 = vrot.slane %v451, 4
      %v454 = vshll.u32 %v199, 16
      %v456 = vrot.slane %v454, 5
      %v457 = vsel %vm227, %v452, %v456
      %v458 = vshrl.u32 %v199, 16
      %v460 = vrot.slane %v458, 4
      %v461 = vor.u32 %v460, %v456
      %v462 = vrot.slane %v461, 4
      %v464 = vshll.u32 %v200, 16
      %v466 = vrot.slane %v464, 5
      %v467 = vsel %vm227, %v462, %v466
      %v469 = vshrl.u32 %v201, 16
      %v471 = vrot.slane %v469, 4
      %v472 = vshll.u32 %v201, 16
      %v474 = vrot.slane %v472, 5
      %v475 = vor.u32 %v471, %v474
      %v476 = vrot.slane %v475, 4
      %v478 = vshll.u32 %v202, 16
      %v480 = vrot.slane %v478, 5
      %v481 = vsel %vm227, %v476, %v480
      %v482 = vshrl.u32 %v202, 16
      %v484 = vrot.slane %v482, 4
      %v485 = vor.u32 %v484, %v480
      %v486 = vrot.slane %v485, 4
      %v488 = vshll.u32 %v203, 16
      %v490 = vrot.slane %v488, 5
      %v491 = vsel %vm227, %v486, %v490
      %v493 = vshrl.u32 %v204, 16
      %v495 = vrot.slane %v493, 4
      %v496 = vshll.u32 %v204, 16
      %v498 = vrot.slane %v496, 5
      %v499 = vor.u32 %v495, %v498
      %v500 = vrot.slane %v499, 4
      %v502 = vshll.u32 %v205, 16
      %v504 = vrot.slane %v502, 5
      %v505 = vsel %vm227, %v500, %v504
      %v506 = vshrl.u32 %v205, 16
      %v508 = vrot.slane %v506, 4
      %v509 = vor.u32 %v508, %v504
      %v510 = vrot.slane %v509, 4
      %v512 = vshll.u32 %v206, 16
      %v514 = vrot.slane %v512, 5
      %v515 = vsel %vm227, %v510, %v514
      %v517 = vshrl.u32 %v207, 16
      %v519 = vrot.slane %v517, 4
      %v520 = vshll.u32 %v207, 16
      %v522 = vrot.slane %v520, 5
      %v523 = vor.u32 %v519, %v522
      %v524 = vrot.slane %v523, 4
      %v526 = vshll.u32 %v208, 16
      %v528 = vrot.slane %v526, 5
      %v529 = vsel %vm227, %v524, %v528
      %v530 = vshrl.u32 %v208, 16
      %v532 = vrot.slane %v530, 4
      %v533 = vor.u32 %v532, %v528
      %v534 = vrot.slane %v533, 4
      %v536 = vshll.u32 %v209, 16
      %v538 = vrot.slane %v536, 5
      %v539 = vsel %vm227, %v534, %v538
      %v541 = vshrl.u32 %v210, 16
      %v543 = vrot.slane %v541, 4
      %v544 = vshll.u32 %v210, 16
      %v546 = vrot.slane %v544, 5
      %v547 = vor.u32 %v543, %v546
      %v548 = vrot.slane %v547, 4
      %v550 = vshll.u32 %v211, 16
      %v552 = vrot.slane %v550, 5
      %v553 = vsel %vm227, %v548, %v552
      %v554 = vshrl.u32 %v211, 16
      %v556 = vrot.slane %v554, 4
      %v557 = vor.u32 %v556, %v552
      %v558 = vrot.slane %v557, 4
      %v560 = vshll.u32 %v212, 16
      %v562 = vrot.slane %v560, 5
      %v563 = vsel %vm227, %v558, %v562
      %v565 = vshrl.u32 %v213, 16
      %v567 = vrot.slane %v565, 4
      %v568 = vshll.u32 %v213, 16
      %v570 = vrot.slane %v568, 5
      %v571 = vor.u32 %v567, %v570
      %v572 = vrot.slane %v571, 4
      %v574 = vshll.u32 %v214, 16
      %v576 = vrot.slane %v574, 5
      %v577 = vsel %vm227, %v572, %v576
      %v578 = vshrl.u32 %v214, 16
      %v580 = vrot.slane %v578, 4
      %v581 = vor.u32 %v580, %v576
      %v582 = vrot.slane %v581, 4
      %v584 = vshll.u32 %v215, 16
      %v586 = vrot.slane %v584, 5
      %v587 = vsel %vm227, %v582, %v586
      %v589 = vshrl.u32 %v216, 16
      %v591 = vrot.slane %v589, 4
      %v592 = vshll.u32 %v216, 16
      %v594 = vrot.slane %v592, 5
      %v595 = vor.u32 %v591, %v594
      %v596 = vrot.slane %v595, 4
      %v598 = vshll.u32 %v217, 16
      %v600 = vrot.slane %v598, 5
      %v601 = vsel %vm227, %v596, %v600
      %v602 = vshrl.u32 %v217, 16
      %v604 = vrot.slane %v602, 4
      %v605 = vor.u32 %v604, %v600
      %v606 = vrot.slane %v605, 4
      %v608 = vshll.u32 %v218, 16
      %v610 = vrot.slane %v608, 5
      %v611 = vsel %vm227, %v606, %v610
      %vm660 = vcmask 1042432
      %vm661 = vcmask 1046532
      %vm662 = vmor %vm660, %vm661
      %v663 = vrot.slane %v171, 5
      %v664 = vrot.slane %v663, 4
      %v665 = vrot.slane %v172, 5
      %v666 = vsel %vm662, %v664, %v665
      %v667 = vrot.slane %v665, 4
      %v668 = vrot.slane %v173, 5
      %v669 = vsel %vm662, %v667, %v668
      %v670 = vrot.slane %v174, 5
      %v671 = vrot.slane %v670, 4
      %v672 = vrot.slane %v175, 5
      %v673 = vsel %vm662, %v671, %v672
      %v674 = vrot.slane %v672, 4
      %v675 = vrot.slane %v176, 5
      %v676 = vsel %vm662, %v674, %v675
      %v677 = vrot.slane %v177, 5
      %v678 = vrot.slane %v677, 4
      %v679 = vrot.slane %v178, 5
      %v680 = vsel %vm662, %v678, %v679
      %v681 = vrot.slane %v679, 4
      %v682 = vrot.slane %v179, 5
      %v683 = vsel %vm662, %v681, %v682
      %v684 = vrot.slane %v180, 5
      %v685 = vrot.slane %v684, 4
      %v686 = vrot.slane %v181, 5
      %v687 = vsel %vm662, %v685, %v686
      %v688 = vrot.slane %v686, 4
      %v689 = vrot.slane %v182, 5
      %v690 = vsel %vm662, %v688, %v689
      %v691 = vrot.slane %v183, 5
      %v692 = vrot.slane %v691, 4
      %v693 = vrot.slane %v184, 5
      %v694 = vsel %vm662, %v692, %v693
      %v695 = vrot.slane %v693, 4
      %v696 = vrot.slane %v185, 5
      %v697 = vsel %vm662, %v695, %v696
      %v698 = vrot.slane %v186, 5
      %v699 = vrot.slane %v698, 4
      %v700 = vrot.slane %v187, 5
      %v701 = vsel %vm662, %v699, %v700
      %v702 = vrot.slane %v700, 4
      %v703 = vrot.slane %v188, 5
      %v704 = vsel %vm662, %v702, %v703
      %v705 = vrot.slane %v189, 5
      %v706 = vrot.slane %v705, 4
      %v707 = vrot.slane %v190, 5
      %v708 = vsel %vm662, %v706, %v707
      %v709 = vrot.slane %v707, 4
      %v710 = vrot.slane %v191, 5
      %v711 = vsel %vm662, %v709, %v710
      %v712 = vrot.slane %v192, 5
      %v713 = vrot.slane %v712, 4
      %v714 = vrot.slane %v193, 5
      %v715 = vsel %vm662, %v713, %v714
      %v716 = vrot.slane %v714, 4
      %v717 = vrot.slane %v194, 5
      %v718 = vsel %vm662, %v716, %v717
      %v719 = vrot.slane %v195, 5
      %v720 = vrot.slane %v719, 4
      %v721 = vrot.slane %v196, 5
      %v722 = vsel %vm662, %v720, %v721
      %v723 = vrot.slane %v721, 4
      %v724 = vrot.slane %v197, 5
      %v725 = vsel %vm662, %v723, %v724
      %v726 = vrot.slane %v198, 5
      %v727 = vrot.slane %v726, 4
      %v728 = vrot.slane %v199, 5
      %v729 = vsel %vm662, %v727, %v728
      %v730 = vrot.slane %v728, 4
      %v731 = vrot.slane %v200, 5
      %v732 = vsel %vm662, %v730, %v731
      %v733 = vrot.slane %v201, 5
      %v734 = vrot.slane %v733, 4
      %v735 = vrot.slane %v202, 5
      %v736 = vsel %vm662, %v734, %v735
      %v737 = vrot.slane %v735, 4
      %v738 = vrot.slane %v203, 5
      %v739 = vsel %vm662, %v737, %v738
      %v740 = vrot.slane %v204, 5
      %v741 = vrot.slane %v740, 4
      %v742 = vrot.slane %v205, 5
      %v743 = vsel %vm662, %v741, %v742
      %v744 = vrot.slane %v742, 4
      %v745 = vrot.slane %v206, 5
      %v746 = vsel %vm662, %v744, %v745
      %v747 = vrot.slane %v207, 5
      %v748 = vrot.slane %v747, 4
      %v749 = vrot.slane %v208, 5
      %v750 = vsel %vm662, %v748, %v749
      %v751 = vrot.slane %v749, 4
      %v752 = vrot.slane %v209, 5
      %v753 = vsel %vm662, %v751, %v752
      %v754 = vrot.slane %v210, 5
      %v755 = vrot.slane %v754, 4
      %v756 = vrot.slane %v211, 5
      %v757 = vsel %vm662, %v755, %v756
      %v758 = vrot.slane %v756, 4
      %v759 = vrot.slane %v212, 5
      %v760 = vsel %vm662, %v758, %v759
      %v761 = vrot.slane %v213, 5
      %v762 = vrot.slane %v761, 4
      %v763 = vrot.slane %v214, 5
      %v764 = vsel %vm662, %v762, %v763
      %v765 = vrot.slane %v763, 4
      %v766 = vrot.slane %v215, 5
      %v767 = vsel %vm662, %v765, %v766
      %v768 = vrot.slane %v216, 5
      %v769 = vrot.slane %v768, 4
      %v770 = vrot.slane %v217, 5
      %v771 = vsel %vm662, %v769, %v770
      %v772 = vrot.slane %v770, 4
      %v773 = vrot.slane %v218, 5
      %v774 = vsel %vm662, %v772, %v773
      %v776 = vshrl.u32 %v219, 16
      %v778 = vrot.slane %v776, 4
      %v779 = vshll.u32 %v219, 16
      %v781 = vrot.slane %v779, 5
      %v782 = vor.u32 %v778, %v781
      %v783 = vrot.slane %v782, 4
      %v785 = vshll.u32 %v220, 16
      %v787 = vrot.slane %v785, 5
      %v788 = vsel %vm227, %v783, %v787
      %v789 = vshrl.u32 %v220, 16
      %v791 = vrot.slane %v789, 4
      %v792 = vor.u32 %v791, %v787
      %v793 = vrot.slane %v792, 4
      %v795 = vshll.u32 %v221, 16
      %v797 = vrot.slane %v795, 5
      %v798 = vsel %vm227, %v793, %v797
      %v802 = vrot.slane %v219, 5
      %v803 = vrot.slane %v802, 4
      %v804 = vrot.slane %v220, 5
      %v805 = vsel %vm662, %v803, %v804
      %v806 = vrot.slane %v804, 4
      %v807 = vrot.slane %v221, 5
      %v808 = vsel %vm662, %v806, %v807
      %v810 = vshrl.u32 %v222, 16
      %v812 = vrot.slane %v810, 4
      %v813 = vshll.u32 %v222, 16
      %v815 = vrot.slane %v813, 5
      %v816 = vor.u32 %v812, %v815
      %v817 = vrot.slane %v816, 4
      %v819 = vshll.u32 %v223, 16
      %v821 = vrot.slane %v819, 5
      %v822 = vsel %vm227, %v817, %v821
      %v823 = vshrl.u32 %v223, 16
      %v825 = vrot.slane %v823, 4
      %v826 = vor.u32 %v825, %v821
      %v827 = vrot.slane %v826, 4
      %v829 = vshll.u32 %v224, 16
      %v831 = vrot.slane %v829, 5
      %v832 = vsel %vm227, %v827, %v831
      %v836 = vrot.slane %v222, 5
      %v837 = vrot.slane %v836, 4
      %v838 = vrot.slane %v223, 5
      %v839 = vsel %vm662, %v837, %v838
      %v840 = vrot.slane %v838, 4
      %v841 = vrot.slane %v224, 5
      %v842 = vsel %vm662, %v840, %v841
      %v843 = vunpack.c.l.b16 %v171
      %v844 = vunpack.c.l.b16 %v172
      %v845 = vunpack.c.l.b16 %v174
      %v846 = vunpack.c.l.b16 %v175
      %v847 = vunpack.c.l.b16 %v177
      %v848 = vunpack.c.l.b16 %v178
      %v849 = vunpack.c.l.b16 %v180
      %v850 = vunpack.c.l.b16 %v181
      %v851 = vunpack.c.l.b16 %v183
      %v852 = vunpack.c.l.b16 %v184
      %v853 = vunpack.c.l.b16 %v186
      %v854 = vunpack.c.l.b16 %v187
      %v855 = vunpack.c.l.b16 %v189
      %v856 = vunpack.c.l.b16 %v190
      %v857 = vunpack.c.l.b16 %v192
      %v858 = vunpack.c.l.b16 %v193
      %v859 = vunpack.c.l.b16 %v195
      %v860 = vunpack.c.l.b16 %v196
      %v861 = vunpack.c.l.b16 %v198
      %v862 = vunpack.c.l.b16 %v199
      %v863 = vunpack.c.l.b16 %v201
      %v864 = vunpack.c.l.b16 %v202
      %v865 = vunpack.c.l.b16 %v204
      %v866 = vunpack.c.l.b16 %v205
      %v867 = vunpack.c.l.b16 %v207
      %v868 = vunpack.c.l.b16 %v208
      %v869 = vunpack.c.l.b16 %v210
      %v870 = vunpack.c.l.b16 %v211
      %v871 = vunpack.c.l.b16 %v213
      %v872 = vunpack.c.l.b16 %v214
      %v873 = vunpack.c.l.b16 %v216
      %v874 = vunpack.c.l.b16 %v217
      %v875 = vpack.c.b16 %v844, %v843
      %v876 = vpack.c.b16 %v846, %v845
      %v877 = vpack.c.b16 %v848, %v847
      %v878 = vpack.c.b16 %v850, %v849
      %v879 = vpack.c.b16 %v852, %v851
      %v880 = vpack.c.b16 %v854, %v853
      %v881 = vpack.c.b16 %v856, %v855
      %v882 = vpack.c.b16 %v858, %v857
      %v883 = vpack.c.b16 %v860, %v859
      %v884 = vpack.c.b16 %v862, %v861
      %v885 = vpack.c.b16 %v864, %v863
      %v886 = vpack.c.b16 %v866, %v865
      %v887 = vpack.c.b16 %v868, %v867
      %v888 = vpack.c.b16 %v870, %v869
      %v889 = vpack.c.b16 %v872, %v871
      %v890 = vpack.c.b16 %v874, %v873
      %v907 = vunpack.c.l.b16 %v241
      %v908 = vunpack.c.l.b16 %v251
      %v909 = vunpack.c.l.b16 %v265
      %v910 = vunpack.c.l.b16 %v275
      %v911 = vunpack.c.l.b16 %v289
      %v912 = vunpack.c.l.b16 %v299
      %v913 = vunpack.c.l.b16 %v313
      %v914 = vunpack.c.l.b16 %v323
      %v915 = vunpack.c.l.b16 %v337
      %v916 = vunpack.c.l.b16 %v347
      %v917 = vunpack.c.l.b16 %v361
      %v918 = vunpack.c.l.b16 %v371
      %v919 = vunpack.c.l.b16 %v385
      %v920 = vunpack.c.l.b16 %v395
      %v921 = vunpack.c.l.b16 %v409
      %v922 = vunpack.c.l.b16 %v419
      %v923 = vunpack.c.l.b16 %v433
      %v924 = vunpack.c.l.b16 %v443
      %v925 = vunpack.c.l.b16 %v457
      %v926 = vunpack.c.l.b16 %v467
      %v927 = vunpack.c.l.b16 %v481
      %v928 = vunpack.c.l.b16 %v491
      %v929 = vunpack.c.l.b16 %v505
      %v930 = vunpack.c.l.b16 %v515
      %v931 = vunpack.c.l.b16 %v529
      %v932 = vunpack.c.l.b16 %v539
      %v933 = vunpack.c.l.b16 %v553
      %v934 = vunpack.c.l.b16 %v563
      %v935 = vunpack.c.l.b16 %v577
      %v936 = vunpack.c.l.b16 %v587
      %v937 = vunpack.c.l.b16 %v601
      %v938 = vunpack.c.l.b16 %v611
      %v939 = vpack.c.b16 %v908, %v907
      %v940 = vpack.c.b16 %v910, %v909
      %v941 = vpack.c.b16 %v912, %v911
      %v942 = vpack.c.b16 %v914, %v913
      %v943 = vpack.c.b16 %v916, %v915
      %v944 = vpack.c.b16 %v918, %v917
      %v945 = vpack.c.b16 %v920, %v919
      %v946 = vpack.c.b16 %v922, %v921
      %v947 = vpack.c.b16 %v924, %v923
      %v948 = vpack.c.b16 %v926, %v925
      %v949 = vpack.c.b16 %v928, %v927
      %v950 = vpack.c.b16 %v930, %v929
      %v951 = vpack.c.b16 %v932, %v931
      %v952 = vpack.c.b16 %v934, %v933
      %v953 = vpack.c.b16 %v936, %v935
      %v954 = vpack.c.b16 %v938, %v937
      %v971 = vunpack.c.l.b16 %v666
      %v972 = vunpack.c.l.b16 %v669
      %v973 = vunpack.c.l.b16 %v673
      %v974 = vunpack.c.l.b16 %v676
      %v975 = vunpack.c.l.b16 %v680
      %v976 = vunpack.c.l.b16 %v683
      %v977 = vunpack.c.l.b16 %v687
      %v978 = vunpack.c.l.b16 %v690
      %v979 = vunpack.c.l.b16 %v694
      %v980 = vunpack.c.l.b16 %v697
      %v981 = vunpack.c.l.b16 %v701
      %v982 = vunpack.c.l.b16 %v704
      %v983 = vunpack.c.l.b16 %v708
      %v984 = vunpack.c.l.b16 %v711
      %v985 = vunpack.c.l.b16 %v715
      %v986 = vunpack.c.l.b16 %v718
      %v987 = vunpack.c.l.b16 %v722
      %v988 = vunpack.c.l.b16 %v725
      %v989 = vunpack.c.l.b16 %v729
      %v990 = vunpack.c.l.b16 %v732
      %v991 = vunpack.c.l.b16 %v736
      %v992 = vunpack.c.l.b16 %v739
      %v993 = vunpack.c.l.b16 %v743
      %v994 = vunpack.c.l.b16 %v746
      %v995 = vunpack.c.l.b16 %v750
      %v996 = vunpack.c.l.b16 %v753
      %v997 = vunpack.c.l.b16 %v757
      %v998 = vunpack.c.l.b16 %v760
      %v999 = vunpack.c.l.b16 %v764
      %v1000 = vunpack.c.l.b16 %v767
      %v1001 = vunpack.c.l.b16 %v771
      %v1002 = vunpack.c.l.b16 %v774
      %v1003 = vpack.c.b16 %v972, %v971
      %v1004 = vpack.c.b16 %v974, %v973
      %v1005 = vpack.c.b16 %v976, %v975
      %v1006 = vpack.c.b16 %v978, %v977
      %v1007 = vpack.c.b16 %v980, %v979
      %v1008 = vpack.c.b16 %v982, %v981
      %v1009 = vpack.c.b16 %v984, %v983
      %v1010 = vpack.c.b16 %v986, %v985
      %v1011 = vpack.c.b16 %v988, %v987
      %v1012 = vpack.c.b16 %v990, %v989
      %v1013 = vpack.c.b16 %v992, %v991
      %v1014 = vpack.c.b16 %v994, %v993
      %v1015 = vpack.c.b16 %v996, %v995
      %v1016 = vpack.c.b16 %v998, %v997
      %v1017 = vpack.c.b16 %v1000, %v999
      %v1018 = vpack.c.b16 %v1002, %v1001
      %v1035 = vunpack.c.l.b16 %v219
      %v1036 = vunpack.c.l.b16 %v220
      %v1037 = vpack.c.b16 %v1036, %v1035
      %v1039 = vunpack.c.l.b16 %v788
      %v1040 = vunpack.c.l.b16 %v798
      %v1041 = vpack.c.b16 %v1040, %v1039
      %v1043 = vunpack.c.l.b16 %v805
      %v1044 = vunpack.c.l.b16 %v808
      %v1045 = vpack.c.b16 %v1044, %v1043
      %v1047 = vunpack.c.l.b16 %v222
      %v1048 = vunpack.c.l.b16 %v223
      %v1049 = vpack.c.b16 %v1048, %v1047
      %v1051 = vunpack.c.l.b16 %v822
      %v1052 = vunpack.c.l.b16 %v832
      %v1053 = vpack.c.b16 %v1052, %v1051
      %v1055 = vunpack.c.l.b16 %v839
      %v1056 = vunpack.c.l.b16 %v842
      %v1057 = vpack.c.b16 %v1056, %v1055
      %v1059 = vld [vmem:[%s1] sm:$0xf]
      %v1060 = vld [vmem:[%s1 + $0x4] sm:$0xf]
      %v1061 = vld [vmem:[%s1 + $0x8] sm:$0xf]
      %v1062 = vld [vmem:[%s1 + $0xc] sm:$0xf]
      %v1063 = vld [vmem:[%s1 + $0x10] sm:$0xf]
      %v1064 = vld [vmem:[%s1 + $0x14] sm:$0xf]
      %v1065 = vld [vmem:[%s1 + $0x18] sm:$0xf]
      %v1066 = vld [vmem:[%s1 + $0x1c] sm:$0xf]
      %v1067 = vld [vmem:[%s1 + $0x20] sm:$0xf]
      %v1068 = vld [vmem:[%s1 + $0x24] sm:$0xf]
      %v1069 = vld [vmem:[%s1 + $0x28] sm:$0xf]
      %v1070 = vld [vmem:[%s1 + $0x2c] sm:$0xf]
      %v1071 = vld [vmem:[%s1 + $0x30] sm:$0xf]
      %v1072 = vld [vmem:[%s1 + $0x34] sm:$0xf]
      %v1073 = vld [vmem:[%s1 + $0x38] sm:$0xf]
      %v1074 = vld [vmem:[%s1 + $0x3c] sm:$0xf]
      %v1075 = vld [vmem:[%s1 + $0x40] sm:$0xf]
      %v1076 = vld [vmem:[%s1 + $0x44] sm:$0xf]
      %v1077 = vld [vmem:[%s1 + $0x48] sm:$0xf]
      %v1078 = vld [vmem:[%s1 + $0x4c] sm:$0xf]
      %v1079 = vld [vmem:[%s1 + $0x50] sm:$0xf]
      %v1080 = vld [vmem:[%s1 + $0x54] sm:$0xf]
      %v1081 = vld [vmem:[%s1 + $0x58] sm:$0xf]
      %v1082 = vld [vmem:[%s1 + $0x5c] sm:$0xf]
      %v1083 = vld [vmem:[%s1 + $0x60] sm:$0xf]
      %v1084 = vld [vmem:[%s1 + $0x64] sm:$0xf]
      %v1085 = vld [vmem:[%s1 + $0x68] sm:$0xf]
      %v1086 = vld [vmem:[%s1 + $0x6c] sm:$0xf]
      %v1087 = vld [vmem:[%s1 + $0x70] sm:$0xf]
      %v1088 = vld [vmem:[%s1 + $0x74] sm:$0xf]
      %v1089 = vld [vmem:[%s1 + $0x78] sm:$0xf]
      %v1090 = vld [vmem:[%s1 + $0x7c] sm:$0xf]
      %v1091 = vld [vmem:[%s1 + $0x80] sm:$0xf]
      %v1092 = vld [vmem:[%s1 + $0x84] sm:$0xf]
      %v1093 = vld [vmem:[%s1 + $0x88] sm:$0xf]
      %v1094 = vld [vmem:[%s1 + $0x8c] sm:$0xf]
      %v1095 = vld [vmem:[%s1 + $0x90] sm:$0xf]
      %v1096 = vld [vmem:[%s1 + $0x94] sm:$0xf]
      %v1097 = vld [vmem:[%s1 + $0x98] sm:$0xf]
      %v1098 = vld [vmem:[%s1 + $0x9c] sm:$0xf]
      %v1099 = vld [vmem:[%s1 + $0xa0] sm:$0xf]
      %v1100 = vld [vmem:[%s1 + $0xa4] sm:$0xf]
      %v1101 = vld [vmem:[%s1 + $0xa8] sm:$0xf]
      %v1102 = vld [vmem:[%s1 + $0xac] sm:$0xf]
      %v1103 = vld [vmem:[%s1 + $0xb0] sm:$0xf]
      %v1104 = vld [vmem:[%s1 + $0xb4] sm:$0xf]
      %v1105 = vld [vmem:[%s1 + $0xb8] sm:$0xf]
      %v1106 = vld [vmem:[%s1 + $0xbc] sm:$0xf]
      %v1107 = vld [vmem:[%s1 + $0xc0] sm:$0xf]
      %v1108 = vld [vmem:[%s1 + $0xc4] sm:$0xf]
      %v1109 = vld [vmem:[%s1 + $0xc8] sm:$0xf]
      %v1110 = vld [vmem:[%s1 + $0xcc] sm:$0xf]
      %v1111 = vld [vmem:[%s1 + $0xd0] sm:$0xf]
      %v1112 = vld [vmem:[%s1 + $0xd4] sm:$0xf]
      %v1113 = vld [vmem:[%s1 + $0xd8] sm:$0xf]
      %v1114 = vld [vmem:[%s1 + $0xdc] sm:$0xf]
      %v1115 = vld [vmem:[%s1 + $0xe0] sm:$0xf]
      %v1116 = vld [vmem:[%s1 + $0xe4] sm:$0xf]
      %v1117 = vld [vmem:[%s1 + $0xe8] sm:$0xf]
      %v1118 = vld [vmem:[%s1 + $0xec] sm:$0xf]
      %v1119 = vld [vmem:[%s1 + $0xf0] sm:$0xf]
      %v1120 = vld [vmem:[%s1 + $0xf4] sm:$0xf]
      %v1121 = vld [vmem:[%s1 + $0xf8] sm:$0xf]
      %v1122 = vld [vmem:[%s1 + $0xfc] sm:$0xf]
      %v1123 = vld [vmem:[%s1 + $0x100] sm:$0xf]
      %v1124 = vld [vmem:[%s1 + $0x104] sm:$0xf]
      %v1125 = vld [vmem:[%s1 + $0x108] sm:$0xf]
      %v1126 = vld [vmem:[%s1 + $0x10c] sm:$0xf]
      %v1127 = vld [vmem:[%s1 + $0x110] sm:$0xf]
      %v1128 = vld [vmem:[%s1 + $0x114] sm:$0xf]
      %v1129 = vld [vmem:[%s1 + $0x118] sm:$0xf]
      %v1130 = vld [vmem:[%s1 + $0x11c] sm:$0xf]
      %v1131 = vld [vmem:[%s1 + $0x120] sm:$0xf]
      %v1132 = vld [vmem:[%s1 + $0x124] sm:$0xf]
      %v1133 = vld [vmem:[%s1 + $0x128] sm:$0xf]
      %v1134 = vld [vmem:[%s1 + $0x12c] sm:$0xf]
      %v1135 = vld [vmem:[%s1 + $0x130] sm:$0xf]
      %v1136 = vld [vmem:[%s1 + $0x134] sm:$0xf]
      %v1137 = vld [vmem:[%s1 + $0x138] sm:$0xf]
      %v1138 = vld [vmem:[%s1 + $0x13c] sm:$0xf]
      %v1139 = vld [vmem:[%s1 + $0x140] sm:$0xf]
      %v1140 = vld [vmem:[%s1 + $0x144] sm:$0xf]
      %v1141 = vld [vmem:[%s1 + $0x148] sm:$0xf]
      %v1142 = vld [vmem:[%s1 + $0x14c] sm:$0xf]
      %v1143 = vld [vmem:[%s1 + $0x150] sm:$0xf]
      %v1144 = vld [vmem:[%s1 + $0x154] sm:$0xf]
      %v1145 = vld [vmem:[%s1 + $0x158] sm:$0xf]
      %v1146 = vld [vmem:[%s1 + $0x15c] sm:$0xf]
      %v1147 = vld [vmem:[%s1 + $0x160] sm:$0xf]
      %v1148 = vld [vmem:[%s1 + $0x164] sm:$0xf]
      %v1149 = vld [vmem:[%s1 + $0x168] sm:$0xf]
      %v1150 = vld [vmem:[%s1 + $0x16c] sm:$0xf]
      %v1151 = vld [vmem:[%s1 + $0x170] sm:$0xf]
      %v1152 = vld [vmem:[%s1 + $0x174] sm:$0xf]
      %v1153 = vld [vmem:[%s1 + $0x178] sm:$0xf]
      %v1154 = vld [vmem:[%s1 + $0x17c] sm:$0xf]
      %v1155 = vld [vmem:[%s1 + $0x180] sm:$0xf]
      %v1156 = vld [vmem:[%s1 + $0x184] sm:$0xf]
      %v1157 = vld [vmem:[%s1 + $0x188] sm:$0xf]
      %v1158 = vld [vmem:[%s1 + $0x18c] sm:$0xf]
      %v1159 = vld [vmem:[%s1 + $0x190] sm:$0xf]
      %v1160 = vld [vmem:[%s1 + $0x194] sm:$0xf]
      %v1161 = vld [vmem:[%s1 + $0x198] sm:$0xf]
      %v1162 = vld [vmem:[%s1 + $0x19c] sm:$0xf]
      %v1163 = vld [vmem:[%s1 + $0x1a0] sm:$0xf]
      %v1164 = vld [vmem:[%s1 + $0x1a4] sm:$0xf]
      %v1165 = vld [vmem:[%s1 + $0x1a8] sm:$0xf]
      %v1166 = vld [vmem:[%s1 + $0x1ac] sm:$0xf]
      %v1167 = vld [vmem:[%s1 + $0x1b0] sm:$0xf]
      %v1168 = vld [vmem:[%s1 + $0x1b4] sm:$0xf]
      %v1169 = vld [vmem:[%s1 + $0x1b8] sm:$0xf]
      %v1170 = vld [vmem:[%s1 + $0x1bc] sm:$0xf]
      %v1171 = vld [vmem:[%s1 + $0x1c0] sm:$0xf]
      %v1172 = vld [vmem:[%s1 + $0x1c4] sm:$0xf]
      %v1173 = vld [vmem:[%s1 + $0x1c8] sm:$0xf]
      %v1174 = vld [vmem:[%s1 + $0x1cc] sm:$0xf]
      %v1175 = vld [vmem:[%s1 + $0x1d0] sm:$0xf]
      %v1176 = vld [vmem:[%s1 + $0x1d4] sm:$0xf]
      %v1177 = vld [vmem:[%s1 + $0x1d8] sm:$0xf]
      %v1178 = vld [vmem:[%s1 + $0x1dc] sm:$0xf]
      %v1179 = vld [vmem:[%s1 + $0x1e0] sm:$0xf]
      %v1180 = vld [vmem:[%s1 + $0x1e4] sm:$0xf]
      %v1181 = vld [vmem:[%s1 + $0x1e8] sm:$0xf]
      %v1182 = vld [vmem:[%s1 + $0x1ec] sm:$0xf]
      %v1183 = vld [vmem:[%s1 + $0x1f0] sm:$0xf]
      %v1184 = vld [vmem:[%s1 + $0x1f4] sm:$0xf]
      %v1185 = vld [vmem:[%s1 + $0x1f8] sm:$0xf]
      %v1186 = vld [vmem:[%s1 + $0x1fc] sm:$0xf]
      %v1187 = vld [vmem:[%s1 + $0x200] sm:$0xf]
      %v1188 = vld [vmem:[%s1 + $0x204] sm:$0xf]
      %v1189 = vld [vmem:[%s1 + $0x208] sm:$0xf]
      %v1190 = vld [vmem:[%s1 + $0x20c] sm:$0xf]
      %v1191 = vld [vmem:[%s1 + $0x210] sm:$0xf]
      %v1192 = vld [vmem:[%s1 + $0x214] sm:$0xf]
      %v1193 = vld [vmem:[%s1 + $0x218] sm:$0xf]
      %v1194 = vld [vmem:[%s1 + $0x21c] sm:$0xf]
      %v1195 = vld [vmem:[%s1 + $0x220] sm:$0xf]
      %v1196 = vld [vmem:[%s1 + $0x224] sm:$0xf]
      %v1197 = vld [vmem:[%s1 + $0x228] sm:$0xf]
      %v1198 = vld [vmem:[%s1 + $0x22c] sm:$0xf]
      %v1199 = vld [vmem:[%s1 + $0x230] sm:$0xf]
      %v1200 = vld [vmem:[%s1 + $0x234] sm:$0xf]
      %v1201 = vld [vmem:[%s1 + $0x238] sm:$0xf]
      %v1202 = vld [vmem:[%s1 + $0x23c] sm:$0xf]
      %v1203 = vld [vmem:[%s2] sm:$0x1]
      %v1205 = vperm.slane %v1203, 0
      %v1351 = vunpack.c.l.b16 %v1059
      %v1352 = vunpack.c.l.b16 %v1060
      %v1353 = vunpack.c.l.b16 %v1061
      %v1354 = vunpack.c.l.b16 %v1062
      %v1355 = vunpack.c.l.b16 %v1063
      %v1356 = vunpack.c.l.b16 %v1064
      %v1357 = vunpack.c.l.b16 %v1065
      %v1358 = vunpack.c.l.b16 %v1066
      %v1359 = vunpack.c.l.b16 %v1067
      %v1360 = vunpack.c.l.b16 %v1068
      %v1361 = vunpack.c.l.b16 %v1069
      %v1362 = vunpack.c.l.b16 %v1070
      %v1363 = vunpack.c.l.b16 %v1071
      %v1364 = vunpack.c.l.b16 %v1072
      %v1365 = vunpack.c.l.b16 %v1073
      %v1366 = vunpack.c.l.b16 %v1074
      %v1367 = vunpack.c.l.b16 %v1075
      %v1368 = vunpack.c.l.b16 %v1076
      %v1369 = vunpack.c.l.b16 %v1077
      %v1370 = vunpack.c.l.b16 %v1078
      %v1371 = vunpack.c.l.b16 %v1079
      %v1372 = vunpack.c.l.b16 %v1080
      %v1373 = vunpack.c.l.b16 %v1081
      %v1374 = vunpack.c.l.b16 %v1082
      %v1375 = vunpack.c.l.b16 %v1083
      %v1376 = vunpack.c.l.b16 %v1084
      %v1377 = vunpack.c.l.b16 %v1085
      %v1378 = vunpack.c.l.b16 %v1086
      %v1379 = vunpack.c.l.b16 %v1087
      %v1380 = vunpack.c.l.b16 %v1088
      %v1381 = vunpack.c.l.b16 %v1089
      %v1382 = vunpack.c.l.b16 %v1090
      %v1383 = vunpack.c.l.b16 %v1091
      %v1384 = vunpack.c.l.b16 %v1092
      %v1385 = vunpack.c.l.b16 %v1093
      %v1386 = vunpack.c.l.b16 %v1094
      %v1387 = vunpack.c.l.b16 %v1095
      %v1388 = vunpack.c.l.b16 %v1096
      %v1389 = vunpack.c.l.b16 %v1097
      %v1390 = vunpack.c.l.b16 %v1098
      %v1391 = vunpack.c.l.b16 %v1099
      %v1392 = vunpack.c.l.b16 %v1100
      %v1393 = vunpack.c.l.b16 %v1101
      %v1394 = vunpack.c.l.b16 %v1102
      %v1395 = vunpack.c.l.b16 %v1103
      %v1396 = vunpack.c.l.b16 %v1104
      %v1397 = vunpack.c.l.b16 %v1105
      %v1398 = vunpack.c.l.b16 %v1106
      %v1399 = vunpack.c.l.b16 %v1107
      %v1400 = vunpack.c.l.b16 %v1108
      %v1401 = vunpack.c.l.b16 %v1109
      %v1402 = vunpack.c.l.b16 %v1110
      %v1403 = vunpack.c.l.b16 %v1111
      %v1404 = vunpack.c.l.b16 %v1112
      %v1405 = vunpack.c.l.b16 %v1113
      %v1406 = vunpack.c.l.b16 %v1114
      %v1407 = vunpack.c.l.b16 %v1115
      %v1408 = vunpack.c.l.b16 %v1116
      %v1409 = vunpack.c.l.b16 %v1117
      %v1410 = vunpack.c.l.b16 %v1118
      %v1411 = vunpack.c.l.b16 %v1119
      %v1412 = vunpack.c.l.b16 %v1120
      %v1413 = vunpack.c.l.b16 %v1121
      %v1414 = vunpack.c.l.b16 %v1122
      %v1415 = vunpack.c.l.b16 %v1123
      %v1416 = vunpack.c.l.b16 %v1124
      %v1417 = vunpack.c.l.b16 %v1125
      %v1418 = vunpack.c.l.b16 %v1126
      %v1419 = vunpack.c.l.b16 %v1127
      %v1420 = vunpack.c.l.b16 %v1128
      %v1421 = vunpack.c.l.b16 %v1129
      %v1422 = vunpack.c.l.b16 %v1130
      %v1423 = vunpack.c.l.b16 %v1131
      %v1424 = vunpack.c.l.b16 %v1132
      %v1425 = vunpack.c.l.b16 %v1133
      %v1426 = vunpack.c.l.b16 %v1134
      %v1427 = vunpack.c.l.b16 %v1135
      %v1428 = vunpack.c.l.b16 %v1136
      %v1429 = vunpack.c.l.b16 %v1137
      %v1430 = vunpack.c.l.b16 %v1138
      %v1431 = vunpack.c.l.b16 %v1139
      %v1432 = vunpack.c.l.b16 %v1140
      %v1433 = vunpack.c.l.b16 %v1141
      %v1434 = vunpack.c.l.b16 %v1142
      %v1435 = vunpack.c.l.b16 %v1143
      %v1436 = vunpack.c.l.b16 %v1144
      %v1437 = vunpack.c.l.b16 %v1145
      %v1438 = vunpack.c.l.b16 %v1146
      %v1439 = vunpack.c.l.b16 %v1147
      %v1440 = vunpack.c.l.b16 %v1148
      %v1441 = vunpack.c.l.b16 %v1149
      %v1442 = vunpack.c.l.b16 %v1150
      %v1443 = vunpack.c.l.b16 %v1151
      %v1444 = vunpack.c.l.b16 %v1152
      %v1445 = vunpack.c.l.b16 %v1153
      %v1446 = vunpack.c.l.b16 %v1154
      %v1447 = vunpack.c.l.b16 %v1155
      %v1448 = vunpack.c.l.b16 %v1156
      %v1449 = vunpack.c.l.b16 %v1157
      %v1450 = vunpack.c.l.b16 %v1158
      %v1451 = vunpack.c.l.b16 %v1159
      %v1452 = vunpack.c.l.b16 %v1160
      %v1453 = vunpack.c.l.b16 %v1161
      %v1454 = vunpack.c.l.b16 %v1162
      %v1455 = vunpack.c.l.b16 %v1163
      %v1456 = vunpack.c.l.b16 %v1164
      %v1457 = vunpack.c.l.b16 %v1165
      %v1458 = vunpack.c.l.b16 %v1166
      %v1459 = vunpack.c.l.b16 %v1167
      %v1460 = vunpack.c.l.b16 %v1168
      %v1461 = vunpack.c.l.b16 %v1169
      %v1462 = vunpack.c.l.b16 %v1170
      %v1463 = vunpack.c.l.b16 %v1171
      %v1464 = vunpack.c.l.b16 %v1172
      %v1465 = vunpack.c.l.b16 %v1173
      %v1466 = vunpack.c.l.b16 %v1174
      %v1467 = vunpack.c.l.b16 %v1175
      %v1468 = vunpack.c.l.b16 %v1176
      %v1469 = vunpack.c.l.b16 %v1177
      %v1470 = vunpack.c.l.b16 %v1178
      %v1471 = vunpack.c.l.b16 %v1179
      %v1472 = vunpack.c.l.b16 %v1180
      %v1473 = vunpack.c.l.b16 %v1181
      %v1474 = vunpack.c.l.b16 %v1182
      %v1475 = vunpack.c.l.b16 %v1183
      %v1476 = vunpack.c.l.b16 %v1184
      %v1477 = vunpack.c.l.b16 %v1185
      %v1478 = vunpack.c.l.b16 %v1186
      %v1479 = vunpack.c.l.b16 %v1187
      %v1480 = vunpack.c.l.b16 %v1188
      %v1481 = vunpack.c.l.b16 %v1189
      %v1482 = vunpack.c.l.b16 %v1190
      %v1483 = vunpack.c.l.b16 %v1191
      %v1484 = vunpack.c.l.b16 %v1192
      %v1485 = vunpack.c.l.b16 %v1193
      %v1486 = vunpack.c.l.b16 %v1194
      %v1487 = vunpack.c.l.b16 %v1195
      %v1488 = vunpack.c.l.b16 %v1196
      %v1489 = vunpack.c.l.b16 %v1197
      %v1490 = vunpack.c.l.b16 %v1198
      %v1491 = vunpack.c.l.b16 %v1199
      %v1492 = vunpack.c.l.b16 %v1200
      %v1493 = vunpack.c.l.b16 %v1201
      %v1494 = vunpack.c.l.b16 %v1202
      %v1495 = vpack.c.b16 %v1352, %v1351
      %v1496 = vpack.c.b16 %v1354, %v1353
      %v1497 = vpack.c.b16 %v1356, %v1355
      %v1498 = vpack.c.b16 %v1358, %v1357
      %v1499 = vpack.c.b16 %v1360, %v1359
      %v1500 = vpack.c.b16 %v1362, %v1361
      %v1501 = vpack.c.b16 %v1364, %v1363
      %v1502 = vpack.c.b16 %v1366, %v1365
      %v1503 = vpack.c.b16 %v1368, %v1367
      %v1504 = vpack.c.b16 %v1370, %v1369
      %v1505 = vpack.c.b16 %v1372, %v1371
      %v1506 = vpack.c.b16 %v1374, %v1373
      %v1507 = vpack.c.b16 %v1376, %v1375
      %v1508 = vpack.c.b16 %v1378, %v1377
      %v1509 = vpack.c.b16 %v1380, %v1379
      %v1510 = vpack.c.b16 %v1382, %v1381
      %v1511 = vpack.c.b16 %v1384, %v1383
      %v1512 = vpack.c.b16 %v1386, %v1385
      %v1513 = vpack.c.b16 %v1388, %v1387
      %v1514 = vpack.c.b16 %v1390, %v1389
      %v1515 = vpack.c.b16 %v1392, %v1391
      %v1516 = vpack.c.b16 %v1394, %v1393
      %v1517 = vpack.c.b16 %v1396, %v1395
      %v1518 = vpack.c.b16 %v1398, %v1397
      %v1519 = vpack.c.b16 %v1400, %v1399
      %v1520 = vpack.c.b16 %v1402, %v1401
      %v1521 = vpack.c.b16 %v1404, %v1403
      %v1522 = vpack.c.b16 %v1406, %v1405
      %v1523 = vpack.c.b16 %v1408, %v1407
      %v1524 = vpack.c.b16 %v1410, %v1409
      %v1525 = vpack.c.b16 %v1412, %v1411
      %v1526 = vpack.c.b16 %v1414, %v1413
      %v1527 = vpack.c.b16 %v1416, %v1415
      %v1528 = vpack.c.b16 %v1418, %v1417
      %v1529 = vpack.c.b16 %v1420, %v1419
      %v1530 = vpack.c.b16 %v1422, %v1421
      %v1531 = vpack.c.b16 %v1424, %v1423
      %v1532 = vpack.c.b16 %v1426, %v1425
      %v1533 = vpack.c.b16 %v1428, %v1427
      %v1534 = vpack.c.b16 %v1430, %v1429
      %v1535 = vpack.c.b16 %v1432, %v1431
      %v1536 = vpack.c.b16 %v1434, %v1433
      %v1537 = vpack.c.b16 %v1436, %v1435
      %v1538 = vpack.c.b16 %v1438, %v1437
      %v1539 = vpack.c.b16 %v1440, %v1439
      %v1540 = vpack.c.b16 %v1442, %v1441
      %v1541 = vpack.c.b16 %v1444, %v1443
      %v1542 = vpack.c.b16 %v1446, %v1445
      %v1543 = vpack.c.b16 %v1448, %v1447
      %v1544 = vpack.c.b16 %v1450, %v1449
      %v1545 = vpack.c.b16 %v1452, %v1451
      %v1546 = vpack.c.b16 %v1454, %v1453
      %v1547 = vpack.c.b16 %v1456, %v1455
      %v1548 = vpack.c.b16 %v1458, %v1457
      %v1549 = vpack.c.b16 %v1460, %v1459
      %v1550 = vpack.c.b16 %v1462, %v1461
      %v1551 = vpack.c.b16 %v1464, %v1463
      %v1552 = vpack.c.b16 %v1466, %v1465
      %v1553 = vpack.c.b16 %v1468, %v1467
      %v1554 = vpack.c.b16 %v1470, %v1469
      %v1555 = vpack.c.b16 %v1472, %v1471
      %v1556 = vpack.c.b16 %v1474, %v1473
      %v1557 = vpack.c.b16 %v1476, %v1475
      %v1558 = vpack.c.b16 %v1478, %v1477
      %v1559 = vpack.c.b16 %v1480, %v1479
      %v1560 = vpack.c.b16 %v1482, %v1481
      %v1561 = vpack.c.b16 %v1484, %v1483
      %v1562 = vpack.c.b16 %v1486, %v1485
      %v1563 = vpack.c.b16 %v1488, %v1487
      %v1564 = vpack.c.b16 %v1490, %v1489
      %v1565 = vpack.c.b16 %v1492, %v1491
      %v1566 = vpack.c.b16 %v1494, %v1493
      %1639 = vmatpush.bf16.msra.mxu0 %v1502
      %1640 = vmatpush.bf16.msra.mxu0 %v1501
      %1641 = vmatpush.bf16.msra.mxu0 %v1500
      %1642 = vmatpush.bf16.msra.mxu0 %v1499
      %1643 = vmatpush.bf16.msra.mxu0 %v1498
      %1644 = vmatpush.bf16.msra.mxu0 %v1497
      %1645 = vmatpush.bf16.msra.mxu0 %v1496
      %1646 = vmatpush.bf16.msra.mxu0 %v1495
      %1647 = vmatmul.bf16.gmra.mxu0 %v875
      %v1648 = vpop.f32.mrf.mxu0
      %v1649 = vadd.f32 %v1205, %v1648
      %v1650 = vpop.f32.mrf.mxu0
      %v1651 = vadd.f32 %v1205, %v1650
      %1652 = vmatmul.bf16.gmra.mxu0 %v876
      %v1653 = vpop.f32.mrf.mxu0
      %v1654 = vadd.f32 %v1205, %v1653
      %v1655 = vpop.f32.mrf.mxu0
      %v1656 = vadd.f32 %v1205, %v1655
      %1657 = vmatmul.bf16.gmra.mxu0 %v877
      %v1658 = vpop.f32.mrf.mxu0
      %v1659 = vadd.f32 %v1205, %v1658
      %v1660 = vpop.f32.mrf.mxu0
      %v1661 = vadd.f32 %v1205, %v1660
      %1662 = vmatmul.bf16.gmra.mxu0 %v878
      %v1663 = vpop.f32.mrf.mxu0
      %v1664 = vadd.f32 %v1205, %v1663
      %v1665 = vpop.f32.mrf.mxu0
      %v1666 = vadd.f32 %v1205, %v1665
      %1667 = vmatmul.bf16.gmra.mxu0 %v879
      %v1668 = vpop.f32.mrf.mxu0
      %v1669 = vadd.f32 %v1205, %v1668
      %v1670 = vpop.f32.mrf.mxu0
      %v1671 = vadd.f32 %v1205, %v1670
      %1672 = vmatmul.bf16.gmra.mxu0 %v880
      %v1673 = vpop.f32.mrf.mxu0
      %v1674 = vadd.f32 %v1205, %v1673
      %v1675 = vpop.f32.mrf.mxu0
      %v1676 = vadd.f32 %v1205, %v1675
      %1677 = vmatmul.bf16.gmra.mxu0 %v881
      %v1678 = vpop.f32.mrf.mxu0
      %v1679 = vadd.f32 %v1205, %v1678
      %v1680 = vpop.f32.mrf.mxu0
      %v1681 = vadd.f32 %v1205, %v1680
      %1682 = vmatmul.bf16.gmra.mxu0 %v882
      %v1683 = vpop.f32.mrf.mxu0
      %v1684 = vadd.f32 %v1205, %v1683
      %v1685 = vpop.f32.mrf.mxu0
      %v1686 = vadd.f32 %v1205, %v1685
      %1687 = vmatmul.bf16.gmra.mxu0 %v883
      %v1688 = vpop.f32.mrf.mxu0
      %v1689 = vadd.f32 %v1205, %v1688
      %v1690 = vpop.f32.mrf.mxu0
      %v1691 = vadd.f32 %v1205, %v1690
      %1692 = vmatmul.bf16.gmra.mxu0 %v884
      %v1693 = vpop.f32.mrf.mxu0
      %v1694 = vadd.f32 %v1205, %v1693
      %v1695 = vpop.f32.mrf.mxu0
      %v1696 = vadd.f32 %v1205, %v1695
      %1697 = vmatmul.bf16.gmra.mxu0 %v885
      %v1698 = vpop.f32.mrf.mxu0
      %v1699 = vadd.f32 %v1205, %v1698
      %v1700 = vpop.f32.mrf.mxu0
      %v1701 = vadd.f32 %v1205, %v1700
      %1702 = vmatmul.bf16.gmra.mxu0 %v886
      %v1703 = vpop.f32.mrf.mxu0
      %v1704 = vadd.f32 %v1205, %v1703
      %v1705 = vpop.f32.mrf.mxu0
      %v1706 = vadd.f32 %v1205, %v1705
      %1707 = vmatmul.bf16.gmra.mxu0 %v887
      %v1708 = vpop.f32.mrf.mxu0
      %v1709 = vadd.f32 %v1205, %v1708
      %v1710 = vpop.f32.mrf.mxu0
      %v1711 = vadd.f32 %v1205, %v1710
      %1712 = vmatmul.bf16.gmra.mxu0 %v888
      %v1713 = vpop.f32.mrf.mxu0
      %v1714 = vadd.f32 %v1205, %v1713
      %v1715 = vpop.f32.mrf.mxu0
      %v1716 = vadd.f32 %v1205, %v1715
      %1717 = vmatmul.bf16.gmra.mxu0 %v889
      %v1718 = vpop.f32.mrf.mxu0
      %v1719 = vadd.f32 %v1205, %v1718
      %v1720 = vpop.f32.mrf.mxu0
      %v1721 = vadd.f32 %v1205, %v1720
      %1722 = vmatmul.bf16.gmra.mxu0 %v890
      %v1723 = vpop.f32.mrf.mxu0
      %v1724 = vadd.f32 %v1205, %v1723
      %v1725 = vpop.f32.mrf.mxu0
      %v1726 = vadd.f32 %v1205, %v1725
      %1727 = vdwg.mxu0
      %1728 = vmatpush.bf16.msra.mxu0 %v1510
      %1729 = vmatpush.bf16.msra.mxu0 %v1509
      %1730 = vmatpush.bf16.msra.mxu0 %v1508
      %1731 = vmatpush.bf16.msra.mxu0 %v1507
      %1732 = vmatpush.bf16.msra.mxu0 %v1506
      %1733 = vmatpush.bf16.msra.mxu0 %v1505
      %1734 = vmatpush.bf16.msra.mxu0 %v1504
      %1735 = vmatpush.bf16.msra.mxu0 %v1503
      %1736 = vmatmul.bf16.gmra.mxu0 %v939
      %v1737 = vpop.f32.mrf.mxu0
      %v1738 = vadd.f32 %v1649, %v1737
      %v1739 = vpop.f32.mrf.mxu0
      %v1740 = vadd.f32 %v1651, %v1739
      %1741 = vmatmul.bf16.gmra.mxu0 %v940
      %v1742 = vpop.f32.mrf.mxu0
      %v1743 = vadd.f32 %v1654, %v1742
      %v1744 = vpop.f32.mrf.mxu0
      %v1745 = vadd.f32 %v1656, %v1744
      %1746 = vmatmul.bf16.gmra.mxu0 %v941
      %v1747 = vpop.f32.mrf.mxu0
      %v1748 = vadd.f32 %v1659, %v1747
      %v1749 = vpop.f32.mrf.mxu0
      %v1750 = vadd.f32 %v1661, %v1749
      %1751 = vmatmul.bf16.gmra.mxu0 %v942
      %v1752 = vpop.f32.mrf.mxu0
      %v1753 = vadd.f32 %v1664, %v1752
      %v1754 = vpop.f32.mrf.mxu0
      %v1755 = vadd.f32 %v1666, %v1754
      %1756 = vmatmul.bf16.gmra.mxu0 %v943
      %v1757 = vpop.f32.mrf.mxu0
      %v1758 = vadd.f32 %v1669, %v1757
      %v1759 = vpop.f32.mrf.mxu0
      %v1760 = vadd.f32 %v1671, %v1759
      %1761 = vmatmul.bf16.gmra.mxu0 %v944
      %v1762 = vpop.f32.mrf.mxu0
      %v1763 = vadd.f32 %v1674, %v1762
      %v1764 = vpop.f32.mrf.mxu0
      %v1765 = vadd.f32 %v1676, %v1764
      %1766 = vmatmul.bf16.gmra.mxu0 %v945
      %v1767 = vpop.f32.mrf.mxu0
      %v1768 = vadd.f32 %v1679, %v1767
      %v1769 = vpop.f32.mrf.mxu0
      %v1770 = vadd.f32 %v1681, %v1769
      %1771 = vmatmul.bf16.gmra.mxu0 %v946
      %v1772 = vpop.f32.mrf.mxu0
      %v1773 = vadd.f32 %v1684, %v1772
      %v1774 = vpop.f32.mrf.mxu0
      %v1775 = vadd.f32 %v1686, %v1774
      %1776 = vmatmul.bf16.gmra.mxu0 %v947
      %v1777 = vpop.f32.mrf.mxu0
      %v1778 = vadd.f32 %v1689, %v1777
      %v1779 = vpop.f32.mrf.mxu0
      %v1780 = vadd.f32 %v1691, %v1779
      %1781 = vmatmul.bf16.gmra.mxu0 %v948
      %v1782 = vpop.f32.mrf.mxu0
      %v1783 = vadd.f32 %v1694, %v1782
      %v1784 = vpop.f32.mrf.mxu0
      %v1785 = vadd.f32 %v1696, %v1784
      %1786 = vmatmul.bf16.gmra.mxu0 %v949
      %v1787 = vpop.f32.mrf.mxu0
      %v1788 = vadd.f32 %v1699, %v1787
      %v1789 = vpop.f32.mrf.mxu0
      %v1790 = vadd.f32 %v1701, %v1789
      %1791 = vmatmul.bf16.gmra.mxu0 %v950
      %v1792 = vpop.f32.mrf.mxu0
      %v1793 = vadd.f32 %v1704, %v1792
      %v1794 = vpop.f32.mrf.mxu0
      %v1795 = vadd.f32 %v1706, %v1794
      %1796 = vmatmul.bf16.gmra.mxu0 %v951
      %v1797 = vpop.f32.mrf.mxu0
      %v1798 = vadd.f32 %v1709, %v1797
      %v1799 = vpop.f32.mrf.mxu0
      %v1800 = vadd.f32 %v1711, %v1799
      %1801 = vmatmul.bf16.gmra.mxu0 %v952
      %v1802 = vpop.f32.mrf.mxu0
      %v1803 = vadd.f32 %v1714, %v1802
      %v1804 = vpop.f32.mrf.mxu0
      %v1805 = vadd.f32 %v1716, %v1804
      %1806 = vmatmul.bf16.gmra.mxu0 %v953
      %v1807 = vpop.f32.mrf.mxu0
      %v1808 = vadd.f32 %v1719, %v1807
      %v1809 = vpop.f32.mrf.mxu0
      %v1810 = vadd.f32 %v1721, %v1809
      %1811 = vmatmul.bf16.gmra.mxu0 %v954
      %v1812 = vpop.f32.mrf.mxu0
      %v1813 = vadd.f32 %v1724, %v1812
      %v1814 = vpop.f32.mrf.mxu0
      %v1815 = vadd.f32 %v1726, %v1814
      %1816 = vdwg.mxu0
      %1817 = vmatpush.bf16.msra.mxu0 %v1518
      %1818 = vmatpush.bf16.msra.mxu0 %v1517
      %1819 = vmatpush.bf16.msra.mxu0 %v1516
      %1820 = vmatpush.bf16.msra.mxu0 %v1515
      %1821 = vmatpush.bf16.msra.mxu0 %v1514
      %1822 = vmatpush.bf16.msra.mxu0 %v1513
      %1823 = vmatpush.bf16.msra.mxu0 %v1512
      %1824 = vmatpush.bf16.msra.mxu0 %v1511
      %1825 = vmatmul.bf16.gmra.mxu0 %v1003
      %v1826 = vpop.f32.mrf.mxu0
      %v1827 = vadd.f32 %v1738, %v1826
      %v1828 = vpop.f32.mrf.mxu0
      %v1829 = vadd.f32 %v1740, %v1828
      %1830 = vmatmul.bf16.gmra.mxu0 %v1004
      %v1831 = vpop.f32.mrf.mxu0
      %v1832 = vadd.f32 %v1743, %v1831
      %v1833 = vpop.f32.mrf.mxu0
      %v1834 = vadd.f32 %v1745, %v1833
      %1835 = vmatmul.bf16.gmra.mxu0 %v1005
      %v1836 = vpop.f32.mrf.mxu0
      %v1837 = vadd.f32 %v1748, %v1836
      %v1838 = vpop.f32.mrf.mxu0
      %v1839 = vadd.f32 %v1750, %v1838
      %1840 = vmatmul.bf16.gmra.mxu0 %v1006
      %v1841 = vpop.f32.mrf.mxu0
      %v1842 = vadd.f32 %v1753, %v1841
      %v1843 = vpop.f32.mrf.mxu0
      %v1844 = vadd.f32 %v1755, %v1843
      %1845 = vmatmul.bf16.gmra.mxu0 %v1007
      %v1846 = vpop.f32.mrf.mxu0
      %v1847 = vadd.f32 %v1758, %v1846
      %v1848 = vpop.f32.mrf.mxu0
      %v1849 = vadd.f32 %v1760, %v1848
      %1850 = vmatmul.bf16.gmra.mxu0 %v1008
      %v1851 = vpop.f32.mrf.mxu0
      %v1852 = vadd.f32 %v1763, %v1851
      %v1853 = vpop.f32.mrf.mxu0
      %v1854 = vadd.f32 %v1765, %v1853
      %1855 = vmatmul.bf16.gmra.mxu0 %v1009
      %v1856 = vpop.f32.mrf.mxu0
      %v1857 = vadd.f32 %v1768, %v1856
      %v1858 = vpop.f32.mrf.mxu0
      %v1859 = vadd.f32 %v1770, %v1858
      %1860 = vmatmul.bf16.gmra.mxu0 %v1010
      %v1861 = vpop.f32.mrf.mxu0
      %v1862 = vadd.f32 %v1773, %v1861
      %v1863 = vpop.f32.mrf.mxu0
      %v1864 = vadd.f32 %v1775, %v1863
      %1865 = vmatmul.bf16.gmra.mxu0 %v1011
      %v1866 = vpop.f32.mrf.mxu0
      %v1867 = vadd.f32 %v1778, %v1866
      %v1868 = vpop.f32.mrf.mxu0
      %v1869 = vadd.f32 %v1780, %v1868
      %1870 = vmatmul.bf16.gmra.mxu0 %v1012
      %v1871 = vpop.f32.mrf.mxu0
      %v1872 = vadd.f32 %v1783, %v1871
      %v1873 = vpop.f32.mrf.mxu0
      %v1874 = vadd.f32 %v1785, %v1873
      %1875 = vmatmul.bf16.gmra.mxu0 %v1013
      %v1876 = vpop.f32.mrf.mxu0
      %v1877 = vadd.f32 %v1788, %v1876
      %v1878 = vpop.f32.mrf.mxu0
      %v1879 = vadd.f32 %v1790, %v1878
      %1880 = vmatmul.bf16.gmra.mxu0 %v1014
      %v1881 = vpop.f32.mrf.mxu0
      %v1882 = vadd.f32 %v1793, %v1881
      %v1883 = vpop.f32.mrf.mxu0
      %v1884 = vadd.f32 %v1795, %v1883
      %1885 = vmatmul.bf16.gmra.mxu0 %v1015
      %v1886 = vpop.f32.mrf.mxu0
      %v1887 = vadd.f32 %v1798, %v1886
      %v1888 = vpop.f32.mrf.mxu0
      %v1889 = vadd.f32 %v1800, %v1888
      %1890 = vmatmul.bf16.gmra.mxu0 %v1016
      %v1891 = vpop.f32.mrf.mxu0
      %v1892 = vadd.f32 %v1803, %v1891
      %v1893 = vpop.f32.mrf.mxu0
      %v1894 = vadd.f32 %v1805, %v1893
      %1895 = vmatmul.bf16.gmra.mxu0 %v1017
      %v1896 = vpop.f32.mrf.mxu0
      %v1897 = vadd.f32 %v1808, %v1896
      %v1898 = vpop.f32.mrf.mxu0
      %v1899 = vadd.f32 %v1810, %v1898
      %1900 = vmatmul.bf16.gmra.mxu0 %v1018
      %v1901 = vpop.f32.mrf.mxu0
      %v1902 = vadd.f32 %v1813, %v1901
      %v1903 = vpop.f32.mrf.mxu0
      %v1904 = vadd.f32 %v1815, %v1903
      %1905 = vdwg.mxu0
      %1906 = vmatpush.bf16.msra.mxu0 %v1526
      %1907 = vmatpush.bf16.msra.mxu0 %v1525
      %1908 = vmatpush.bf16.msra.mxu0 %v1524
      %1909 = vmatpush.bf16.msra.mxu0 %v1523
      %1910 = vmatpush.bf16.msra.mxu0 %v1522
      %1911 = vmatpush.bf16.msra.mxu0 %v1521
      %1912 = vmatpush.bf16.msra.mxu0 %v1520
      %1913 = vmatpush.bf16.msra.mxu0 %v1519
      %1914 = vmatmul.bf16.gmra.mxu0 %v876
      %v1915 = vpop.f32.mrf.mxu0
      %v1916 = vadd.f32 %v1827, %v1915
      %v1917 = vpop.f32.mrf.mxu0
      %v1918 = vadd.f32 %v1829, %v1917
      %1919 = vmatmul.bf16.gmra.mxu0 %v877
      %v1920 = vpop.f32.mrf.mxu0
      %v1921 = vadd.f32 %v1832, %v1920
      %v1922 = vpop.f32.mrf.mxu0
      %v1923 = vadd.f32 %v1834, %v1922
      %1924 = vmatmul.bf16.gmra.mxu0 %v878
      %v1925 = vpop.f32.mrf.mxu0
      %v1926 = vadd.f32 %v1837, %v1925
      %v1927 = vpop.f32.mrf.mxu0
      %v1928 = vadd.f32 %v1839, %v1927
      %1929 = vmatmul.bf16.gmra.mxu0 %v879
      %v1930 = vpop.f32.mrf.mxu0
      %v1931 = vadd.f32 %v1842, %v1930
      %v1932 = vpop.f32.mrf.mxu0
      %v1933 = vadd.f32 %v1844, %v1932
      %1934 = vmatmul.bf16.gmra.mxu0 %v880
      %v1935 = vpop.f32.mrf.mxu0
      %v1936 = vadd.f32 %v1847, %v1935
      %v1937 = vpop.f32.mrf.mxu0
      %v1938 = vadd.f32 %v1849, %v1937
      %1939 = vmatmul.bf16.gmra.mxu0 %v881
      %v1940 = vpop.f32.mrf.mxu0
      %v1941 = vadd.f32 %v1852, %v1940
      %v1942 = vpop.f32.mrf.mxu0
      %v1943 = vadd.f32 %v1854, %v1942
      %1944 = vmatmul.bf16.gmra.mxu0 %v882
      %v1945 = vpop.f32.mrf.mxu0
      %v1946 = vadd.f32 %v1857, %v1945
      %v1947 = vpop.f32.mrf.mxu0
      %v1948 = vadd.f32 %v1859, %v1947
      %1949 = vmatmul.bf16.gmra.mxu0 %v883
      %v1950 = vpop.f32.mrf.mxu0
      %v1951 = vadd.f32 %v1862, %v1950
      %v1952 = vpop.f32.mrf.mxu0
      %v1953 = vadd.f32 %v1864, %v1952
      %1954 = vmatmul.bf16.gmra.mxu0 %v884
      %v1955 = vpop.f32.mrf.mxu0
      %v1956 = vadd.f32 %v1867, %v1955
      %v1957 = vpop.f32.mrf.mxu0
      %v1958 = vadd.f32 %v1869, %v1957
      %1959 = vmatmul.bf16.gmra.mxu0 %v885
      %v1960 = vpop.f32.mrf.mxu0
      %v1961 = vadd.f32 %v1872, %v1960
      %v1962 = vpop.f32.mrf.mxu0
      %v1963 = vadd.f32 %v1874, %v1962
      %1964 = vmatmul.bf16.gmra.mxu0 %v886
      %v1965 = vpop.f32.mrf.mxu0
      %v1966 = vadd.f32 %v1877, %v1965
      %v1967 = vpop.f32.mrf.mxu0
      %v1968 = vadd.f32 %v1879, %v1967
      %1969 = vmatmul.bf16.gmra.mxu0 %v887
      %v1970 = vpop.f32.mrf.mxu0
      %v1971 = vadd.f32 %v1882, %v1970
      %v1972 = vpop.f32.mrf.mxu0
      %v1973 = vadd.f32 %v1884, %v1972
      %1974 = vmatmul.bf16.gmra.mxu0 %v888
      %v1975 = vpop.f32.mrf.mxu0
      %v1976 = vadd.f32 %v1887, %v1975
      %v1977 = vpop.f32.mrf.mxu0
      %v1978 = vadd.f32 %v1889, %v1977
      %1979 = vmatmul.bf16.gmra.mxu0 %v889
      %v1980 = vpop.f32.mrf.mxu0
      %v1981 = vadd.f32 %v1892, %v1980
      %v1982 = vpop.f32.mrf.mxu0
      %v1983 = vadd.f32 %v1894, %v1982
      %1984 = vmatmul.bf16.gmra.mxu0 %v890
      %v1985 = vpop.f32.mrf.mxu0
      %v1986 = vadd.f32 %v1897, %v1985
      %v1987 = vpop.f32.mrf.mxu0
      %v1988 = vadd.f32 %v1899, %v1987
      %1989 = vmatmul.bf16.gmra.mxu0 %v1037
      %v1990 = vpop.f32.mrf.mxu0
      %v1991 = vadd.f32 %v1902, %v1990
      %v1992 = vpop.f32.mrf.mxu0
      %v1993 = vadd.f32 %v1904, %v1992
      %1994 = vdwg.mxu0
      %1995 = vmatpush.bf16.msra.mxu0 %v1534
      %1996 = vmatpush.bf16.msra.mxu0 %v1533
      %1997 = vmatpush.bf16.msra.mxu0 %v1532
      %1998 = vmatpush.bf16.msra.mxu0 %v1531
      %1999 = vmatpush.bf16.msra.mxu0 %v1530
      %2000 = vmatpush.bf16.msra.mxu0 %v1529
      %2001 = vmatpush.bf16.msra.mxu0 %v1528
      %2002 = vmatpush.bf16.msra.mxu0 %v1527
      %2003 = vmatmul.bf16.gmra.mxu0 %v940
      %v2004 = vpop.f32.mrf.mxu0
      %v2005 = vadd.f32 %v1916, %v2004
      %v2006 = vpop.f32.mrf.mxu0
      %v2007 = vadd.f32 %v1918, %v2006
      %2008 = vmatmul.bf16.gmra.mxu0 %v941
      %v2009 = vpop.f32.mrf.mxu0
      %v2010 = vadd.f32 %v1921, %v2009
      %v2011 = vpop.f32.mrf.mxu0
      %v2012 = vadd.f32 %v1923, %v2011
      %2013 = vmatmul.bf16.gmra.mxu0 %v942
      %v2014 = vpop.f32.mrf.mxu0
      %v2015 = vadd.f32 %v1926, %v2014
      %v2016 = vpop.f32.mrf.mxu0
      %v2017 = vadd.f32 %v1928, %v2016
      %2018 = vmatmul.bf16.gmra.mxu0 %v943
      %v2019 = vpop.f32.mrf.mxu0
      %v2020 = vadd.f32 %v1931, %v2019
      %v2021 = vpop.f32.mrf.mxu0
      %v2022 = vadd.f32 %v1933, %v2021
      %2023 = vmatmul.bf16.gmra.mxu0 %v944
      %v2024 = vpop.f32.mrf.mxu0
      %v2025 = vadd.f32 %v1936, %v2024
      %v2026 = vpop.f32.mrf.mxu0
      %v2027 = vadd.f32 %v1938, %v2026
      %2028 = vmatmul.bf16.gmra.mxu0 %v945
      %v2029 = vpop.f32.mrf.mxu0
      %v2030 = vadd.f32 %v1941, %v2029
      %v2031 = vpop.f32.mrf.mxu0
      %v2032 = vadd.f32 %v1943, %v2031
      %2033 = vmatmul.bf16.gmra.mxu0 %v946
      %v2034 = vpop.f32.mrf.mxu0
      %v2035 = vadd.f32 %v1946, %v2034
      %v2036 = vpop.f32.mrf.mxu0
      %v2037 = vadd.f32 %v1948, %v2036
      %2038 = vmatmul.bf16.gmra.mxu0 %v947
      %v2039 = vpop.f32.mrf.mxu0
      %v2040 = vadd.f32 %v1951, %v2039
      %v2041 = vpop.f32.mrf.mxu0
      %v2042 = vadd.f32 %v1953, %v2041
      %2043 = vmatmul.bf16.gmra.mxu0 %v948
      %v2044 = vpop.f32.mrf.mxu0
      %v2045 = vadd.f32 %v1956, %v2044
      %v2046 = vpop.f32.mrf.mxu0
      %v2047 = vadd.f32 %v1958, %v2046
      %2048 = vmatmul.bf16.gmra.mxu0 %v949
      %v2049 = vpop.f32.mrf.mxu0
      %v2050 = vadd.f32 %v1961, %v2049
      %v2051 = vpop.f32.mrf.mxu0
      %v2052 = vadd.f32 %v1963, %v2051
      %2053 = vmatmul.bf16.gmra.mxu0 %v950
      %v2054 = vpop.f32.mrf.mxu0
      %v2055 = vadd.f32 %v1966, %v2054
      %v2056 = vpop.f32.mrf.mxu0
      %v2057 = vadd.f32 %v1968, %v2056
      %2058 = vmatmul.bf16.gmra.mxu0 %v951
      %v2059 = vpop.f32.mrf.mxu0
      %v2060 = vadd.f32 %v1971, %v2059
      %v2061 = vpop.f32.mrf.mxu0
      %v2062 = vadd.f32 %v1973, %v2061
      %2063 = vmatmul.bf16.gmra.mxu0 %v952
      %v2064 = vpop.f32.mrf.mxu0
      %v2065 = vadd.f32 %v1976, %v2064
      %v2066 = vpop.f32.mrf.mxu0
      %v2067 = vadd.f32 %v1978, %v2066
      %2068 = vmatmul.bf16.gmra.mxu0 %v953
      %v2069 = vpop.f32.mrf.mxu0
      %v2070 = vadd.f32 %v1981, %v2069
      %v2071 = vpop.f32.mrf.mxu0
      %v2072 = vadd.f32 %v1983, %v2071
      %2073 = vmatmul.bf16.gmra.mxu0 %v954
      %v2074 = vpop.f32.mrf.mxu0
      %v2075 = vadd.f32 %v1986, %v2074
      %v2076 = vpop.f32.mrf.mxu0
      %v2077 = vadd.f32 %v1988, %v2076
      %2078 = vmatmul.bf16.gmra.mxu0 %v1041
      %v2079 = vpop.f32.mrf.mxu0
      %v2080 = vadd.f32 %v1991, %v2079
      %v2081 = vpop.f32.mrf.mxu0
      %v2082 = vadd.f32 %v1993, %v2081
      %2083 = vdwg.mxu0
      %2084 = vmatpush.bf16.msra.mxu0 %v1542
      %2085 = vmatpush.bf16.msra.mxu0 %v1541
      %2086 = vmatpush.bf16.msra.mxu0 %v1540
      %2087 = vmatpush.bf16.msra.mxu0 %v1539
      %2088 = vmatpush.bf16.msra.mxu0 %v1538
      %2089 = vmatpush.bf16.msra.mxu0 %v1537
      %2090 = vmatpush.bf16.msra.mxu0 %v1536
      %2091 = vmatpush.bf16.msra.mxu0 %v1535
      %2092 = vmatmul.bf16.gmra.mxu0 %v1004
      %v2093 = vpop.f32.mrf.mxu0
      %v2094 = vadd.f32 %v2005, %v2093
      %v2095 = vpop.f32.mrf.mxu0
      %v2096 = vadd.f32 %v2007, %v2095
      %2097 = vmatmul.bf16.gmra.mxu0 %v1005
      %v2098 = vpop.f32.mrf.mxu0
      %v2099 = vadd.f32 %v2010, %v2098
      %v2100 = vpop.f32.mrf.mxu0
      %v2101 = vadd.f32 %v2012, %v2100
      %2102 = vmatmul.bf16.gmra.mxu0 %v1006
      %v2103 = vpop.f32.mrf.mxu0
      %v2104 = vadd.f32 %v2015, %v2103
      %v2105 = vpop.f32.mrf.mxu0
      %v2106 = vadd.f32 %v2017, %v2105
      %2107 = vmatmul.bf16.gmra.mxu0 %v1007
      %v2108 = vpop.f32.mrf.mxu0
      %v2109 = vadd.f32 %v2020, %v2108
      %v2110 = vpop.f32.mrf.mxu0
      %v2111 = vadd.f32 %v2022, %v2110
      %2112 = vmatmul.bf16.gmra.mxu0 %v1008
      %v2113 = vpop.f32.mrf.mxu0
      %v2114 = vadd.f32 %v2025, %v2113
      %v2115 = vpop.f32.mrf.mxu0
      %v2116 = vadd.f32 %v2027, %v2115
      %2117 = vmatmul.bf16.gmra.mxu0 %v1009
      %v2118 = vpop.f32.mrf.mxu0
      %v2119 = vadd.f32 %v2030, %v2118
      %v2120 = vpop.f32.mrf.mxu0
      %v2121 = vadd.f32 %v2032, %v2120
      %2122 = vmatmul.bf16.gmra.mxu0 %v1010
      %v2123 = vpop.f32.mrf.mxu0
      %v2124 = vadd.f32 %v2035, %v2123
      %v2125 = vpop.f32.mrf.mxu0
      %v2126 = vadd.f32 %v2037, %v2125
      %2127 = vmatmul.bf16.gmra.mxu0 %v1011
      %v2128 = vpop.f32.mrf.mxu0
      %v2129 = vadd.f32 %v2040, %v2128
      %v2130 = vpop.f32.mrf.mxu0
      %v2131 = vadd.f32 %v2042, %v2130
      %2132 = vmatmul.bf16.gmra.mxu0 %v1012
      %v2133 = vpop.f32.mrf.mxu0
      %v2134 = vadd.f32 %v2045, %v2133
      %v2135 = vpop.f32.mrf.mxu0
      %v2136 = vadd.f32 %v2047, %v2135
      %2137 = vmatmul.bf16.gmra.mxu0 %v1013
      %v2138 = vpop.f32.mrf.mxu0
      %v2139 = vadd.f32 %v2050, %v2138
      %v2140 = vpop.f32.mrf.mxu0
      %v2141 = vadd.f32 %v2052, %v2140
      %2142 = vmatmul.bf16.gmra.mxu0 %v1014
      %v2143 = vpop.f32.mrf.mxu0
      %v2144 = vadd.f32 %v2055, %v2143
      %v2145 = vpop.f32.mrf.mxu0
      %v2146 = vadd.f32 %v2057, %v2145
      %2147 = vmatmul.bf16.gmra.mxu0 %v1015
      %v2148 = vpop.f32.mrf.mxu0
      %v2149 = vadd.f32 %v2060, %v2148
      %v2150 = vpop.f32.mrf.mxu0
      %v2151 = vadd.f32 %v2062, %v2150
      %2152 = vmatmul.bf16.gmra.mxu0 %v1016
      %v2153 = vpop.f32.mrf.mxu0
      %v2154 = vadd.f32 %v2065, %v2153
      %v2155 = vpop.f32.mrf.mxu0
      %v2156 = vadd.f32 %v2067, %v2155
      %2157 = vmatmul.bf16.gmra.mxu0 %v1017
      %v2158 = vpop.f32.mrf.mxu0
      %v2159 = vadd.f32 %v2070, %v2158
      %v2160 = vpop.f32.mrf.mxu0
      %v2161 = vadd.f32 %v2072, %v2160
      %2162 = vmatmul.bf16.gmra.mxu0 %v1018
      %v2163 = vpop.f32.mrf.mxu0
      %v2164 = vadd.f32 %v2075, %v2163
      %v2165 = vpop.f32.mrf.mxu0
      %v2166 = vadd.f32 %v2077, %v2165
      %2167 = vmatmul.bf16.gmra.mxu0 %v1045
      %v2168 = vpop.f32.mrf.mxu0
      %v2169 = vadd.f32 %v2080, %v2168
      %v2170 = vpop.f32.mrf.mxu0
      %v2171 = vadd.f32 %v2082, %v2170
      %2172 = vdwg.mxu0
      %2173 = vmatpush.bf16.msra.mxu0 %v1550
      %2174 = vmatpush.bf16.msra.mxu0 %v1549
      %2175 = vmatpush.bf16.msra.mxu0 %v1548
      %2176 = vmatpush.bf16.msra.mxu0 %v1547
      %2177 = vmatpush.bf16.msra.mxu0 %v1546
      %2178 = vmatpush.bf16.msra.mxu0 %v1545
      %2179 = vmatpush.bf16.msra.mxu0 %v1544
      %2180 = vmatpush.bf16.msra.mxu0 %v1543
      %2181 = vmatmul.bf16.gmra.mxu0 %v877
      %v2182 = vpop.f32.mrf.mxu0
      %v2183 = vadd.f32 %v2094, %v2182
      %v2184 = vpop.f32.mrf.mxu0
      %v2185 = vadd.f32 %v2096, %v2184
      %2186 = vmatmul.bf16.gmra.mxu0 %v878
      %v2187 = vpop.f32.mrf.mxu0
      %v2188 = vadd.f32 %v2099, %v2187
      %v2189 = vpop.f32.mrf.mxu0
      %v2190 = vadd.f32 %v2101, %v2189
      %2191 = vmatmul.bf16.gmra.mxu0 %v879
      %v2192 = vpop.f32.mrf.mxu0
      %v2193 = vadd.f32 %v2104, %v2192
      %v2194 = vpop.f32.mrf.mxu0
      %v2195 = vadd.f32 %v2106, %v2194
      %2196 = vmatmul.bf16.gmra.mxu0 %v880
      %v2197 = vpop.f32.mrf.mxu0
      %v2198 = vadd.f32 %v2109, %v2197
      %v2199 = vpop.f32.mrf.mxu0
      %v2200 = vadd.f32 %v2111, %v2199
      %2201 = vmatmul.bf16.gmra.mxu0 %v881
      %v2202 = vpop.f32.mrf.mxu0
      %v2203 = vadd.f32 %v2114, %v2202
      %v2204 = vpop.f32.mrf.mxu0
      %v2205 = vadd.f32 %v2116, %v2204
      %2206 = vmatmul.bf16.gmra.mxu0 %v882
      %v2207 = vpop.f32.mrf.mxu0
      %v2208 = vadd.f32 %v2119, %v2207
      %v2209 = vpop.f32.mrf.mxu0
      %v2210 = vadd.f32 %v2121, %v2209
      %2211 = vmatmul.bf16.gmra.mxu0 %v883
      %v2212 = vpop.f32.mrf.mxu0
      %v2213 = vadd.f32 %v2124, %v2212
      %v2214 = vpop.f32.mrf.mxu0
      %v2215 = vadd.f32 %v2126, %v2214
      %2216 = vmatmul.bf16.gmra.mxu0 %v884
      %v2217 = vpop.f32.mrf.mxu0
      %v2218 = vadd.f32 %v2129, %v2217
      %v2219 = vpop.f32.mrf.mxu0
      %v2220 = vadd.f32 %v2131, %v2219
      %2221 = vmatmul.bf16.gmra.mxu0 %v885
      %v2222 = vpop.f32.mrf.mxu0
      %v2223 = vadd.f32 %v2134, %v2222
      %v2224 = vpop.f32.mrf.mxu0
      %v2225 = vadd.f32 %v2136, %v2224
      %2226 = vmatmul.bf16.gmra.mxu0 %v886
      %v2227 = vpop.f32.mrf.mxu0
      %v2228 = vadd.f32 %v2139, %v2227
      %v2229 = vpop.f32.mrf.mxu0
      %v2230 = vadd.f32 %v2141, %v2229
      %2231 = vmatmul.bf16.gmra.mxu0 %v887
      %v2232 = vpop.f32.mrf.mxu0
      %v2233 = vadd.f32 %v2144, %v2232
      %v2234 = vpop.f32.mrf.mxu0
      %v2235 = vadd.f32 %v2146, %v2234
      %2236 = vmatmul.bf16.gmra.mxu0 %v888
      %v2237 = vpop.f32.mrf.mxu0
      %v2238 = vadd.f32 %v2149, %v2237
      %v2239 = vpop.f32.mrf.mxu0
      %v2240 = vadd.f32 %v2151, %v2239
      %2241 = vmatmul.bf16.gmra.mxu0 %v889
      %v2242 = vpop.f32.mrf.mxu0
      %v2243 = vadd.f32 %v2154, %v2242
      %v2244 = vpop.f32.mrf.mxu0
      %v2245 = vadd.f32 %v2156, %v2244
      %2246 = vmatmul.bf16.gmra.mxu0 %v890
      %v2247 = vpop.f32.mrf.mxu0
      %v2248 = vadd.f32 %v2159, %v2247
      %v2249 = vpop.f32.mrf.mxu0
      %v2250 = vadd.f32 %v2161, %v2249
      %2251 = vmatmul.bf16.gmra.mxu0 %v1037
      %v2252 = vpop.f32.mrf.mxu0
      %v2253 = vadd.f32 %v2164, %v2252
      %v2254 = vpop.f32.mrf.mxu0
      %v2255 = vadd.f32 %v2166, %v2254
      %2256 = vmatmul.bf16.gmra.mxu0 %v1049
      %v2257 = vpop.f32.mrf.mxu0
      %v2258 = vadd.f32 %v2169, %v2257
      %v2259 = vpop.f32.mrf.mxu0
      %v2260 = vadd.f32 %v2171, %v2259
      %2261 = vdwg.mxu0
      %2262 = vmatpush.bf16.msra.mxu0 %v1558
      %2263 = vmatpush.bf16.msra.mxu0 %v1557
      %2264 = vmatpush.bf16.msra.mxu0 %v1556
      %2265 = vmatpush.bf16.msra.mxu0 %v1555
      %2266 = vmatpush.bf16.msra.mxu0 %v1554
      %2267 = vmatpush.bf16.msra.mxu0 %v1553
      %2268 = vmatpush.bf16.msra.mxu0 %v1552
      %2269 = vmatpush.bf16.msra.mxu0 %v1551
      %2270 = vmatmul.bf16.gmra.mxu0 %v941
      %v2271 = vpop.f32.mrf.mxu0
      %v2272 = vadd.f32 %v2183, %v2271
      %v2273 = vpop.f32.mrf.mxu0
      %v2274 = vadd.f32 %v2185, %v2273
      %2275 = vmatmul.bf16.gmra.mxu0 %v942
      %v2276 = vpop.f32.mrf.mxu0
      %v2277 = vadd.f32 %v2188, %v2276
      %v2278 = vpop.f32.mrf.mxu0
      %v2279 = vadd.f32 %v2190, %v2278
      %2280 = vmatmul.bf16.gmra.mxu0 %v943
      %v2281 = vpop.f32.mrf.mxu0
      %v2282 = vadd.f32 %v2193, %v2281
      %v2283 = vpop.f32.mrf.mxu0
      %v2284 = vadd.f32 %v2195, %v2283
      %2285 = vmatmul.bf16.gmra.mxu0 %v944
      %v2286 = vpop.f32.mrf.mxu0
      %v2287 = vadd.f32 %v2198, %v2286
      %v2288 = vpop.f32.mrf.mxu0
      %v2289 = vadd.f32 %v2200, %v2288
      %2290 = vmatmul.bf16.gmra.mxu0 %v945
      %v2291 = vpop.f32.mrf.mxu0
      %v2292 = vadd.f32 %v2203, %v2291
      %v2293 = vpop.f32.mrf.mxu0
      %v2294 = vadd.f32 %v2205, %v2293
      %2295 = vmatmul.bf16.gmra.mxu0 %v946
      %v2296 = vpop.f32.mrf.mxu0
      %v2297 = vadd.f32 %v2208, %v2296
      %v2298 = vpop.f32.mrf.mxu0
      %v2299 = vadd.f32 %v2210, %v2298
      %2300 = vmatmul.bf16.gmra.mxu0 %v947
      %v2301 = vpop.f32.mrf.mxu0
      %v2302 = vadd.f32 %v2213, %v2301
      %v2303 = vpop.f32.mrf.mxu0
      %v2304 = vadd.f32 %v2215, %v2303
      %2305 = vmatmul.bf16.gmra.mxu0 %v948
      %v2306 = vpop.f32.mrf.mxu0
      %v2307 = vadd.f32 %v2218, %v2306
      %v2308 = vpop.f32.mrf.mxu0
      %v2309 = vadd.f32 %v2220, %v2308
      %2310 = vmatmul.bf16.gmra.mxu0 %v949
      %v2311 = vpop.f32.mrf.mxu0
      %v2312 = vadd.f32 %v2223, %v2311
      %v2313 = vpop.f32.mrf.mxu0
      %v2314 = vadd.f32 %v2225, %v2313
      %2315 = vmatmul.bf16.gmra.mxu0 %v950
      %v2316 = vpop.f32.mrf.mxu0
      %v2317 = vadd.f32 %v2228, %v2316
      %v2318 = vpop.f32.mrf.mxu0
      %v2319 = vadd.f32 %v2230, %v2318
      %2320 = vmatmul.bf16.gmra.mxu0 %v951
      %v2321 = vpop.f32.mrf.mxu0
      %v2322 = vadd.f32 %v2233, %v2321
      %v2323 = vpop.f32.mrf.mxu0
      %v2324 = vadd.f32 %v2235, %v2323
      %2325 = vmatmul.bf16.gmra.mxu0 %v952
      %v2326 = vpop.f32.mrf.mxu0
      %v2327 = vadd.f32 %v2238, %v2326
      %v2328 = vpop.f32.mrf.mxu0
      %v2329 = vadd.f32 %v2240, %v2328
      %2330 = vmatmul.bf16.gmra.mxu0 %v953
      %v2331 = vpop.f32.mrf.mxu0
      %v2332 = vadd.f32 %v2243, %v2331
      %v2333 = vpop.f32.mrf.mxu0
      %v2334 = vadd.f32 %v2245, %v2333
      %2335 = vmatmul.bf16.gmra.mxu0 %v954
      %v2336 = vpop.f32.mrf.mxu0
      %v2337 = vadd.f32 %v2248, %v2336
      %v2338 = vpop.f32.mrf.mxu0
      %v2339 = vadd.f32 %v2250, %v2338
      %2340 = vmatmul.bf16.gmra.mxu0 %v1041
      %v2341 = vpop.f32.mrf.mxu0
      %v2342 = vadd.f32 %v2253, %v2341
      %v2343 = vpop.f32.mrf.mxu0
      %v2344 = vadd.f32 %v2255, %v2343
      %2345 = vmatmul.bf16.gmra.mxu0 %v1053
      %v2346 = vpop.f32.mrf.mxu0
      %v2347 = vadd.f32 %v2258, %v2346
      %v2348 = vpop.f32.mrf.mxu0
      %v2349 = vadd.f32 %v2260, %v2348
      %2350 = vdwg.mxu0
      %2351 = vmatpush.bf16.msra.mxu0 %v1566
      %2352 = vmatpush.bf16.msra.mxu0 %v1565
      %2353 = vmatpush.bf16.msra.mxu0 %v1564
      %2354 = vmatpush.bf16.msra.mxu0 %v1563
      %2355 = vmatpush.bf16.msra.mxu0 %v1562
      %2356 = vmatpush.bf16.msra.mxu0 %v1561
      %2357 = vmatpush.bf16.msra.mxu0 %v1560
      %2358 = vmatpush.bf16.msra.mxu0 %v1559
      %2359 = vmatmul.bf16.gmra.mxu0 %v1005
      %v2360 = vpop.f32.mrf.mxu0
      %v2361 = vadd.f32 %v2272, %v2360
      %v2362 = vpop.f32.mrf.mxu0
      %v2363 = vadd.f32 %v2274, %v2362
      %2364 = vmatmul.bf16.gmra.mxu0 %v1006
      %v2365 = vpop.f32.mrf.mxu0
      %v2366 = vadd.f32 %v2277, %v2365
      %v2367 = vpop.f32.mrf.mxu0
      %v2368 = vadd.f32 %v2279, %v2367
      %2369 = vmatmul.bf16.gmra.mxu0 %v1007
      %v2370 = vpop.f32.mrf.mxu0
      %v2371 = vadd.f32 %v2282, %v2370
      %v2372 = vpop.f32.mrf.mxu0
      %v2373 = vadd.f32 %v2284, %v2372
      %2374 = vmatmul.bf16.gmra.mxu0 %v1008
      %v2375 = vpop.f32.mrf.mxu0
      %v2376 = vadd.f32 %v2287, %v2375
      %v2377 = vpop.f32.mrf.mxu0
      %v2378 = vadd.f32 %v2289, %v2377
      %2379 = vmatmul.bf16.gmra.mxu0 %v1009
      %v2380 = vpop.f32.mrf.mxu0
      %v2381 = vadd.f32 %v2292, %v2380
      %v2382 = vpop.f32.mrf.mxu0
      %v2383 = vadd.f32 %v2294, %v2382
      %2384 = vmatmul.bf16.gmra.mxu0 %v1010
      %v2385 = vpop.f32.mrf.mxu0
      %v2386 = vadd.f32 %v2297, %v2385
      %v2387 = vpop.f32.mrf.mxu0
      %v2388 = vadd.f32 %v2299, %v2387
      %2389 = vmatmul.bf16.gmra.mxu0 %v1011
      %v2390 = vpop.f32.mrf.mxu0
      %v2391 = vadd.f32 %v2302, %v2390
      %v2392 = vpop.f32.mrf.mxu0
      %v2393 = vadd.f32 %v2304, %v2392
      %2394 = vmatmul.bf16.gmra.mxu0 %v1012
      %v2395 = vpop.f32.mrf.mxu0
      %v2396 = vadd.f32 %v2307, %v2395
      %v2397 = vpop.f32.mrf.mxu0
      %v2398 = vadd.f32 %v2309, %v2397
      %2399 = vmatmul.bf16.gmra.mxu0 %v1013
      %v2400 = vpop.f32.mrf.mxu0
      %v2401 = vadd.f32 %v2312, %v2400
      %v2402 = vpop.f32.mrf.mxu0
      %v2403 = vadd.f32 %v2314, %v2402
      %2404 = vmatmul.bf16.gmra.mxu0 %v1014
      %v2405 = vpop.f32.mrf.mxu0
      %v2406 = vadd.f32 %v2317, %v2405
      %v2407 = vpop.f32.mrf.mxu0
      %v2408 = vadd.f32 %v2319, %v2407
      %2409 = vmatmul.bf16.gmra.mxu0 %v1015
      %v2410 = vpop.f32.mrf.mxu0
      %v2411 = vadd.f32 %v2322, %v2410
      %v2412 = vpop.f32.mrf.mxu0
      %v2413 = vadd.f32 %v2324, %v2412
      %2414 = vmatmul.bf16.gmra.mxu0 %v1016
      %v2415 = vpop.f32.mrf.mxu0
      %v2416 = vadd.f32 %v2327, %v2415
      %v2417 = vpop.f32.mrf.mxu0
      %v2418 = vadd.f32 %v2329, %v2417
      %2419 = vmatmul.bf16.gmra.mxu0 %v1017
      %v2420 = vpop.f32.mrf.mxu0
      %v2421 = vadd.f32 %v2332, %v2420
      %v2422 = vpop.f32.mrf.mxu0
      %v2423 = vadd.f32 %v2334, %v2422
      %2424 = vmatmul.bf16.gmra.mxu0 %v1018
      %v2425 = vpop.f32.mrf.mxu0
      %v2426 = vadd.f32 %v2337, %v2425
      %v2427 = vpop.f32.mrf.mxu0
      %v2428 = vadd.f32 %v2339, %v2427
      %2429 = vmatmul.bf16.gmra.mxu0 %v1045
      %v2430 = vpop.f32.mrf.mxu0
      %v2431 = vadd.f32 %v2342, %v2430
      %v2432 = vpop.f32.mrf.mxu0
      %v2433 = vadd.f32 %v2344, %v2432
      %2434 = vmatmul.bf16.gmra.mxu0 %v1057
      %v2435 = vpop.f32.mrf.mxu0
      %v2436 = vadd.f32 %v2347, %v2435
      %v2437 = vpop.f32.mrf.mxu0
      %v2438 = vadd.f32 %v2349, %v2437
      %2439 = vdwg.mxu0
      %v2440 = vmax.f32 %v2361, 0.0
      %v2441 = vmax.f32 %v2363, 0.0
      %v2442 = vmax.f32 %v2366, 0.0
      %v2443 = vmax.f32 %v2368, 0.0
      %v2444 = vmax.f32 %v2371, 0.0
      %v2445 = vmax.f32 %v2373, 0.0
      %v2446 = vmax.f32 %v2376, 0.0
      %v2447 = vmax.f32 %v2378, 0.0
      %v2448 = vmax.f32 %v2381, 0.0
      %v2449 = vmax.f32 %v2383, 0.0
      %v2450 = vmax.f32 %v2386, 0.0
      %v2451 = vmax.f32 %v2388, 0.0
      %v2452 = vmax.f32 %v2391, 0.0
      %v2453 = vmax.f32 %v2393, 0.0
      %v2454 = vmax.f32 %v2396, 0.0
      %v2455 = vmax.f32 %v2398, 0.0
      %v2456 = vmax.f32 %v2401, 0.0
      %v2457 = vmax.f32 %v2403, 0.0
      %v2458 = vmax.f32 %v2406, 0.0
      %v2459 = vmax.f32 %v2408, 0.0
      %v2460 = vmax.f32 %v2411, 0.0
      %v2461 = vmax.f32 %v2413, 0.0
      %v2462 = vmax.f32 %v2416, 0.0
      %v2463 = vmax.f32 %v2418, 0.0
      %v2464 = vmax.f32 %v2421, 0.0
      %v2465 = vmax.f32 %v2423, 0.0
      %v2466 = vmax.f32 %v2426, 0.0
      %v2467 = vmax.f32 %v2428, 0.0
      %v2468 = vmax.f32 %v2431, 0.0
      %v2469 = vmax.f32 %v2433, 0.0
      %v2470 = vmax.f32 %v2436, 0.0
      %v2471 = vmax.f32 %v2438, 0.0
      %v2472 = vpack.c.bf16 %v2440, %v2440
      %v2473 = vpack.c.bf16 %v2441, %v2441
      %v2474 = vpack.c.bf16 %v2442, %v2442
      %v2475 = vpack.c.bf16 %v2443, %v2443
      %v2476 = vpack.c.bf16 %v2444, %v2444
      %v2477 = vpack.c.bf16 %v2445, %v2445
      %v2478 = vpack.c.bf16 %v2446, %v2446
      %v2479 = vpack.c.bf16 %v2447, %v2447
      %v2480 = vpack.c.bf16 %v2448, %v2448
      %v2481 = vpack.c.bf16 %v2449, %v2449
      %v2482 = vpack.c.bf16 %v2450, %v2450
      %v2483 = vpack.c.bf16 %v2451, %v2451
      %v2484 = vpack.c.bf16 %v2452, %v2452
      %v2485 = vpack.c.bf16 %v2453, %v2453
      %v2486 = vpack.c.bf16 %v2454, %v2454
      %v2487 = vpack.c.bf16 %v2455, %v2455
      %v2488 = vpack.c.bf16 %v2456, %v2456
      %v2489 = vpack.c.bf16 %v2457, %v2457
      %v2490 = vpack.c.bf16 %v2458, %v2458
      %v2491 = vpack.c.bf16 %v2459, %v2459
      %v2492 = vpack.c.bf16 %v2460, %v2460
      %v2493 = vpack.c.bf16 %v2461, %v2461
      %v2494 = vpack.c.bf16 %v2462, %v2462
      %v2495 = vpack.c.bf16 %v2463, %v2463
      %v2496 = vpack.c.bf16 %v2464, %v2464
      %v2497 = vpack.c.bf16 %v2465, %v2465
      %v2498 = vpack.c.bf16 %v2466, %v2466
      %v2499 = vpack.c.bf16 %v2467, %v2467
      %v2500 = vpack.c.bf16 %v2468, %v2468
      %v2501 = vpack.c.bf16 %v2469, %v2469
      %v2502 = vpack.c.bf16 %v2470, %v2470
      %v2503 = vpack.c.bf16 %v2471, %v2471
      %2504 = vst [vmem:[%s170] sm:$0xf] %v2472
      %2505 = vst [vmem:[%s170 + $0x4] sm:$0xf] %v2473
      %2506 = vst [vmem:[%s170 + $0x8] sm:$0xf] %v2474
      %2507 = vst [vmem:[%s170 + $0xc] sm:$0xf] %v2475
      %2508 = vst [vmem:[%s170 + $0x10] sm:$0xf] %v2476
      %2509 = vst [vmem:[%s170 + $0x14] sm:$0xf] %v2477
      %2510 = vst [vmem:[%s170 + $0x18] sm:$0xf] %v2478
      %2511 = vst [vmem:[%s170 + $0x1c] sm:$0xf] %v2479
      %2512 = vst [vmem:[%s170 + $0x20] sm:$0xf] %v2480
      %2513 = vst [vmem:[%s170 + $0x24] sm:$0xf] %v2481
      %2514 = vst [vmem:[%s170 + $0x28] sm:$0xf] %v2482
      %2515 = vst [vmem:[%s170 + $0x2c] sm:$0xf] %v2483
      %2516 = vst [vmem:[%s170 + $0x30] sm:$0xf] %v2484
      %2517 = vst [vmem:[%s170 + $0x34] sm:$0xf] %v2485
      %2518 = vst [vmem:[%s170 + $0x38] sm:$0xf] %v2486
      %2519 = vst [vmem:[%s170 + $0x3c] sm:$0xf] %v2487
      %2520 = vst [vmem:[%s170 + $0x40] sm:$0xf] %v2488
      %2521 = vst [vmem:[%s170 + $0x44] sm:$0xf] %v2489
      %2522 = vst [vmem:[%s170 + $0x48] sm:$0xf] %v2490
      %2523 = vst [vmem:[%s170 + $0x4c] sm:$0xf] %v2491
      %2524 = vst [vmem:[%s170 + $0x50] sm:$0xf] %v2492
      %2525 = vst [vmem:[%s170 + $0x54] sm:$0xf] %v2493
      %2526 = vst [vmem:[%s170 + $0x58] sm:$0xf] %v2494
      %2527 = vst [vmem:[%s170 + $0x5c] sm:$0xf] %v2495
      %2528 = vst [vmem:[%s170 + $0x60] sm:$0xf] %v2496
      %2529 = vst [vmem:[%s170 + $0x64] sm:$0xf] %v2497
      %2530 = vst [vmem:[%s170 + $0x68] sm:$0xf] %v2498
      %2531 = vst [vmem:[%s170 + $0x6c] sm:$0xf] %v2499
      %2532 = vst [vmem:[%s170 + $0x70] sm:$0xf] %v2500
      %2533 = vst [vmem:[%s170 + $0x74] sm:$0xf] %v2501
      %2534 = vst [vmem:[%s170 + $0x78] sm:$0xf] %v2502
      %2535 = vst [vmem:[%s170 + $0x7c] sm:$0xf] %v2503
      %p2536 = scmp.lt.s32.totalorder %s14, 1
      %s2537 = scalar_select %p2536, %s14, 1
      %s2538 = smul.addr %s2537, 32
      %s2539 = smul.addr %s2538, 4
      %s2540 = scalar_lea.vmem %s3, %s2539
      // Predicated region
      $region33: #{basic_block_forward.2} parent=31 // pred_check
        %p2541 = pneg %p100
      $region34: #{basic_block_forward.2} parent=31 // pred_check_branch
        %2543 = sbr.rel (%p2541) target = $region36
      $region35: #{basic_block_forward.2} parent=31 // pred_region
        _
      $region36: #{basic_block_forward.2} parent=31 // pred_fallthru
        _
    $region32: #{basic_block_forward.2} parent=5 // pred_fallthru
      _
    %p2544 = scmp.le.s32.totalorder 2, %s9
    // Predicated region
    $region37: #{basic_block_forward.2} parent=5 // pred_check
      %p2545 = pneg %p2544
    $region38: #{basic_block_forward.2} parent=5 // pred_check_branch
      %2547 = sbr.rel (%p2545) target = $region40
    $region39: #{basic_block_forward.2} parent=5 // pred_region
      %s2548 = ssub.s32 %s9, 2
      // Predicated region
      $region41: #{basic_block_forward.2} parent=39 // pred_check
        %p2549 = pneg %p106
      $region42: #{basic_block_forward.2} parent=39 // pred_check_branch
        %2551 = sbr.rel (%p2549) target = $region44
      $region43: #{basic_block_forward.2} parent=39 // pred_region
        %p2552 = scmp.lt.s32.totalorder %s15, 1
        %s2553 = scalar_select %p2552, %s15, 1
        %s2554 = smul.addr %s2553, 32
        %s2555 = smul.addr %s2554, 4
        %s2556 = scalar_lea.vmem %s3, %s2555
      $region44: #{basic_block_forward.2} parent=39 // pred_fallthru
        _
    $region40: #{basic_block_forward.2} parent=5 // pred_fallthru
      _
  $region6: #{basic_block_forward.2} parent=0 // loop_footer
    %s13 = sadd.s32 1, %s9
  $region7: #{basic_block_forward.2} parent=0 // loop_footer_branch
    %8 = sbr.rel target = $region3
  $region8: #{basic_block_forward.2} parent=0 // loop_exit
    _

// kernel: basic_block_forward.3
$region0: #{basic_block_forward.3}
  #allocation0 [shape = 'u32[]', space=smem, size = 0x4, offset = 0x4, fixed_abs, tag = 'smem constant byte address 0x4 - core index']
  #allocation1 [shape = 'u32[72,128]{1,0:T(1,128)}', space=vmem, size = 0x9000, scoped, tag = 'internal scratch']
  %s0 = inlined_call_operand.vmem [shape: bf16[2,18,18,128], index: 0, kind: input, shape index: {}]
  %s1 = inlined_call_operand.vmem [shape: bf16[1152,128], index: 1, kind: input, shape index: {}]
  %s2 = inlined_call_operand.vmem [shape: f32[1,128], index: 2, kind: input, shape index: {}]
  %s3 = inlined_call_operand.vmem [shape: bf16[2,256,128], index: 3, kind: input, shape index: {}]
  %s4 = inlined_call_operand.vmem [shape: f32[2,256,128], index: 4, kind: output, shape index: {}]
  %s5 = sld [smem:[#allocation0]]
  $region49: #{basic_block_forward.3} parent=0
    _
  %s7 = ssub.s32 1, %s5
  %s8 = scalar_select 0, %s7, %s5
  loop: start=0, step=1, limit=4
  $region2: #{basic_block_forward.3} parent=0 // loop_pre_header
    _
  $region3: #{basic_block_forward.3} parent=0 // loop_header
    %s10 = sphi 0, %s14
    %p11 = scmp.ge.s32.totalorder %s10, 4
    %s20 = sphi 0, %s22
    %s23 = sphi 0, %s20
    %s24 = sphi 0, %s23
    %s40 = sphi 0, %s24
    %s44 = sphi 0, %s44
    %s46 = sphi 0, %s44
    %s47 = sphi 0, %s46
    %s61 = sphi 0, %s47
    %s65 = sphi 0, %s65
    %s67 = sphi 0, %s65
    %s68 = sphi 0, %s67
    %s82 = sphi 0, %s68
    %s88 = sphi 0, %s90
    %s91 = sphi 0, %s88
    %s92 = sphi 0, %s91
    %s108 = sphi 0, %s92
    %s114 = sphi 0, %s116
    %s117 = sphi 0, %s114
    %s118 = sphi 0, %s117
    %s134 = sphi 0, %s118
  $region4: #{basic_block_forward.3} parent=0 // loop_header_branch
    %13 = sbr.rel (%p11) target = $region8
  $region5: #{basic_block_forward.3} parent=0 // loop_body
    %s15 = ssub.s32 %s10, 1
    %s16 = ssub.s32 %s10, 2
    %s17 = sadd.s32 %s10, 1
    %s18 = ssub.s32 %s10, %s17
    %p19 = scmp.eq.s32.totalorder %s18, 0
    %s21 = sadd.s32 %s20, 1
    %s22 = scalar_select %p19, %s20, %s21
    %p25 = pneg %p19
    %p26 = scmp.eq.s32.totalorder %s10, 1
    %p27 = por %p25, %p26
    %p28 = scmp.ne.s32.totalorder %s20, %s23
    %p29 = scmp.eq.s32.totalorder %s10, 0
    %p30 = por %p28, %p29
    %p31 = scmp.ne.s32.totalorder %s20, %s23
    %p32 = scmp.eq.s32.totalorder %s15, 1
    %p33 = por %p31, %p32
    %p34 = scmp.ne.s32.totalorder %s23, %s24
    %p35 = scmp.eq.s32.totalorder %s15, 0
    %p36 = por %p34, %p35
    %p37 = scmp.ne.s32.totalorder %s23, %s24
    %p38 = scmp.eq.s32.totalorder %s16, 1
    %p39 = por %p37, %p38
    %p41 = scmp.ne.s32.totalorder %s24, %s40
    %p42 = scmp.eq.s32.totalorder %s16, 0
    %p43 = por %p41, %p42
    %s45 = sadd.s32 %s44, 1
    %p48 = scmp.eq.s32.totalorder %s10, 1
    %p49 = scmp.ne.s32.totalorder %s44, %s46
    %p50 = scmp.eq.s32.totalorder %s10, 0
    %p51 = por %p49, %p50
    %p52 = scmp.ne.s32.totalorder %s44, %s46
    %p53 = scmp.eq.s32.totalorder %s15, 1
    %p54 = por %p52, %p53
    %p55 = scmp.ne.s32.totalorder %s46, %s47
    %p56 = scmp.eq.s32.totalorder %s15, 0
    %p57 = por %p55, %p56
    %p58 = scmp.ne.s32.totalorder %s46, %s47
    %p59 = scmp.eq.s32.totalorder %s16, 1
    %p60 = por %p58, %p59
    %p62 = scmp.ne.s32.totalorder %s47, %s61
    %p63 = scmp.eq.s32.totalorder %s16, 0
    %p64 = por %p62, %p63
    %s66 = sadd.s32 %s65, 1
    %p69 = scmp.eq.s32.totalorder %s10, 1
    %p70 = scmp.ne.s32.totalorder %s65, %s67
    %p71 = scmp.eq.s32.totalorder %s10, 0
    %p72 = por %p70, %p71
    %p73 = scmp.ne.s32.totalorder %s65, %s67
    %p74 = scmp.eq.s32.totalorder %s15, 1
    %p75 = por %p73, %p74
    %p76 = scmp.ne.s32.totalorder %s67, %s68
    %p77 = scmp.eq.s32.totalorder %s15, 0
    %p78 = por %p76, %p77
    %p79 = scmp.ne.s32.totalorder %s67, %s68
    %p80 = scmp.eq.s32.totalorder %s16, 1
    %p81 = por %p79, %p80
    %p83 = scmp.ne.s32.totalorder %s68, %s82
    %p84 = scmp.eq.s32.totalorder %s16, 0
    %p85 = por %p83, %p84
    %s86 = ssub.s32 %s10, %s17
    %p87 = scmp.eq.s32.totalorder %s86, 0
    %s89 = sadd.s32 %s88, 1
    %s90 = scalar_select %p87, %s88, %s89
    %p93 = pneg %p87
    %p94 = scmp.eq.s32.totalorder %s10, 1
    %p95 = por %p93, %p94
    %p96 = scmp.ne.s32.totalorder %s88, %s91
    %p97 = scmp.eq.s32.totalorder %s10, 0
    %p98 = por %p96, %p97
    %p99 = scmp.ne.s32.totalorder %s88, %s91
    %p100 = scmp.eq.s32.totalorder %s15, 1
    %p101 = por %p99, %p100
    %p102 = scmp.ne.s32.totalorder %s91, %s92
    %p103 = scmp.eq.s32.totalorder %s15, 0
    %p104 = por %p102, %p103
    %p105 = scmp.ne.s32.totalorder %s91, %s92
    %p106 = scmp.eq.s32.totalorder %s16, 1
    %p107 = por %p105, %p106
    %p109 = scmp.ne.s32.totalorder %s92, %s108
    %p110 = scmp.eq.s32.totalorder %s16, 0
    %p111 = por %p109, %p110
    %s112 = ssub.s32 %s10, %s17
    %p113 = scmp.eq.s32.totalorder %s112, 0
    %s115 = sadd.s32 %s114, 1
    %s116 = scalar_select %p113, %s114, %s115
    %p119 = pneg %p113
    %p120 = scmp.eq.s32.totalorder %s10, 1
    %p121 = por %p119, %p120
    %p122 = scmp.ne.s32.totalorder %s114, %s117
    %p123 = scmp.eq.s32.totalorder %s10, 0
    %p124 = por %p122, %p123
    %p125 = scmp.ne.s32.totalorder %s114, %s117
    %p126 = scmp.eq.s32.totalorder %s15, 1
    %p127 = por %p125, %p126
    %p128 = scmp.ne.s32.totalorder %s117, %s118
    %p129 = scmp.eq.s32.totalorder %s15, 0
    %p130 = por %p128, %p129
    %p131 = scmp.ne.s32.totalorder %s117, %s118
    %p132 = scmp.eq.s32.totalorder %s16, 1
    %p133 = por %p131, %p132
    %p135 = scmp.ne.s32.totalorder %s118, %s134
    %p136 = scmp.eq.s32.totalorder %s16, 0
    %p137 = por %p135, %p136
    %p138 = scmp.le.s32.totalorder 1, %s10
    %p139 = scmp.lt.s32.totalorder %s10, 3
    %p140 = pnand %p138, %p139
    %p141 = pneg %p140
    // Predicated region
    $region9: #{basic_block_forward.3} parent=5 // pred_check
      _
    $region10: #{basic_block_forward.3} parent=5 // pred_check_branch
      %143 = sbr.rel (%p140) target = $region12
    $region11: #{basic_block_forward.3} parent=5 // pred_region
      %s144 = ssub.s32 %s10, 1
      // Predicated region
      $region13: #{basic_block_forward.3} parent=11 // pred_check
        %p145 = pneg %p57
      $region14: #{basic_block_forward.3} parent=11 // pred_check_branch
        %147 = sbr.rel (%p145) target = $region16
      $region15: #{basic_block_forward.3} parent=11 // pred_region
        _
      $region16: #{basic_block_forward.3} parent=11 // pred_fallthru
        _
      // Predicated region
      $region17: #{basic_block_forward.3} parent=11 // pred_check
        %p148 = pneg %p78
      $region18: #{basic_block_forward.3} parent=11 // pred_check_branch
        %150 = sbr.rel (%p148) target = $region20
      $region19: #{basic_block_forward.3} parent=11 // pred_region
        _
      $region20: #{basic_block_forward.3} parent=11 // pred_fallthru
        _
    $region12: #{basic_block_forward.3} parent=5 // pred_fallthru
      _
    %p151 = scmp.lt.s32.totalorder %s10, 2
    // Predicated region
    $region21: #{basic_block_forward.3} parent=5 // pred_check
      %p152 = pneg %p151
    $region22: #{basic_block_forward.3} parent=5 // pred_check_branch
      %154 = sbr.rel (%p152) target = $region24
    $region23: #{basic_block_forward.3} parent=5 // pred_region
      // Predicated region
      $region25: #{basic_block_forward.3} parent=23 // pred_check
        %p155 = pneg %p30
      $region26: #{basic_block_forward.3} parent=23 // pred_check_branch
        %157 = sbr.rel (%p155) target = $region28
      $region27: #{basic_block_forward.3} parent=23 // pred_region
        %p158 = scmp.lt.s32.totalorder %s10, 1
        %s159 = scalar_select %p158, %s10, 1
        %s160 = smul.addr %s159, 54
        %s161 = smul.addr %s160, 4
        %s162 = scalar_lea.vmem %s0, %s161
      $region28: #{basic_block_forward.3} parent=23 // pred_fallthru
        _
      // Predicated region
      $region29: #{basic_block_forward.3} parent=23 // pred_check
        %p163 = pneg %p98
      $region30: #{basic_block_forward.3} parent=23 // pred_check_branch
        %165 = sbr.rel (%p163) target = $region32
      $region31: #{basic_block_forward.3} parent=23 // pred_region
        %p166 = scmp.lt.s32.totalorder %s10, 1
        %s167 = scalar_select %p166, %s10, 1
        %s168 = smul.addr %s167, 32
        %s169 = smul.addr %s168, 4
        %s170 = scalar_lea.vmem %s3, %s169
      $region32: #{basic_block_forward.3} parent=23 // pred_fallthru
        _
    $region24: #{basic_block_forward.3} parent=5 // pred_fallthru
      _
    %p171 = scmp.le.s32.totalorder 1, %s10
    %p172 = scmp.lt.s32.totalorder %s10, 3
    %p173 = pnand %p171, %p172
    %p174 = pneg %p173
    // Predicated region
    $region33: #{basic_block_forward.3} parent=5 // pred_check
      _
    $region34: #{basic_block_forward.3} parent=5 // pred_check_branch
      %176 = sbr.rel (%p173) target = $region36
    $region35: #{basic_block_forward.3} parent=5 // pred_region
      %s177 = ssub.s32 %s10, 1
      %p178 = scmp.lt.s32.totalorder %s15, 1
      %s179 = scalar_select %p178, %s15, 1
      %s180 = smul.addr %s179, 54
      %s181 = smul.addr %s180, 4
      %s182 = scalar_lea.vmem %s0, %s181
      %p183 = pneg %p36
      %p184 = pneg %p33
      %p185 = pneg %p57
      %p186 = pneg %p54
      %p187 = pneg %p78
      %p188 = pneg %p75
      %p189 = scmp.lt.s32.totalorder %s15, 1
      %s190 = scalar_select %p189, %s15, 1
      %s191 = smul.addr %s190, 32
      %s192 = smul.addr %s191, 4
      %s193 = scalar_lea.vmem %s3, %s192
      %p194 = pneg %p104
      %p195 = pneg %p101
      %p196 = pneg %p130
      %p197 = pneg %p127
      %p198 = scmp.lt.s32.totalorder %s15, 1
      %s199 = scalar_select %p198, %s15, 1
      %s200 = smul.addr %s199, 32
      %s201 = smul.addr %s200, 8
      %s202 = scalar_lea.vmem %s4, %s201
      %p203 = scmp.lt.s32.totalorder %s15, 1
      %s204 = scalar_select %p203, %s15, 1
      %s205 = smul.addr %s204, 54
      %s206 = smul.addr %s205, 4
      %s207 = scalar_lea.vmem %s0, %s206
      %p208 = scmp.lt.s32.totalorder %s15, 1
      %s209 = scalar_select %p208, %s15, 1
      %s210 = smul.addr %s209, 32
      %s211 = smul.addr %s210, 4
      %s212 = scalar_lea.vmem %s3, %s211
      %p213 = scmp.lt.s32.totalorder %s15, 1
      %s214 = scalar_select %p213, %s15, 1
      %s215 = smul.addr %s214, 32
      %s216 = smul.addr %s215, 8
      %s217 = scalar_lea.vmem %s4, %s216
      %v218 = vld [vmem:[%s207] sm:$0xf]
      %v219 = vld [vmem:[%s207 + $0x4] sm:$0xf]
      %v220 = vld [vmem:[%s207 + $0x8] sm:$0x1]
      %v221 = vld [vmem:[%s207 + $0xc] sm:$0xf]
      %v222 = vld [vmem:[%s207 + $0x10] sm:$0xf]
      %v223 = vld [vmem:[%s207 + $0x14] sm:$0x1]
      %v224 = vld [vmem:[%s207 + $0x18] sm:$0xf]
      %v225 = vld [vmem:[%s207 + $0x1c] sm:$0xf]
      %v226 = vld [vmem:[%s207 + $0x20] sm:$0x1]
      %v227 = vld [vmem:[%s207 + $0x24] sm:$0xf]
      %v228 = vld [vmem:[%s207 + $0x28] sm:$0xf]
      %v229 = vld [vmem:[%s207 + $0x2c] sm:$0x1]
      %v230 = vld [vmem:[%s207 + $0x30] sm:$0xf]
      %v231 = vld [vmem:[%s207 + $0x34] sm:$0xf]
      %v232 = vld [vmem:[%s207 + $0x38] sm:$0x1]
      %v233 = vld [vmem:[%s207 + $0x3c] sm:$0xf]
      %v234 = vld [vmem:[%s207 + $0x40] sm:$0xf]
      %v235 = vld [vmem:[%s207 + $0x44] sm:$0x1]
      %v236 = vld [vmem:[%s207 + $0x48] sm:$0xf]
      %v237 = vld [vmem:[%s207 + $0x4c] sm:$0xf]
      %v238 = vld [vmem:[%s207 + $0x50] sm:$0x1]
      %v239 = vld [vmem:[%s207 + $0x54] sm:$0xf]
      %v240 = vld [vmem:[%s207 + $0x58] sm:$0xf]
      %v241 = vld [vmem:[%s207 + $0x5c] sm:$0x1]
      %v242 = vld [vmem:[%s207 + $0x60] sm:$0xf]
      %v243 = vld [vmem:[%s207 + $0x64] sm:$0xf]
      %v244 = vld [vmem:[%s207 + $0x68] sm:$0x1]
      %v245 = vld [vmem:[%s207 + $0x6c] sm:$0xf]
      %v246 = vld [vmem:[%s207 + $0x70] sm:$0xf]
      %v247 = vld [vmem:[%s207 + $0x74] sm:$0x1]
      %v248 = vld [vmem:[%s207 + $0x78] sm:$0xf]
      %v249 = vld [vmem:[%s207 + $0x7c] sm:$0xf]
      %v250 = vld [vmem:[%s207 + $0x80] sm:$0x1]
      %v251 = vld [vmem:[%s207 + $0x84] sm:$0xf]
      %v252 = vld [vmem:[%s207 + $0x88] sm:$0xf]
      %v253 = vld [vmem:[%s207 + $0x8c] sm:$0x1]
      %v254 = vld [vmem:[%s207 + $0x90] sm:$0xf]
      %v255 = vld [vmem:[%s207 + $0x94] sm:$0xf]
      %v256 = vld [vmem:[%s207 + $0x98] sm:$0x1]
      %v257 = vld [vmem:[%s207 + $0x9c] sm:$0xf]
      %v258 = vld [vmem:[%s207 + $0xa0] sm:$0xf]
      %v259 = vld [vmem:[%s207 + $0xa4] sm:$0x1]
      %v260 = vld [vmem:[%s207 + $0xa8] sm:$0xf]
      %v261 = vld [vmem:[%s207 + $0xac] sm:$0xf]
      %v262 = vld [vmem:[%s207 + $0xb0] sm:$0x1]
      %v263 = vld [vmem:[%s207 + $0xb4] sm:$0xf]
      %v264 = vld [vmem:[%s207 + $0xb8] sm:$0xf]
      %v265 = vld [vmem:[%s207 + $0xbc] sm:$0x1]
      %v266 = vld [vmem:[%s207 + $0xc0] sm:$0xf]
      %v267 = vld [vmem:[%s207 + $0xc4] sm:$0xf]
      %v268 = vld [vmem:[%s207 + $0xc8] sm:$0x1]
      %v269 = vld [vmem:[%s207 + $0xcc] sm:$0xf]
      %v270 = vld [vmem:[%s207 + $0xd0] sm:$0xf]
      %v271 = vld [vmem:[%s207 + $0xd4] sm:$0x1]
      %vm272 = vsmask.f32 3328
      %vm273 = vsmask.f32 7440
      %vm274 = vmor %vm272, %vm273
      %v276 = vshrl.u32 %v218, 16
      %v278 = vrot.slane %v276, 4
      %v279 = vshll.u32 %v218, 16
      %v281 = vrot.slane %v279, 5
      %v282 = vor.u32 %v278, %v281
      %v283 = vrot.slane %v282, 4
      %v285 = vshll.u32 %v219, 16
      %v287 = vrot.slane %v285, 5
      %v288 = vsel %vm274, %v283, %v287
      %v289 = vshrl.u32 %v219, 16
      %v291 = vrot.slane %v289, 4
      %v292 = vor.u32 %v291, %v287
      %v293 = vrot.slane %v292, 4
      %v295 = vshll.u32 %v220, 16
      %v297 = vrot.slane %v295, 5
      %v298 = vsel %vm274, %v293, %v297
      %v300 = vshrl.u32 %v221, 16
      %v302 = vrot.slane %v300, 4
      %v303 = vshll.u32 %v221, 16
      %v305 = vrot.slane %v303, 5
      %v306 = vor.u32 %v302, %v305
      %v307 = vrot.slane %v306, 4
      %v309 = vshll.u32 %v222, 16
      %v311 = vrot.slane %v309, 5
      %v312 = vsel %vm274, %v307, %v311
      %v313 = vshrl.u32 %v222, 16
      %v315 = vrot.slane %v313, 4
      %v316 = vor.u32 %v315, %v311
      %v317 = vrot.slane %v316, 4
      %v319 = vshll.u32 %v223, 16
      %v321 = vrot.slane %v319, 5
      %v322 = vsel %vm274, %v317, %v321
      %v324 = vshrl.u32 %v224, 16
      %v326 = vrot.slane %v324, 4
      %v327 = vshll.u32 %v224, 16
      %v329 = vrot.slane %v327, 5
      %v330 = vor.u32 %v326, %v329
      %v331 = vrot.slane %v330, 4
      %v333 = vshll.u32 %v225, 16
      %v335 = vrot.slane %v333, 5
      %v336 = vsel %vm274, %v331, %v335
      %v337 = vshrl.u32 %v225, 16
      %v339 = vrot.slane %v337, 4
      %v340 = vor.u32 %v339, %v335
      %v341 = vrot.slane %v340, 4
      %v343 = vshll.u32 %v226, 16
      %v345 = vrot.slane %v343, 5
      %v346 = vsel %vm274, %v341, %v345
      %v348 = vshrl.u32 %v227, 16
      %v350 = vrot.slane %v348, 4
      %v351 = vshll.u32 %v227, 16
      %v353 = vrot.slane %v351, 5
      %v354 = vor.u32 %v350, %v353
      %v355 = vrot.slane %v354, 4
      %v357 = vshll.u32 %v228, 16
      %v359 = vrot.slane %v357, 5
      %v360 = vsel %vm274, %v355, %v359
      %v361 = vshrl.u32 %v228, 16
      %v363 = vrot.slane %v361, 4
      %v364 = vor.u32 %v363, %v359
      %v365 = vrot.slane %v364, 4
      %v367 = vshll.u32 %v229, 16
      %v369 = vrot.slane %v367, 5
      %v370 = vsel %vm274, %v365, %v369
      %v372 = vshrl.u32 %v230, 16
      %v374 = vrot.slane %v372, 4
      %v375 = vshll.u32 %v230, 16
      %v377 = vrot.slane %v375, 5
      %v378 = vor.u32 %v374, %v377
      %v379 = vrot.slane %v378, 4
      %v381 = vshll.u32 %v231, 16
      %v383 = vrot.slane %v381, 5
      %v384 = vsel %vm274, %v379, %v383
      %v385 = vshrl.u32 %v231, 16
      %v387 = vrot.slane %v385, 4
      %v388 = vor.u32 %v387, %v383
      %v389 = vrot.slane %v388, 4
      %v391 = vshll.u32 %v232, 16
      %v393 = vrot.slane %v391, 5
      %v394 = vsel %vm274, %v389, %v393
      %v396 = vshrl.u32 %v233, 16
      %v398 = vrot.slane %v396, 4
      %v399 = vshll.u32 %v233, 16
      %v401 = vrot.slane %v399, 5
      %v402 = vor.u32 %v398, %v401
      %v403 = vrot.slane %v402, 4
      %v405 = vshll.u32 %v234, 16
      %v407 = vrot.slane %v405, 5
      %v408 = vsel %vm274, %v403, %v407
      %v409 = vshrl.u32 %v234, 16
      %v411 = vrot.slane %v409, 4
      %v412 = vor.u32 %v411, %v407
      %v413 = vrot.slane %v412, 4
      %v415 = vshll.u32 %v235, 16
      %v417 = vrot.slane %v415, 5
      %v418 = vsel %vm274, %v413, %v417
      %v420 = vshrl.u32 %v236, 16
      %v422 = vrot.slane %v420, 4
      %v423 = vshll.u32 %v236, 16
      %v425 = vrot.slane %v423, 5
      %v426 = vor.u32 %v422, %v425
      %v427 = vrot.slane %v426, 4
      %v429 = vshll.u32 %v237, 16
      %v431 = vrot.slane %v429, 5
      %v432 = vsel %vm274, %v427, %v431
      %v433 = vshrl.u32 %v237, 16
      %v435 = vrot.slane %v433, 4
      %v436 = vor.u32 %v435, %v431
      %v437 = vrot.slane %v436, 4
      %v439 = vshll.u32 %v238, 16
      %v441 = vrot.slane %v439, 5
      %v442 = vsel %vm274, %v437, %v441
      %v444 = vshrl.u32 %v239, 16
      %v446 = vrot.slane %v444, 4
      %v447 = vshll.u32 %v239, 16
      %v449 = vrot.slane %v447, 5
      %v450 = vor.u32 %v446, %v449
      %v451 = vrot.slane %v450, 4
      %v453 = vshll.u32 %v240, 16
      %v455 = vrot.slane %v453, 5
      %v456 = vsel %vm274, %v451, %v455
      %v457 = vshrl.u32 %v240, 16
      %v459 = vrot.slane %v457, 4
      %v460 = vor.u32 %v459, %v455
      %v461 = vrot.slane %v460, 4
      %v463 = vshll.u32 %v241, 16
      %v465 = vrot.slane %v463, 5
      %v466 = vsel %vm274, %v461, %v465
      %v468 = vshrl.u32 %v242, 16
      %v470 = vrot.slane %v468, 4
      %v471 = vshll.u32 %v242, 16
      %v473 = vrot.slane %v471, 5
      %v474 = vor.u32 %v470, %v473
      %v475 = vrot.slane %v474, 4
      %v477 = vshll.u32 %v243, 16
      %v479 = vrot.slane %v477, 5
      %v480 = vsel %vm274, %v475, %v479
      %v481 = vshrl.u32 %v243, 16
      %v483 = vrot.slane %v481, 4
      %v484 = vor.u32 %v483, %v479
      %v485 = vrot.slane %v484, 4
      %v487 = vshll.u32 %v244, 16
      %v489 = vrot.slane %v487, 5
      %v490 = vsel %vm274, %v485, %v489
      %v492 = vshrl.u32 %v245, 16
      %v494 = vrot.slane %v492, 4
      %v495 = vshll.u32 %v245, 16
      %v497 = vrot.slane %v495, 5
      %v498 = vor.u32 %v494, %v497
      %v499 = vrot.slane %v498, 4
      %v501 = vshll.u32 %v246, 16
      %v503 = vrot.slane %v501, 5
      %v504 = vsel %vm274, %v499, %v503
      %v505 = vshrl.u32 %v246, 16
      %v507 = vrot.slane %v505, 4
      %v508 = vor.u32 %v507, %v503
      %v509 = vrot.slane %v508, 4
      %v511 = vshll.u32 %v247, 16
      %v513 = vrot.slane %v511, 5
      %v514 = vsel %vm274, %v509, %v513
      %v516 = vshrl.u32 %v248, 16
      %v518 = vrot.slane %v516, 4
      %v519 = vshll.u32 %v248, 16
      %v521 = vrot.slane %v519, 5
      %v522 = vor.u32 %v518, %v521
      %v523 = vrot.slane %v522, 4
      %v525 = vshll.u32 %v249, 16
      %v527 = vrot.slane %v525, 5
      %v528 = vsel %vm274, %v523, %v527
      %v529 = vshrl.u32 %v249, 16
      %v531 = vrot.slane %v529, 4
      %v532 = vor.u32 %v531, %v527
      %v533 = vrot.slane %v532, 4
      %v535 = vshll.u32 %v250, 16
      %v537 = vrot.slane %v535, 5
      %v538 = vsel %vm274, %v533, %v537
      %v540 = vshrl.u32 %v251, 16
      %v542 = vrot.slane %v540, 4
      %v543 = vshll.u32 %v251, 16
      %v545 = vrot.slane %v543, 5
      %v546 = vor.u32 %v542, %v545
      %v547 = vrot.slane %v546, 4
      %v549 = vshll.u32 %v252, 16
      %v551 = vrot.slane %v549, 5
      %v552 = vsel %vm274, %v547, %v551
      %v553 = vshrl.u32 %v252, 16
      %v555 = vrot.slane %v553, 4
      %v556 = vor.u32 %v555, %v551
      %v557 = vrot.slane %v556, 4
      %v559 = vshll.u32 %v253, 16
      %v561 = vrot.slane %v559, 5
      %v562 = vsel %vm274, %v557, %v561
      %v564 = vshrl.u32 %v254, 16
      %v566 = vrot.slane %v564, 4
      %v567 = vshll.u32 %v254, 16
      %v569 = vrot.slane %v567, 5
      %v570 = vor.u32 %v566, %v569
      %v571 = vrot.slane %v570, 4
      %v573 = vshll.u32 %v255, 16
      %v575 = vrot.slane %v573, 5
      %v576 = vsel %vm274, %v571, %v575
      %v577 = vshrl.u32 %v255, 16
      %v579 = vrot.slane %v577, 4
      %v580 = vor.u32 %v579, %v575
      %v581 = vrot.slane %v580, 4
      %v583 = vshll.u32 %v256, 16
      %v585 = vrot.slane %v583, 5
      %v586 = vsel %vm274, %v581, %v585
      %v588 = vshrl.u32 %v257, 16
      %v590 = vrot.slane %v588, 4
      %v591 = vshll.u32 %v257, 16
      %v593 = vrot.slane %v591, 5
      %v594 = vor.u32 %v590, %v593
      %v595 = vrot.slane %v594, 4
      %v597 = vshll.u32 %v258, 16
      %v599 = vrot.slane %v597, 5
      %v600 = vsel %vm274, %v595, %v599
      %v601 = vshrl.u32 %v258, 16
      %v603 = vrot.slane %v601, 4
      %v604 = vor.u32 %v603, %v599
      %v605 = vrot.slane %v604, 4
      %v607 = vshll.u32 %v259, 16
      %v609 = vrot.slane %v607, 5
      %v610 = vsel %vm274, %v605, %v609
      %v612 = vshrl.u32 %v260, 16
      %v614 = vrot.slane %v612, 4
      %v615 = vshll.u32 %v260, 16
      %v617 = vrot.slane %v615, 5
      %v618 = vor.u32 %v614, %v617
      %v619 = vrot.slane %v618, 4
      %v621 = vshll.u32 %v261, 16
      %v623 = vrot.slane %v621, 5
      %v624 = vsel %vm274, %v619, %v623
      %v625 = vshrl.u32 %v261, 16
      %v627 = vrot.slane %v625, 4
      %v628 = vor.u32 %v627, %v623
      %v629 = vrot.slane %v628, 4
      %v631 = vshll.u32 %v262, 16
      %v633 = vrot.slane %v631, 5
      %v634 = vsel %vm274, %v629, %v633
      %v636 = vshrl.u32 %v263, 16
      %v638 = vrot.slane %v636, 4
      %v639 = vshll.u32 %v263, 16
      %v641 = vrot.slane %v639, 5
      %v642 = vor.u32 %v638, %v641
      %v643 = vrot.slane %v642, 4
      %v645 = vshll.u32 %v264, 16
      %v647 = vrot.slane %v645, 5
      %v648 = vsel %vm274, %v643, %v647
      %v649 = vshrl.u32 %v264, 16
      %v651 = vrot.slane %v649, 4
      %v652 = vor.u32 %v651, %v647
      %v653 = vrot.slane %v652, 4
      %v655 = vshll.u32 %v265, 16
      %v657 = vrot.slane %v655, 5
      %v658 = vsel %vm274, %v653, %v657
      %vm707 = vcmask 1042432
      %vm708 = vcmask 1046532
      %vm709 = vmor %vm707, %vm708
      %v710 = vrot.slane %v218, 5
      %v711 = vrot.slane %v710, 4
      %v712 = vrot.slane %v219, 5
      %v713 = vsel %vm709, %v711, %v712
      %v714 = vrot.slane %v712, 4
      %v715 = vrot.slane %v220, 5
      %v716 = vsel %vm709, %v714, %v715
      %v717 = vrot.slane %v221, 5
      %v718 = vrot.slane %v717, 4
      %v719 = vrot.slane %v222, 5
      %v720 = vsel %vm709, %v718, %v719
      %v721 = vrot.slane %v719, 4
      %v722 = vrot.slane %v223, 5
      %v723 = vsel %vm709, %v721, %v722
      %v724 = vrot.slane %v224, 5
      %v725 = vrot.slane %v724, 4
      %v726 = vrot.slane %v225, 5
      %v727 = vsel %vm709, %v725, %v726
      %v728 = vrot.slane %v726, 4
      %v729 = vrot.slane %v226, 5
      %v730 = vsel %vm709, %v728, %v729
      %v731 = vrot.slane %v227, 5
      %v732 = vrot.slane %v731, 4
      %v733 = vrot.slane %v228, 5
      %v734 = vsel %vm709, %v732, %v733
      %v735 = vrot.slane %v733, 4
      %v736 = vrot.slane %v229, 5
      %v737 = vsel %vm709, %v735, %v736
      %v738 = vrot.slane %v230, 5
      %v739 = vrot.slane %v738, 4
      %v740 = vrot.slane %v231, 5
      %v741 = vsel %vm709, %v739, %v740
      %v742 = vrot.slane %v740, 4
      %v743 = vrot.slane %v232, 5
      %v744 = vsel %vm709, %v742, %v743
      %v745 = vrot.slane %v233, 5
      %v746 = vrot.slane %v745, 4
      %v747 = vrot.slane %v234, 5
      %v748 = vsel %vm709, %v746, %v747
      %v749 = vrot.slane %v747, 4
      %v750 = vrot.slane %v235, 5
      %v751 = vsel %vm709, %v749, %v750
      %v752 = vrot.slane %v236, 5
      %v753 = vrot.slane %v752, 4
      %v754 = vrot.slane %v237, 5
      %v755 = vsel %vm709, %v753, %v754
      %v756 = vrot.slane %v754, 4
      %v757 = vrot.slane %v238, 5
      %v758 = vsel %vm709, %v756, %v757
      %v759 = vrot.slane %v239, 5
      %v760 = vrot.slane %v759, 4
      %v761 = vrot.slane %v240, 5
      %v762 = vsel %vm709, %v760, %v761
      %v763 = vrot.slane %v761, 4
      %v764 = vrot.slane %v241, 5
      %v765 = vsel %vm709, %v763, %v764
      %v766 = vrot.slane %v242, 5
      %v767 = vrot.slane %v766, 4
      %v768 = vrot.slane %v243, 5
      %v769 = vsel %vm709, %v767, %v768
      %v770 = vrot.slane %v768, 4
      %v771 = vrot.slane %v244, 5
      %v772 = vsel %vm709, %v770, %v771
      %v773 = vrot.slane %v245, 5
      %v774 = vrot.slane %v773, 4
      %v775 = vrot.slane %v246, 5
      %v776 = vsel %vm709, %v774, %v775
      %v777 = vrot.slane %v775, 4
      %v778 = vrot.slane %v247, 5
      %v779 = vsel %vm709, %v777, %v778
      %v780 = vrot.slane %v248, 5
      %v781 = vrot.slane %v780, 4
      %v782 = vrot.slane %v249, 5
      %v783 = vsel %vm709, %v781, %v782
      %v784 = vrot.slane %v782, 4
      %v785 = vrot.slane %v250, 5
      %v786 = vsel %vm709, %v784, %v785
      %v787 = vrot.slane %v251, 5
      %v788 = vrot.slane %v787, 4
      %v789 = vrot.slane %v252, 5
      %v790 = vsel %vm709, %v788, %v789
      %v791 = vrot.slane %v789, 4
      %v792 = vrot.slane %v253, 5
      %v793 = vsel %vm709, %v791, %v792
      %v794 = vrot.slane %v254, 5
      %v795 = vrot.slane %v794, 4
      %v796 = vrot.slane %v255, 5
      %v797 = vsel %vm709, %v795, %v796
      %v798 = vrot.slane %v796, 4
      %v799 = vrot.slane %v256, 5
      %v800 = vsel %vm709, %v798, %v799
      %v801 = vrot.slane %v257, 5
      %v802 = vrot.slane %v801, 4
      %v803 = vrot.slane %v258, 5
      %v804 = vsel %vm709, %v802, %v803
      %v805 = vrot.slane %v803, 4
      %v806 = vrot.slane %v259, 5
      %v807 = vsel %vm709, %v805, %v806
      %v808 = vrot.slane %v260, 5
      %v809 = vrot.slane %v808, 4
      %v810 = vrot.slane %v261, 5
      %v811 = vsel %vm709, %v809, %v810
      %v812 = vrot.slane %v810, 4
      %v813 = vrot.slane %v262, 5
      %v814 = vsel %vm709, %v812, %v813
      %v815 = vrot.slane %v263, 5
      %v816 = vrot.slane %v815, 4
      %v817 = vrot.slane %v264, 5
      %v818 = vsel %vm709, %v816, %v817
      %v819 = vrot.slane %v817, 4
      %v820 = vrot.slane %v265, 5
      %v821 = vsel %vm709, %v819, %v820
      %v823 = vshrl.u32 %v266, 16
      %v825 = vrot.slane %v823, 4
      %v826 = vshll.u32 %v266, 16
      %v828 = vrot.slane %v826, 5
      %v829 = vor.u32 %v825, %v828
      %v830 = vrot.slane %v829, 4
      %v832 = vshll.u32 %v267, 16
      %v834 = vrot.slane %v832, 5
      %v835 = vsel %vm274, %v830, %v834
      %v836 = vshrl.u32 %v267, 16
      %v838 = vrot.slane %v836, 4
      %v839 = vor.u32 %v838, %v834
      %v840 = vrot.slane %v839, 4
      %v842 = vshll.u32 %v268, 16
      %v844 = vrot.slane %v842, 5
      %v845 = vsel %vm274, %v840, %v844
      %v849 = vrot.slane %v266, 5
      %v850 = vrot.slane %v849, 4
      %v851 = vrot.slane %v267, 5
      %v852 = vsel %vm709, %v850, %v851
      %v853 = vrot.slane %v851, 4
      %v854 = vrot.slane %v268, 5
      %v855 = vsel %vm709, %v853, %v854
      %v857 = vshrl.u32 %v269, 16
      %v859 = vrot.slane %v857, 4
      %v860 = vshll.u32 %v269, 16
      %v862 = vrot.slane %v860, 5
      %v863 = vor.u32 %v859, %v862
      %v864 = vrot.slane %v863, 4
      %v866 = vshll.u32 %v270, 16
      %v868 = vrot.slane %v866, 5
      %v869 = vsel %vm274, %v864, %v868
      %v870 = vshrl.u32 %v270, 16
      %v872 = vrot.slane %v870, 4
      %v873 = vor.u32 %v872, %v868
      %v874 = vrot.slane %v873, 4
      %v876 = vshll.u32 %v271, 16
      %v878 = vrot.slane %v876, 5
      %v879 = vsel %vm274, %v874, %v878
      %v883 = vrot.slane %v269, 5
      %v884 = vrot.slane %v883, 4
      %v885 = vrot.slane %v270, 5
      %v886 = vsel %vm709, %v884, %v885
      %v887 = vrot.slane %v885, 4
      %v888 = vrot.slane %v271, 5
      %v889 = vsel %vm709, %v887, %v888
      %v890 = vunpack.c.l.b16 %v218
      %v891 = vunpack.c.l.b16 %v219
      %v892 = vunpack.c.l.b16 %v221
      %v893 = vunpack.c.l.b16 %v222
      %v894 = vunpack.c.l.b16 %v224
      %v895 = vunpack.c.l.b16 %v225
      %v896 = vunpack.c.l.b16 %v227
      %v897 = vunpack.c.l.b16 %v228
      %v898 = vunpack.c.l.b16 %v230
      %v899 = vunpack.c.l.b16 %v231
      %v900 = vunpack.c.l.b16 %v233
      %v901 = vunpack.c.l.b16 %v234
      %v902 = vunpack.c.l.b16 %v236
      %v903 = vunpack.c.l.b16 %v237
      %v904 = vunpack.c.l.b16 %v239
      %v905 = vunpack.c.l.b16 %v240
      %v906 = vunpack.c.l.b16 %v242
      %v907 = vunpack.c.l.b16 %v243
      %v908 = vunpack.c.l.b16 %v245
      %v909 = vunpack.c.l.b16 %v246
      %v910 = vunpack.c.l.b16 %v248
      %v911 = vunpack.c.l.b16 %v249
      %v912 = vunpack.c.l.b16 %v251
      %v913 = vunpack.c.l.b16 %v252
      %v914 = vunpack.c.l.b16 %v254
      %v915 = vunpack.c.l.b16 %v255
      %v916 = vunpack.c.l.b16 %v257
      %v917 = vunpack.c.l.b16 %v258
      %v918 = vunpack.c.l.b16 %v260
      %v919 = vunpack.c.l.b16 %v261
      %v920 = vunpack.c.l.b16 %v263
      %v921 = vunpack.c.l.b16 %v264
      %v922 = vpack.c.b16 %v891, %v890
      %v923 = vpack.c.b16 %v893, %v892
      %v924 = vpack.c.b16 %v895, %v894
      %v925 = vpack.c.b16 %v897, %v896
      %v926 = vpack.c.b16 %v899, %v898
      %v927 = vpack.c.b16 %v901, %v900
      %v928 = vpack.c.b16 %v903, %v902
      %v929 = vpack.c.b16 %v905, %v904
      %v930 = vpack.c.b16 %v907, %v906
      %v931 = vpack.c.b16 %v909, %v908
      %v932 = vpack.c.b16 %v911, %v910
      %v933 = vpack.c.b16 %v913, %v912
      %v934 = vpack.c.b16 %v915, %v914
      %v935 = vpack.c.b16 %v917, %v916
      %v936 = vpack.c.b16 %v919, %v918
      %v937 = vpack.c.b16 %v921, %v920
      %v954 = vunpack.c.l.b16 %v288
      %v955 = vunpack.c.l.b16 %v298
      %v956 = vunpack.c.l.b16 %v312
      %v957 = vunpack.c.l.b16 %v322
      %v958 = vunpack.c.l.b16 %v336
      %v959 = vunpack.c.l.b16 %v346
      %v960 = vunpack.c.l.b16 %v360
      %v961 = vunpack.c.l.b16 %v370
      %v962 = vunpack.c.l.b16 %v384
      %v963 = vunpack.c.l.b16 %v394
      %v964 = vunpack.c.l.b16 %v408
      %v965 = vunpack.c.l.b16 %v418
      %v966 = vunpack.c.l.b16 %v432
      %v967 = vunpack.c.l.b16 %v442
      %v968 = vunpack.c.l.b16 %v456
      %v969 = vunpack.c.l.b16 %v466
      %v970 = vunpack.c.l.b16 %v480
      %v971 = vunpack.c.l.b16 %v490
      %v972 = vunpack.c.l.b16 %v504
      %v973 = vunpack.c.l.b16 %v514
      %v974 = vunpack.c.l.b16 %v528
      %v975 = vunpack.c.l.b16 %v538
      %v976 = vunpack.c.l.b16 %v552
      %v977 = vunpack.c.l.b16 %v562
      %v978 = vunpack.c.l.b16 %v576
      %v979 = vunpack.c.l.b16 %v586
      %v980 = vunpack.c.l.b16 %v600
      %v981 = vunpack.c.l.b16 %v610
      %v982 = vunpack.c.l.b16 %v624
      %v983 = vunpack.c.l.b16 %v634
      %v984 = vunpack.c.l.b16 %v648
      %v985 = vunpack.c.l.b16 %v658
      %v986 = vpack.c.b16 %v955, %v954
      %v987 = vpack.c.b16 %v957, %v956
      %v988 = vpack.c.b16 %v959, %v958
      %v989 = vpack.c.b16 %v961, %v960
      %v990 = vpack.c.b16 %v963, %v962
      %v991 = vpack.c.b16 %v965, %v964
      %v992 = vpack.c.b16 %v967, %v966
      %v993 = vpack.c.b16 %v969, %v968
      %v994 = vpack.c.b16 %v971, %v970
      %v995 = vpack.c.b16 %v973, %v972
      %v996 = vpack.c.b16 %v975, %v974
      %v997 = vpack.c.b16 %v977, %v976
      %v998 = vpack.c.b16 %v979, %v978
      %v999 = vpack.c.b16 %v981, %v980
      %v1000 = vpack.c.b16 %v983, %v982
      %v1001 = vpack.c.b16 %v985, %v984
      %v1018 = vunpack.c.l.b16 %v713
      %v1019 = vunpack.c.l.b16 %v716
      %v1020 = vunpack.c.l.b16 %v720
      %v1021 = vunpack.c.l.b16 %v723
      %v1022 = vunpack.c.l.b16 %v727
      %v1023 = vunpack.c.l.b16 %v730
      %v1024 = vunpack.c.l.b16 %v734
      %v1025 = vunpack.c.l.b16 %v737
      %v1026 = vunpack.c.l.b16 %v741
      %v1027 = vunpack.c.l.b16 %v744
      %v1028 = vunpack.c.l.b16 %v748
      %v1029 = vunpack.c.l.b16 %v751
      %v1030 = vunpack.c.l.b16 %v755
      %v1031 = vunpack.c.l.b16 %v758
      %v1032 = vunpack.c.l.b16 %v762
      %v1033 = vunpack.c.l.b16 %v765
      %v1034 = vunpack.c.l.b16 %v769
      %v1035 = vunpack.c.l.b16 %v772
      %v1036 = vunpack.c.l.b16 %v776
      %v1037 = vunpack.c.l.b16 %v779
      %v1038 = vunpack.c.l.b16 %v783
      %v1039 = vunpack.c.l.b16 %v786
      %v1040 = vunpack.c.l.b16 %v790
      %v1041 = vunpack.c.l.b16 %v793
      %v1042 = vunpack.c.l.b16 %v797
      %v1043 = vunpack.c.l.b16 %v800
      %v1044 = vunpack.c.l.b16 %v804
      %v1045 = vunpack.c.l.b16 %v807
      %v1046 = vunpack.c.l.b16 %v811
      %v1047 = vunpack.c.l.b16 %v814
      %v1048 = vunpack.c.l.b16 %v818
      %v1049 = vunpack.c.l.b16 %v821
      %v1050 = vpack.c.b16 %v1019, %v1018
      %v1051 = vpack.c.b16 %v1021, %v1020
      %v1052 = vpack.c.b16 %v1023, %v1022
      %v1053 = vpack.c.b16 %v1025, %v1024
      %v1054 = vpack.c.b16 %v1027, %v1026
      %v1055 = vpack.c.b16 %v1029, %v1028
      %v1056 = vpack.c.b16 %v1031, %v1030
      %v1057 = vpack.c.b16 %v1033, %v1032
      %v1058 = vpack.c.b16 %v1035, %v1034
      %v1059 = vpack.c.b16 %v1037, %v1036
      %v1060 = vpack.c.b16 %v1039, %v1038
      %v1061 = vpack.c.b16 %v1041, %v1040
      %v1062 = vpack.c.b16 %v1043, %v1042
      %v1063 = vpack.c.b16 %v1045, %v1044
      %v1064 = vpack.c.b16 %v1047, %v1046
      %v1065 = vpack.c.b16 %v1049, %v1048
      %v1082 = vunpack.c.l.b16 %v266
      %v1083 = vunpack.c.l.b16 %v267
      %v1084 = vpack.c.b16 %v1083, %v1082
      %v1086 = vunpack.c.l.b16 %v835
      %v1087 = vunpack.c.l.b16 %v845
      %v1088 = vpack.c.b16 %v1087, %v1086
      %v1090 = vunpack.c.l.b16 %v852
      %v1091 = vunpack.c.l.b16 %v855
      %v1092 = vpack.c.b16 %v1091, %v1090
      %v1094 = vunpack.c.l.b16 %v269
      %v1095 = vunpack.c.l.b16 %v270
      %v1096 = vpack.c.b16 %v1095, %v1094
      %v1098 = vunpack.c.l.b16 %v869
      %v1099 = vunpack.c.l.b16 %v879
      %v1100 = vpack.c.b16 %v1099, %v1098
      %v1102 = vunpack.c.l.b16 %v886
      %v1103 = vunpack.c.l.b16 %v889
      %v1104 = vpack.c.b16 %v1103, %v1102
      %v1106 = vld [vmem:[%s1] sm:$0xf]
      %v1107 = vld [vmem:[%s1 + $0x4] sm:$0xf]
      %v1108 = vld [vmem:[%s1 + $0x8] sm:$0xf]
      %v1109 = vld [vmem:[%s1 + $0xc] sm:$0xf]
      %v1110 = vld [vmem:[%s1 + $0x10] sm:$0xf]
      %v1111 = vld [vmem:[%s1 + $0x14] sm:$0xf]
      %v1112 = vld [vmem:[%s1 + $0x18] sm:$0xf]
      %v1113 = vld [vmem:[%s1 + $0x1c] sm:$0xf]
      %v1114 = vld [vmem:[%s1 + $0x20] sm:$0xf]
      %v1115 = vld [vmem:[%s1 + $0x24] sm:$0xf]
      %v1116 = vld [vmem:[%s1 + $0x28] sm:$0xf]
      %v1117 = vld [vmem:[%s1 + $0x2c] sm:$0xf]
      %v1118 = vld [vmem:[%s1 + $0x30] sm:$0xf]
      %v1119 = vld [vmem:[%s1 + $0x34] sm:$0xf]
      %v1120 = vld [vmem:[%s1 + $0x38] sm:$0xf]
      %v1121 = vld [vmem:[%s1 + $0x3c] sm:$0xf]
      %v1122 = vld [vmem:[%s1 + $0x40] sm:$0xf]
      %v1123 = vld [vmem:[%s1 + $0x44] sm:$0xf]
      %v1124 = vld [vmem:[%s1 + $0x48] sm:$0xf]
      %v1125 = vld [vmem:[%s1 + $0x4c] sm:$0xf]
      %v1126 = vld [vmem:[%s1 + $0x50] sm:$0xf]
      %v1127 = vld [vmem:[%s1 + $0x54] sm:$0xf]
      %v1128 = vld [vmem:[%s1 + $0x58] sm:$0xf]
      %v1129 = vld [vmem:[%s1 + $0x5c] sm:$0xf]
      %v1130 = vld [vmem:[%s1 + $0x60] sm:$0xf]
      %v1131 = vld [vmem:[%s1 + $0x64] sm:$0xf]
      %v1132 = vld [vmem:[%s1 + $0x68] sm:$0xf]
      %v1133 = vld [vmem:[%s1 + $0x6c] sm:$0xf]
      %v1134 = vld [vmem:[%s1 + $0x70] sm:$0xf]
      %v1135 = vld [vmem:[%s1 + $0x74] sm:$0xf]
      %v1136 = vld [vmem:[%s1 + $0x78] sm:$0xf]
      %v1137 = vld [vmem:[%s1 + $0x7c] sm:$0xf]
      %v1138 = vld [vmem:[%s1 + $0x80] sm:$0xf]
      %v1139 = vld [vmem:[%s1 + $0x84] sm:$0xf]
      %v1140 = vld [vmem:[%s1 + $0x88] sm:$0xf]
      %v1141 = vld [vmem:[%s1 + $0x8c] sm:$0xf]
      %v1142 = vld [vmem:[%s1 + $0x90] sm:$0xf]
      %v1143 = vld [vmem:[%s1 + $0x94] sm:$0xf]
      %v1144 = vld [vmem:[%s1 + $0x98] sm:$0xf]
      %v1145 = vld [vmem:[%s1 + $0x9c] sm:$0xf]
      %v1146 = vld [vmem:[%s1 + $0xa0] sm:$0xf]
      %v1147 = vld [vmem:[%s1 + $0xa4] sm:$0xf]
      %v1148 = vld [vmem:[%s1 + $0xa8] sm:$0xf]
      %v1149 = vld [vmem:[%s1 + $0xac] sm:$0xf]
      %v1150 = vld [vmem:[%s1 + $0xb0] sm:$0xf]
      %v1151 = vld [vmem:[%s1 + $0xb4] sm:$0xf]
      %v1152 = vld [vmem:[%s1 + $0xb8] sm:$0xf]
      %v1153 = vld [vmem:[%s1 + $0xbc] sm:$0xf]
      %v1154 = vld [vmem:[%s1 + $0xc0] sm:$0xf]
      %v1155 = vld [vmem:[%s1 + $0xc4] sm:$0xf]
      %v1156 = vld [vmem:[%s1 + $0xc8] sm:$0xf]
      %v1157 = vld [vmem:[%s1 + $0xcc] sm:$0xf]
      %v1158 = vld [vmem:[%s1 + $0xd0] sm:$0xf]
      %v1159 = vld [vmem:[%s1 + $0xd4] sm:$0xf]
      %v1160 = vld [vmem:[%s1 + $0xd8] sm:$0xf]
      %v1161 = vld [vmem:[%s1 + $0xdc] sm:$0xf]
      %v1162 = vld [vmem:[%s1 + $0xe0] sm:$0xf]
      %v1163 = vld [vmem:[%s1 + $0xe4] sm:$0xf]
      %v1164 = vld [vmem:[%s1 + $0xe8] sm:$0xf]
      %v1165 = vld [vmem:[%s1 + $0xec] sm:$0xf]
      %v1166 = vld [vmem:[%s1 + $0xf0] sm:$0xf]
      %v1167 = vld [vmem:[%s1 + $0xf4] sm:$0xf]
      %v1168 = vld [vmem:[%s1 + $0xf8] sm:$0xf]
      %v1169 = vld [vmem:[%s1 + $0xfc] sm:$0xf]
      %v1170 = vld [vmem:[%s1 + $0x100] sm:$0xf]
      %v1171 = vld [vmem:[%s1 + $0x104] sm:$0xf]
      %v1172 = vld [vmem:[%s1 + $0x108] sm:$0xf]
      %v1173 = vld [vmem:[%s1 + $0x10c] sm:$0xf]
      %v1174 = vld [vmem:[%s1 + $0x110] sm:$0xf]
      %v1175 = vld [vmem:[%s1 + $0x114] sm:$0xf]
      %v1176 = vld [vmem:[%s1 + $0x118] sm:$0xf]
      %v1177 = vld [vmem:[%s1 + $0x11c] sm:$0xf]
      %v1178 = vld [vmem:[%s1 + $0x120] sm:$0xf]
      %v1179 = vld [vmem:[%s1 + $0x124] sm:$0xf]
      %v1180 = vld [vmem:[%s1 + $0x128] sm:$0xf]
      %v1181 = vld [vmem:[%s1 + $0x12c] sm:$0xf]
      %v1182 = vld [vmem:[%s1 + $0x130] sm:$0xf]
      %v1183 = vld [vmem:[%s1 + $0x134] sm:$0xf]
      %v1184 = vld [vmem:[%s1 + $0x138] sm:$0xf]
      %v1185 = vld [vmem:[%s1 + $0x13c] sm:$0xf]
      %v1186 = vld [vmem:[%s1 + $0x140] sm:$0xf]
      %v1187 = vld [vmem:[%s1 + $0x144] sm:$0xf]
      %v1188 = vld [vmem:[%s1 + $0x148] sm:$0xf]
      %v1189 = vld [vmem:[%s1 + $0x14c] sm:$0xf]
      %v1190 = vld [vmem:[%s1 + $0x150] sm:$0xf]
      %v1191 = vld [vmem:[%s1 + $0x154] sm:$0xf]
      %v1192 = vld [vmem:[%s1 + $0x158] sm:$0xf]
      %v1193 = vld [vmem:[%s1 + $0x15c] sm:$0xf]
      %v1194 = vld [vmem:[%s1 + $0x160] sm:$0xf]
      %v1195 = vld [vmem:[%s1 + $0x164] sm:$0xf]
      %v1196 = vld [vmem:[%s1 + $0x168] sm:$0xf]
      %v1197 = vld [vmem:[%s1 + $0x16c] sm:$0xf]
      %v1198 = vld [vmem:[%s1 + $0x170] sm:$0xf]
      %v1199 = vld [vmem:[%s1 + $0x174] sm:$0xf]
      %v1200 = vld [vmem:[%s1 + $0x178] sm:$0xf]
      %v1201 = vld [vmem:[%s1 + $0x17c] sm:$0xf]
      %v1202 = vld [vmem:[%s1 + $0x180] sm:$0xf]
      %v1203 = vld [vmem:[%s1 + $0x184] sm:$0xf]
      %v1204 = vld [vmem:[%s1 + $0x188] sm:$0xf]
      %v1205 = vld [vmem:[%s1 + $0x18c] sm:$0xf]
      %v1206 = vld [vmem:[%s1 + $0x190] sm:$0xf]
      %v1207 = vld [vmem:[%s1 + $0x194] sm:$0xf]
      %v1208 = vld [vmem:[%s1 + $0x198] sm:$0xf]
      %v1209 = vld [vmem:[%s1 + $0x19c] sm:$0xf]
      %v1210 = vld [vmem:[%s1 + $0x1a0] sm:$0xf]
      %v1211 = vld [vmem:[%s1 + $0x1a4] sm:$0xf]
      %v1212 = vld [vmem:[%s1 + $0x1a8] sm:$0xf]
      %v1213 = vld [vmem:[%s1 + $0x1ac] sm:$0xf]
      %v1214 = vld [vmem:[%s1 + $0x1b0] sm:$0xf]
      %v1215 = vld [vmem:[%s1 + $0x1b4] sm:$0xf]
      %v1216 = vld [vmem:[%s1 + $0x1b8] sm:$0xf]
      %v1217 = vld [vmem:[%s1 + $0x1bc] sm:$0xf]
      %v1218 = vld [vmem:[%s1 + $0x1c0] sm:$0xf]
      %v1219 = vld [vmem:[%s1 + $0x1c4] sm:$0xf]
      %v1220 = vld [vmem:[%s1 + $0x1c8] sm:$0xf]
      %v1221 = vld [vmem:[%s1 + $0x1cc] sm:$0xf]
      %v1222 = vld [vmem:[%s1 + $0x1d0] sm:$0xf]
      %v1223 = vld [vmem:[%s1 + $0x1d4] sm:$0xf]
      %v1224 = vld [vmem:[%s1 + $0x1d8] sm:$0xf]
      %v1225 = vld [vmem:[%s1 + $0x1dc] sm:$0xf]
      %v1226 = vld [vmem:[%s1 + $0x1e0] sm:$0xf]
      %v1227 = vld [vmem:[%s1 + $0x1e4] sm:$0xf]
      %v1228 = vld [vmem:[%s1 + $0x1e8] sm:$0xf]
      %v1229 = vld [vmem:[%s1 + $0x1ec] sm:$0xf]
      %v1230 = vld [vmem:[%s1 + $0x1f0] sm:$0xf]
      %v1231 = vld [vmem:[%s1 + $0x1f4] sm:$0xf]
      %v1232 = vld [vmem:[%s1 + $0x1f8] sm:$0xf]
      %v1233 = vld [vmem:[%s1 + $0x1fc] sm:$0xf]
      %v1234 = vld [vmem:[%s1 + $0x200] sm:$0xf]
      %v1235 = vld [vmem:[%s1 + $0x204] sm:$0xf]
      %v1236 = vld [vmem:[%s1 + $0x208] sm:$0xf]
      %v1237 = vld [vmem:[%s1 + $0x20c] sm:$0xf]
      %v1238 = vld [vmem:[%s1 + $0x210] sm:$0xf]
      %v1239 = vld [vmem:[%s1 + $0x214] sm:$0xf]
      %v1240 = vld [vmem:[%s1 + $0x218] sm:$0xf]
      %v1241 = vld [vmem:[%s1 + $0x21c] sm:$0xf]
      %v1242 = vld [vmem:[%s1 + $0x220] sm:$0xf]
      %v1243 = vld [vmem:[%s1 + $0x224] sm:$0xf]
      %v1244 = vld [vmem:[%s1 + $0x228] sm:$0xf]
      %v1245 = vld [vmem:[%s1 + $0x22c] sm:$0xf]
      %v1246 = vld [vmem:[%s1 + $0x230] sm:$0xf]
      %v1247 = vld [vmem:[%s1 + $0x234] sm:$0xf]
      %v1248 = vld [vmem:[%s1 + $0x238] sm:$0xf]
      %v1249 = vld [vmem:[%s1 + $0x23c] sm:$0xf]
      %v1250 = vld [vmem:[%s2] sm:$0x1]
      %v1252 = vperm.slane %v1250, 0
      %v1398 = vunpack.c.l.b16 %v1106
      %v1399 = vunpack.c.l.b16 %v1107
      %v1400 = vunpack.c.l.b16 %v1108
      %v1401 = vunpack.c.l.b16 %v1109
      %v1402 = vunpack.c.l.b16 %v1110
      %v1403 = vunpack.c.l.b16 %v1111
      %v1404 = vunpack.c.l.b16 %v1112
      %v1405 = vunpack.c.l.b16 %v1113
      %v1406 = vunpack.c.l.b16 %v1114
      %v1407 = vunpack.c.l.b16 %v1115
      %v1408 = vunpack.c.l.b16 %v1116
      %v1409 = vunpack.c.l.b16 %v1117
      %v1410 = vunpack.c.l.b16 %v1118
      %v1411 = vunpack.c.l.b16 %v1119
      %v1412 = vunpack.c.l.b16 %v1120
      %v1413 = vunpack.c.l.b16 %v1121
      %v1414 = vunpack.c.l.b16 %v1122
      %v1415 = vunpack.c.l.b16 %v1123
      %v1416 = vunpack.c.l.b16 %v1124
      %v1417 = vunpack.c.l.b16 %v1125
      %v1418 = vunpack.c.l.b16 %v1126
      %v1419 = vunpack.c.l.b16 %v1127
      %v1420 = vunpack.c.l.b16 %v1128
      %v1421 = vunpack.c.l.b16 %v1129
      %v1422 = vunpack.c.l.b16 %v1130
      %v1423 = vunpack.c.l.b16 %v1131
      %v1424 = vunpack.c.l.b16 %v1132
      %v1425 = vunpack.c.l.b16 %v1133
      %v1426 = vunpack.c.l.b16 %v1134
      %v1427 = vunpack.c.l.b16 %v1135
      %v1428 = vunpack.c.l.b16 %v1136
      %v1429 = vunpack.c.l.b16 %v1137
      %v1430 = vunpack.c.l.b16 %v1138
      %v1431 = vunpack.c.l.b16 %v1139
      %v1432 = vunpack.c.l.b16 %v1140
      %v1433 = vunpack.c.l.b16 %v1141
      %v1434 = vunpack.c.l.b16 %v1142
      %v1435 = vunpack.c.l.b16 %v1143
      %v1436 = vunpack.c.l.b16 %v1144
      %v1437 = vunpack.c.l.b16 %v1145
      %v1438 = vunpack.c.l.b16 %v1146
      %v1439 = vunpack.c.l.b16 %v1147
      %v1440 = vunpack.c.l.b16 %v1148
      %v1441 = vunpack.c.l.b16 %v1149
      %v1442 = vunpack.c.l.b16 %v1150
      %v1443 = vunpack.c.l.b16 %v1151
      %v1444 = vunpack.c.l.b16 %v1152
      %v1445 = vunpack.c.l.b16 %v1153
      %v1446 = vunpack.c.l.b16 %v1154
      %v1447 = vunpack.c.l.b16 %v1155
      %v1448 = vunpack.c.l.b16 %v1156
      %v1449 = vunpack.c.l.b16 %v1157
      %v1450 = vunpack.c.l.b16 %v1158
      %v1451 = vunpack.c.l.b16 %v1159
      %v1452 = vunpack.c.l.b16 %v1160
      %v1453 = vunpack.c.l.b16 %v1161
      %v1454 = vunpack.c.l.b16 %v1162
      %v1455 = vunpack.c.l.b16 %v1163
      %v1456 = vunpack.c.l.b16 %v1164
      %v1457 = vunpack.c.l.b16 %v1165
      %v1458 = vunpack.c.l.b16 %v1166
      %v1459 = vunpack.c.l.b16 %v1167
      %v1460 = vunpack.c.l.b16 %v1168
      %v1461 = vunpack.c.l.b16 %v1169
      %v1462 = vunpack.c.l.b16 %v1170
      %v1463 = vunpack.c.l.b16 %v1171
      %v1464 = vunpack.c.l.b16 %v1172
      %v1465 = vunpack.c.l.b16 %v1173
      %v1466 = vunpack.c.l.b16 %v1174
      %v1467 = vunpack.c.l.b16 %v1175
      %v1468 = vunpack.c.l.b16 %v1176
      %v1469 = vunpack.c.l.b16 %v1177
      %v1470 = vunpack.c.l.b16 %v1178
      %v1471 = vunpack.c.l.b16 %v1179
      %v1472 = vunpack.c.l.b16 %v1180
      %v1473 = vunpack.c.l.b16 %v1181
      %v1474 = vunpack.c.l.b16 %v1182
      %v1475 = vunpack.c.l.b16 %v1183
      %v1476 = vunpack.c.l.b16 %v1184
      %v1477 = vunpack.c.l.b16 %v1185
      %v1478 = vunpack.c.l.b16 %v1186
      %v1479 = vunpack.c.l.b16 %v1187
      %v1480 = vunpack.c.l.b16 %v1188
      %v1481 = vunpack.c.l.b16 %v1189
      %v1482 = vunpack.c.l.b16 %v1190
      %v1483 = vunpack.c.l.b16 %v1191
      %v1484 = vunpack.c.l.b16 %v1192
      %v1485 = vunpack.c.l.b16 %v1193
      %v1486 = vunpack.c.l.b16 %v1194
      %v1487 = vunpack.c.l.b16 %v1195
      %v1488 = vunpack.c.l.b16 %v1196
      %v1489 = vunpack.c.l.b16 %v1197
      %v1490 = vunpack.c.l.b16 %v1198
      %v1491 = vunpack.c.l.b16 %v1199
      %v1492 = vunpack.c.l.b16 %v1200
      %v1493 = vunpack.c.l.b16 %v1201
      %v1494 = vunpack.c.l.b16 %v1202
      %v1495 = vunpack.c.l.b16 %v1203
      %v1496 = vunpack.c.l.b16 %v1204
      %v1497 = vunpack.c.l.b16 %v1205
      %v1498 = vunpack.c.l.b16 %v1206
      %v1499 = vunpack.c.l.b16 %v1207
      %v1500 = vunpack.c.l.b16 %v1208
      %v1501 = vunpack.c.l.b16 %v1209
      %v1502 = vunpack.c.l.b16 %v1210
      %v1503 = vunpack.c.l.b16 %v1211
      %v1504 = vunpack.c.l.b16 %v1212
      %v1505 = vunpack.c.l.b16 %v1213
      %v1506 = vunpack.c.l.b16 %v1214
      %v1507 = vunpack.c.l.b16 %v1215
      %v1508 = vunpack.c.l.b16 %v1216
      %v1509 = vunpack.c.l.b16 %v1217
      %v1510 = vunpack.c.l.b16 %v1218
      %v1511 = vunpack.c.l.b16 %v1219
      %v1512 = vunpack.c.l.b16 %v1220
      %v1513 = vunpack.c.l.b16 %v1221
      %v1514 = vunpack.c.l.b16 %v1222
      %v1515 = vunpack.c.l.b16 %v1223
      %v1516 = vunpack.c.l.b16 %v1224
      %v1517 = vunpack.c.l.b16 %v1225
      %v1518 = vunpack.c.l.b16 %v1226
      %v1519 = vunpack.c.l.b16 %v1227
      %v1520 = vunpack.c.l.b16 %v1228
      %v1521 = vunpack.c.l.b16 %v1229
      %v1522 = vunpack.c.l.b16 %v1230
      %v1523 = vunpack.c.l.b16 %v1231
      %v1524 = vunpack.c.l.b16 %v1232
      %v1525 = vunpack.c.l.b16 %v1233
      %v1526 = vunpack.c.l.b16 %v1234
      %v1527 = vunpack.c.l.b16 %v1235
      %v1528 = vunpack.c.l.b16 %v1236
      %v1529 = vunpack.c.l.b16 %v1237
      %v1530 = vunpack.c.l.b16 %v1238
      %v1531 = vunpack.c.l.b16 %v1239
      %v1532 = vunpack.c.l.b16 %v1240
      %v1533 = vunpack.c.l.b16 %v1241
      %v1534 = vunpack.c.l.b16 %v1242
      %v1535 = vunpack.c.l.b16 %v1243
      %v1536 = vunpack.c.l.b16 %v1244
      %v1537 = vunpack.c.l.b16 %v1245
      %v1538 = vunpack.c.l.b16 %v1246
      %v1539 = vunpack.c.l.b16 %v1247
      %v1540 = vunpack.c.l.b16 %v1248
      %v1541 = vunpack.c.l.b16 %v1249
      %v1542 = vpack.c.b16 %v1399, %v1398
      %v1543 = vpack.c.b16 %v1401, %v1400
      %v1544 = vpack.c.b16 %v1403, %v1402
      %v1545 = vpack.c.b16 %v1405, %v1404
      %v1546 = vpack.c.b16 %v1407, %v1406
      %v1547 = vpack.c.b16 %v1409, %v1408
      %v1548 = vpack.c.b16 %v1411, %v1410
      %v1549 = vpack.c.b16 %v1413, %v1412
      %v1550 = vpack.c.b16 %v1415, %v1414
      %v1551 = vpack.c.b16 %v1417, %v1416
      %v1552 = vpack.c.b16 %v1419, %v1418
      %v1553 = vpack.c.b16 %v1421, %v1420
      %v1554 = vpack.c.b16 %v1423, %v1422
      %v1555 = vpack.c.b16 %v1425, %v1424
      %v1556 = vpack.c.b16 %v1427, %v1426
      %v1557 = vpack.c.b16 %v1429, %v1428
      %v1558 = vpack.c.b16 %v1431, %v1430
      %v1559 = vpack.c.b16 %v1433, %v1432
      %v1560 = vpack.c.b16 %v1435, %v1434
      %v1561 = vpack.c.b16 %v1437, %v1436
      %v1562 = vpack.c.b16 %v1439, %v1438
      %v1563 = vpack.c.b16 %v1441, %v1440
      %v1564 = vpack.c.b16 %v1443, %v1442
      %v1565 = vpack.c.b16 %v1445, %v1444
      %v1566 = vpack.c.b16 %v1447, %v1446
      %v1567 = vpack.c.b16 %v1449, %v1448
      %v1568 = vpack.c.b16 %v1451, %v1450
      %v1569 = vpack.c.b16 %v1453, %v1452
      %v1570 = vpack.c.b16 %v1455, %v1454
      %v1571 = vpack.c.b16 %v1457, %v1456
      %v1572 = vpack.c.b16 %v1459, %v1458
      %v1573 = vpack.c.b16 %v1461, %v1460
      %v1574 = vpack.c.b16 %v1463, %v1462
      %v1575 = vpack.c.b16 %v1465, %v1464
      %v1576 = vpack.c.b16 %v1467, %v1466
      %v1577 = vpack.c.b16 %v1469, %v1468
      %v1578 = vpack.c.b16 %v1471, %v1470
      %v1579 = vpack.c.b16 %v1473, %v1472
      %v1580 = vpack.c.b16 %v1475, %v1474
      %v1581 = vpack.c.b16 %v1477, %v1476
      %v1582 = vpack.c.b16 %v1479, %v1478
      %v1583 = vpack.c.b16 %v1481, %v1480
      %v1584 = vpack.c.b16 %v1483, %v1482
      %v1585 = vpack.c.b16 %v1485, %v1484
      %v1586 = vpack.c.b16 %v1487, %v1486
      %v1587 = vpack.c.b16 %v1489, %v1488
      %v1588 = vpack.c.b16 %v1491, %v1490
      %v1589 = vpack.c.b16 %v1493, %v1492
      %v1590 = vpack.c.b16 %v1495, %v1494
      %v1591 = vpack.c.b16 %v1497, %v1496
      %v1592 = vpack.c.b16 %v1499, %v1498
      %v1593 = vpack.c.b16 %v1501, %v1500
      %v1594 = vpack.c.b16 %v1503, %v1502
      %v1595 = vpack.c.b16 %v1505, %v1504
      %v1596 = vpack.c.b16 %v1507, %v1506
      %v1597 = vpack.c.b16 %v1509, %v1508
      %v1598 = vpack.c.b16 %v1511, %v1510
      %v1599 = vpack.c.b16 %v1513, %v1512
      %v1600 = vpack.c.b16 %v1515, %v1514
      %v1601 = vpack.c.b16 %v1517, %v1516
      %v1602 = vpack.c.b16 %v1519, %v1518
      %v1603 = vpack.c.b16 %v1521, %v1520
      %v1604 = vpack.c.b16 %v1523, %v1522
      %v1605 = vpack.c.b16 %v1525, %v1524
      %v1606 = vpack.c.b16 %v1527, %v1526
      %v1607 = vpack.c.b16 %v1529, %v1528
      %v1608 = vpack.c.b16 %v1531, %v1530
      %v1609 = vpack.c.b16 %v1533, %v1532
      %v1610 = vpack.c.b16 %v1535, %v1534
      %v1611 = vpack.c.b16 %v1537, %v1536
      %v1612 = vpack.c.b16 %v1539, %v1538
      %v1613 = vpack.c.b16 %v1541, %v1540
      %1686 = vmatpush.bf16.msra.mxu0 %v1549
      %1687 = vmatpush.bf16.msra.mxu0 %v1548
      %1688 = vmatpush.bf16.msra.mxu0 %v1547
      %1689 = vmatpush.bf16.msra.mxu0 %v1546
      %1690 = vmatpush.bf16.msra.mxu0 %v1545
      %1691 = vmatpush.bf16.msra.mxu0 %v1544
      %1692 = vmatpush.bf16.msra.mxu0 %v1543
      %1693 = vmatpush.bf16.msra.mxu0 %v1542
      %1694 = vmatmul.bf16.gmra.mxu0 %v922
      %v1695 = vpop.f32.mrf.mxu0
      %v1696 = vadd.f32 %v1252, %v1695
      %v1697 = vpop.f32.mrf.mxu0
      %v1698 = vadd.f32 %v1252, %v1697
      %1699 = vmatmul.bf16.gmra.mxu0 %v923
      %v1700 = vpop.f32.mrf.mxu0
      %v1701 = vadd.f32 %v1252, %v1700
      %v1702 = vpop.f32.mrf.mxu0
      %v1703 = vadd.f32 %v1252, %v1702
      %1704 = vmatmul.bf16.gmra.mxu0 %v924
      %v1705 = vpop.f32.mrf.mxu0
      %v1706 = vadd.f32 %v1252, %v1705
      %v1707 = vpop.f32.mrf.mxu0
      %v1708 = vadd.f32 %v1252, %v1707
      %1709 = vmatmul.bf16.gmra.mxu0 %v925
      %v1710 = vpop.f32.mrf.mxu0
      %v1711 = vadd.f32 %v1252, %v1710
      %v1712 = vpop.f32.mrf.mxu0
      %v1713 = vadd.f32 %v1252, %v1712
      %1714 = vmatmul.bf16.gmra.mxu0 %v926
      %v1715 = vpop.f32.mrf.mxu0
      %v1716 = vadd.f32 %v1252, %v1715
      %v1717 = vpop.f32.mrf.mxu0
      %v1718 = vadd.f32 %v1252, %v1717
      %1719 = vmatmul.bf16.gmra.mxu0 %v927
      %v1720 = vpop.f32.mrf.mxu0
      %v1721 = vadd.f32 %v1252, %v1720
      %v1722 = vpop.f32.mrf.mxu0
      %v1723 = vadd.f32 %v1252, %v1722
      %1724 = vmatmul.bf16.gmra.mxu0 %v928
      %v1725 = vpop.f32.mrf.mxu0
      %v1726 = vadd.f32 %v1252, %v1725
      %v1727 = vpop.f32.mrf.mxu0
      %v1728 = vadd.f32 %v1252, %v1727
      %1729 = vmatmul.bf16.gmra.mxu0 %v929
      %v1730 = vpop.f32.mrf.mxu0
      %v1731 = vadd.f32 %v1252, %v1730
      %v1732 = vpop.f32.mrf.mxu0
      %v1733 = vadd.f32 %v1252, %v1732
      %1734 = vmatmul.bf16.gmra.mxu0 %v930
      %v1735 = vpop.f32.mrf.mxu0
      %v1736 = vadd.f32 %v1252, %v1735
      %v1737 = vpop.f32.mrf.mxu0
      %v1738 = vadd.f32 %v1252, %v1737
      %1739 = vmatmul.bf16.gmra.mxu0 %v931
      %v1740 = vpop.f32.mrf.mxu0
      %v1741 = vadd.f32 %v1252, %v1740
      %v1742 = vpop.f32.mrf.mxu0
      %v1743 = vadd.f32 %v1252, %v1742
      %1744 = vmatmul.bf16.gmra.mxu0 %v932
      %v1745 = vpop.f32.mrf.mxu0
      %v1746 = vadd.f32 %v1252, %v1745
      %v1747 = vpop.f32.mrf.mxu0
      %v1748 = vadd.f32 %v1252, %v1747
      %1749 = vmatmul.bf16.gmra.mxu0 %v933
      %v1750 = vpop.f32.mrf.mxu0
      %v1751 = vadd.f32 %v1252, %v1750
      %v1752 = vpop.f32.mrf.mxu0
      %v1753 = vadd.f32 %v1252, %v1752
      %1754 = vmatmul.bf16.gmra.mxu0 %v934
      %v1755 = vpop.f32.mrf.mxu0
      %v1756 = vadd.f32 %v1252, %v1755
      %v1757 = vpop.f32.mrf.mxu0
      %v1758 = vadd.f32 %v1252, %v1757
      %1759 = vmatmul.bf16.gmra.mxu0 %v935
      %v1760 = vpop.f32.mrf.mxu0
      %v1761 = vadd.f32 %v1252, %v1760
      %v1762 = vpop.f32.mrf.mxu0
      %v1763 = vadd.f32 %v1252, %v1762
      %1764 = vmatmul.bf16.gmra.mxu0 %v936
      %v1765 = vpop.f32.mrf.mxu0
      %v1766 = vadd.f32 %v1252, %v1765
      %v1767 = vpop.f32.mrf.mxu0
      %v1768 = vadd.f32 %v1252, %v1767
      %1769 = vmatmul.bf16.gmra.mxu0 %v937
      %v1770 = vpop.f32.mrf.mxu0
      %v1771 = vadd.f32 %v1252, %v1770
      %v1772 = vpop.f32.mrf.mxu0
      %v1773 = vadd.f32 %v1252, %v1772
      %1774 = vdwg.mxu0
      %1775 = vmatpush.bf16.msra.mxu0 %v1557
      %1776 = vmatpush.bf16.msra.mxu0 %v1556
      %1777 = vmatpush.bf16.msra.mxu0 %v1555
      %1778 = vmatpush.bf16.msra.mxu0 %v1554
      %1779 = vmatpush.bf16.msra.mxu0 %v1553
      %1780 = vmatpush.bf16.msra.mxu0 %v1552
      %1781 = vmatpush.bf16.msra.mxu0 %v1551
      %1782 = vmatpush.bf16.msra.mxu0 %v1550
      %1783 = vmatmul.bf16.gmra.mxu0 %v986
      %v1784 = vpop.f32.mrf.mxu0
      %v1785 = vadd.f32 %v1696, %v1784
      %v1786 = vpop.f32.mrf.mxu0
      %v1787 = vadd.f32 %v1698, %v1786
      %1788 = vmatmul.bf16.gmra.mxu0 %v987
      %v1789 = vpop.f32.mrf.mxu0
      %v1790 = vadd.f32 %v1701, %v1789
      %v1791 = vpop.f32.mrf.mxu0
      %v1792 = vadd.f32 %v1703, %v1791
      %1793 = vmatmul.bf16.gmra.mxu0 %v988
      %v1794 = vpop.f32.mrf.mxu0
      %v1795 = vadd.f32 %v1706, %v1794
      %v1796 = vpop.f32.mrf.mxu0
      %v1797 = vadd.f32 %v1708, %v1796
      %1798 = vmatmul.bf16.gmra.mxu0 %v989
      %v1799 = vpop.f32.mrf.mxu0
      %v1800 = vadd.f32 %v1711, %v1799
      %v1801 = vpop.f32.mrf.mxu0
      %v1802 = vadd.f32 %v1713, %v1801
      %1803 = vmatmul.bf16.gmra.mxu0 %v990
      %v1804 = vpop.f32.mrf.mxu0
      %v1805 = vadd.f32 %v1716, %v1804
      %v1806 = vpop.f32.mrf.mxu0
      %v1807 = vadd.f32 %v1718, %v1806
      %1808 = vmatmul.bf16.gmra.mxu0 %v991
      %v1809 = vpop.f32.mrf.mxu0
      %v1810 = vadd.f32 %v1721, %v1809
      %v1811 = vpop.f32.mrf.mxu0
      %v1812 = vadd.f32 %v1723, %v1811
      %1813 = vmatmul.bf16.gmra.mxu0 %v992
      %v1814 = vpop.f32.mrf.mxu0
      %v1815 = vadd.f32 %v1726, %v1814
      %v1816 = vpop.f32.mrf.mxu0
      %v1817 = vadd.f32 %v1728, %v1816
      %1818 = vmatmul.bf16.gmra.mxu0 %v993
      %v1819 = vpop.f32.mrf.mxu0
      %v1820 = vadd.f32 %v1731, %v1819
      %v1821 = vpop.f32.mrf.mxu0
      %v1822 = vadd.f32 %v1733, %v1821
      %1823 = vmatmul.bf16.gmra.mxu0 %v994
      %v1824 = vpop.f32.mrf.mxu0
      %v1825 = vadd.f32 %v1736, %v1824
      %v1826 = vpop.f32.mrf.mxu0
      %v1827 = vadd.f32 %v1738, %v1826
      %1828 = vmatmul.bf16.gmra.mxu0 %v995
      %v1829 = vpop.f32.mrf.mxu0
      %v1830 = vadd.f32 %v1741, %v1829
      %v1831 = vpop.f32.mrf.mxu0
      %v1832 = vadd.f32 %v1743, %v1831
      %1833 = vmatmul.bf16.gmra.mxu0 %v996
      %v1834 = vpop.f32.mrf.mxu0
      %v1835 = vadd.f32 %v1746, %v1834
      %v1836 = vpop.f32.mrf.mxu0
      %v1837 = vadd.f32 %v1748, %v1836
      %1838 = vmatmul.bf16.gmra.mxu0 %v997
      %v1839 = vpop.f32.mrf.mxu0
      %v1840 = vadd.f32 %v1751, %v1839
      %v1841 = vpop.f32.mrf.mxu0
      %v1842 = vadd.f32 %v1753, %v1841
      %1843 = vmatmul.bf16.gmra.mxu0 %v998
      %v1844 = vpop.f32.mrf.mxu0
      %v1845 = vadd.f32 %v1756, %v1844
      %v1846 = vpop.f32.mrf.mxu0
      %v1847 = vadd.f32 %v1758, %v1846
      %1848 = vmatmul.bf16.gmra.mxu0 %v999
      %v1849 = vpop.f32.mrf.mxu0
      %v1850 = vadd.f32 %v1761, %v1849
      %v1851 = vpop.f32.mrf.mxu0
      %v1852 = vadd.f32 %v1763, %v1851
      %1853 = vmatmul.bf16.gmra.mxu0 %v1000
      %v1854 = vpop.f32.mrf.mxu0
      %v1855 = vadd.f32 %v1766, %v1854
      %v1856 = vpop.f32.mrf.mxu0
      %v1857 = vadd.f32 %v1768, %v1856
      %1858 = vmatmul.bf16.gmra.mxu0 %v1001
      %v1859 = vpop.f32.mrf.mxu0
      %v1860 = vadd.f32 %v1771, %v1859
      %v1861 = vpop.f32.mrf.mxu0
      %v1862 = vadd.f32 %v1773, %v1861
      %1863 = vdwg.mxu0
      %1864 = vmatpush.bf16.msra.mxu0 %v1565
      %1865 = vmatpush.bf16.msra.mxu0 %v1564
      %1866 = vmatpush.bf16.msra.mxu0 %v1563
      %1867 = vmatpush.bf16.msra.mxu0 %v1562
      %1868 = vmatpush.bf16.msra.mxu0 %v1561
      %1869 = vmatpush.bf16.msra.mxu0 %v1560
      %1870 = vmatpush.bf16.msra.mxu0 %v1559
      %1871 = vmatpush.bf16.msra.mxu0 %v1558
      %1872 = vmatmul.bf16.gmra.mxu0 %v1050
      %v1873 = vpop.f32.mrf.mxu0
      %v1874 = vadd.f32 %v1785, %v1873
      %v1875 = vpop.f32.mrf.mxu0
      %v1876 = vadd.f32 %v1787, %v1875
      %1877 = vmatmul.bf16.gmra.mxu0 %v1051
      %v1878 = vpop.f32.mrf.mxu0
      %v1879 = vadd.f32 %v1790, %v1878
      %v1880 = vpop.f32.mrf.mxu0
      %v1881 = vadd.f32 %v1792, %v1880
      %1882 = vmatmul.bf16.gmra.mxu0 %v1052
      %v1883 = vpop.f32.mrf.mxu0
      %v1884 = vadd.f32 %v1795, %v1883
      %v1885 = vpop.f32.mrf.mxu0
      %v1886 = vadd.f32 %v1797, %v1885
      %1887 = vmatmul.bf16.gmra.mxu0 %v1053
      %v1888 = vpop.f32.mrf.mxu0
      %v1889 = vadd.f32 %v1800, %v1888
      %v1890 = vpop.f32.mrf.mxu0
      %v1891 = vadd.f32 %v1802, %v1890
      %1892 = vmatmul.bf16.gmra.mxu0 %v1054
      %v1893 = vpop.f32.mrf.mxu0
      %v1894 = vadd.f32 %v1805, %v1893
      %v1895 = vpop.f32.mrf.mxu0
      %v1896 = vadd.f32 %v1807, %v1895
      %1897 = vmatmul.bf16.gmra.mxu0 %v1055
      %v1898 = vpop.f32.mrf.mxu0
      %v1899 = vadd.f32 %v1810, %v1898
      %v1900 = vpop.f32.mrf.mxu0
      %v1901 = vadd.f32 %v1812, %v1900
      %1902 = vmatmul.bf16.gmra.mxu0 %v1056
      %v1903 = vpop.f32.mrf.mxu0
      %v1904 = vadd.f32 %v1815, %v1903
      %v1905 = vpop.f32.mrf.mxu0
      %v1906 = vadd.f32 %v1817, %v1905
      %1907 = vmatmul.bf16.gmra.mxu0 %v1057
      %v1908 = vpop.f32.mrf.mxu0
      %v1909 = vadd.f32 %v1820, %v1908
      %v1910 = vpop.f32.mrf.mxu0
      %v1911 = vadd.f32 %v1822, %v1910
      %1912 = vmatmul.bf16.gmra.mxu0 %v1058
      %v1913 = vpop.f32.mrf.mxu0
      %v1914 = vadd.f32 %v1825, %v1913
      %v1915 = vpop.f32.mrf.mxu0
      %v1916 = vadd.f32 %v1827, %v1915
      %1917 = vmatmul.bf16.gmra.mxu0 %v1059
      %v1918 = vpop.f32.mrf.mxu0
      %v1919 = vadd.f32 %v1830, %v1918
      %v1920 = vpop.f32.mrf.mxu0
      %v1921 = vadd.f32 %v1832, %v1920
      %1922 = vmatmul.bf16.gmra.mxu0 %v1060
      %v1923 = vpop.f32.mrf.mxu0
      %v1924 = vadd.f32 %v1835, %v1923
      %v1925 = vpop.f32.mrf.mxu0
      %v1926 = vadd.f32 %v1837, %v1925
      %1927 = vmatmul.bf16.gmra.mxu0 %v1061
      %v1928 = vpop.f32.mrf.mxu0
      %v1929 = vadd.f32 %v1840, %v1928
      %v1930 = vpop.f32.mrf.mxu0
      %v1931 = vadd.f32 %v1842, %v1930
      %1932 = vmatmul.bf16.gmra.mxu0 %v1062
      %v1933 = vpop.f32.mrf.mxu0
      %v1934 = vadd.f32 %v1845, %v1933
      %v1935 = vpop.f32.mrf.mxu0
      %v1936 = vadd.f32 %v1847, %v1935
      %1937 = vmatmul.bf16.gmra.mxu0 %v1063
      %v1938 = vpop.f32.mrf.mxu0
      %v1939 = vadd.f32 %v1850, %v1938
      %v1940 = vpop.f32.mrf.mxu0
      %v1941 = vadd.f32 %v1852, %v1940
      %1942 = vmatmul.bf16.gmra.mxu0 %v1064
      %v1943 = vpop.f32.mrf.mxu0
      %v1944 = vadd.f32 %v1855, %v1943
      %v1945 = vpop.f32.mrf.mxu0
      %v1946 = vadd.f32 %v1857, %v1945
      %1947 = vmatmul.bf16.gmra.mxu0 %v1065
      %v1948 = vpop.f32.mrf.mxu0
      %v1949 = vadd.f32 %v1860, %v1948
      %v1950 = vpop.f32.mrf.mxu0
      %v1951 = vadd.f32 %v1862, %v1950
      %1952 = vdwg.mxu0
      %1953 = vmatpush.bf16.msra.mxu0 %v1573
      %1954 = vmatpush.bf16.msra.mxu0 %v1572
      %1955 = vmatpush.bf16.msra.mxu0 %v1571
      %1956 = vmatpush.bf16.msra.mxu0 %v1570
      %1957 = vmatpush.bf16.msra.mxu0 %v1569
      %1958 = vmatpush.bf16.msra.mxu0 %v1568
      %1959 = vmatpush.bf16.msra.mxu0 %v1567
      %1960 = vmatpush.bf16.msra.mxu0 %v1566
      %1961 = vmatmul.bf16.gmra.mxu0 %v923
      %v1962 = vpop.f32.mrf.mxu0
      %v1963 = vadd.f32 %v1874, %v1962
      %v1964 = vpop.f32.mrf.mxu0
      %v1965 = vadd.f32 %v1876, %v1964
      %1966 = vmatmul.bf16.gmra.mxu0 %v924
      %v1967 = vpop.f32.mrf.mxu0
      %v1968 = vadd.f32 %v1879, %v1967
      %v1969 = vpop.f32.mrf.mxu0
      %v1970 = vadd.f32 %v1881, %v1969
      %1971 = vmatmul.bf16.gmra.mxu0 %v925
      %v1972 = vpop.f32.mrf.mxu0
      %v1973 = vadd.f32 %v1884, %v1972
      %v1974 = vpop.f32.mrf.mxu0
      %v1975 = vadd.f32 %v1886, %v1974
      %1976 = vmatmul.bf16.gmra.mxu0 %v926
      %v1977 = vpop.f32.mrf.mxu0
      %v1978 = vadd.f32 %v1889, %v1977
      %v1979 = vpop.f32.mrf.mxu0
      %v1980 = vadd.f32 %v1891, %v1979
      %1981 = vmatmul.bf16.gmra.mxu0 %v927
      %v1982 = vpop.f32.mrf.mxu0
      %v1983 = vadd.f32 %v1894, %v1982
      %v1984 = vpop.f32.mrf.mxu0
      %v1985 = vadd.f32 %v1896, %v1984
      %1986 = vmatmul.bf16.gmra.mxu0 %v928
      %v1987 = vpop.f32.mrf.mxu0
      %v1988 = vadd.f32 %v1899, %v1987
      %v1989 = vpop.f32.mrf.mxu0
      %v1990 = vadd.f32 %v1901, %v1989
      %1991 = vmatmul.bf16.gmra.mxu0 %v929
      %v1992 = vpop.f32.mrf.mxu0
      %v1993 = vadd.f32 %v1904, %v1992
      %v1994 = vpop.f32.mrf.mxu0
      %v1995 = vadd.f32 %v1906, %v1994
      %1996 = vmatmul.bf16.gmra.mxu0 %v930
      %v1997 = vpop.f32.mrf.mxu0
      %v1998 = vadd.f32 %v1909, %v1997
      %v1999 = vpop.f32.mrf.mxu0
      %v2000 = vadd.f32 %v1911, %v1999
      %2001 = vmatmul.bf16.gmra.mxu0 %v931
      %v2002 = vpop.f32.mrf.mxu0
      %v2003 = vadd.f32 %v1914, %v2002
      %v2004 = vpop.f32.mrf.mxu0
      %v2005 = vadd.f32 %v1916, %v2004
      %2006 = vmatmul.bf16.gmra.mxu0 %v932
      %v2007 = vpop.f32.mrf.mxu0
      %v2008 = vadd.f32 %v1919, %v2007
      %v2009 = vpop.f32.mrf.mxu0
      %v2010 = vadd.f32 %v1921, %v2009
      %2011 = vmatmul.bf16.gmra.mxu0 %v933
      %v2012 = vpop.f32.mrf.mxu0
      %v2013 = vadd.f32 %v1924, %v2012
      %v2014 = vpop.f32.mrf.mxu0
      %v2015 = vadd.f32 %v1926, %v2014
      %2016 = vmatmul.bf16.gmra.mxu0 %v934
      %v2017 = vpop.f32.mrf.mxu0
      %v2018 = vadd.f32 %v1929, %v2017
      %v2019 = vpop.f32.mrf.mxu0
      %v2020 = vadd.f32 %v1931, %v2019
      %2021 = vmatmul.bf16.gmra.mxu0 %v935
      %v2022 = vpop.f32.mrf.mxu0
      %v2023 = vadd.f32 %v1934, %v2022
      %v2024 = vpop.f32.mrf.mxu0
      %v2025 = vadd.f32 %v1936, %v2024
      %2026 = vmatmul.bf16.gmra.mxu0 %v936
      %v2027 = vpop.f32.mrf.mxu0
      %v2028 = vadd.f32 %v1939, %v2027
      %v2029 = vpop.f32.mrf.mxu0
      %v2030 = vadd.f32 %v1941, %v2029
      %2031 = vmatmul.bf16.gmra.mxu0 %v937
      %v2032 = vpop.f32.mrf.mxu0
      %v2033 = vadd.f32 %v1944, %v2032
      %v2034 = vpop.f32.mrf.mxu0
      %v2035 = vadd.f32 %v1946, %v2034
      %2036 = vmatmul.bf16.gmra.mxu0 %v1084
      %v2037 = vpop.f32.mrf.mxu0
      %v2038 = vadd.f32 %v1949, %v2037
      %v2039 = vpop.f32.mrf.mxu0
      %v2040 = vadd.f32 %v1951, %v2039
      %2041 = vdwg.mxu0
      %2042 = vmatpush.bf16.msra.mxu0 %v1581
      %2043 = vmatpush.bf16.msra.mxu0 %v1580
      %2044 = vmatpush.bf16.msra.mxu0 %v1579
      %2045 = vmatpush.bf16.msra.mxu0 %v1578
      %2046 = vmatpush.bf16.msra.mxu0 %v1577
      %2047 = vmatpush.bf16.msra.mxu0 %v1576
      %2048 = vmatpush.bf16.msra.mxu0 %v1575
      %2049 = vmatpush.bf16.msra.mxu0 %v1574
      %2050 = vmatmul.bf16.gmra.mxu0 %v987
      %v2051 = vpop.f32.mrf.mxu0
      %v2052 = vadd.f32 %v1963, %v2051
      %v2053 = vpop.f32.mrf.mxu0
      %v2054 = vadd.f32 %v1965, %v2053
      %2055 = vmatmul.bf16.gmra.mxu0 %v988
      %v2056 = vpop.f32.mrf.mxu0
      %v2057 = vadd.f32 %v1968, %v2056
      %v2058 = vpop.f32.mrf.mxu0
      %v2059 = vadd.f32 %v1970, %v2058
      %2060 = vmatmul.bf16.gmra.mxu0 %v989
      %v2061 = vpop.f32.mrf.mxu0
      %v2062 = vadd.f32 %v1973, %v2061
      %v2063 = vpop.f32.mrf.mxu0
      %v2064 = vadd.f32 %v1975, %v2063
      %2065 = vmatmul.bf16.gmra.mxu0 %v990
      %v2066 = vpop.f32.mrf.mxu0
      %v2067 = vadd.f32 %v1978, %v2066
      %v2068 = vpop.f32.mrf.mxu0
      %v2069 = vadd.f32 %v1980, %v2068
      %2070 = vmatmul.bf16.gmra.mxu0 %v991
      %v2071 = vpop.f32.mrf.mxu0
      %v2072 = vadd.f32 %v1983, %v2071
      %v2073 = vpop.f32.mrf.mxu0
      %v2074 = vadd.f32 %v1985, %v2073
      %2075 = vmatmul.bf16.gmra.mxu0 %v992
      %v2076 = vpop.f32.mrf.mxu0
      %v2077 = vadd.f32 %v1988, %v2076
      %v2078 = vpop.f32.mrf.mxu0
      %v2079 = vadd.f32 %v1990, %v2078
      %2080 = vmatmul.bf16.gmra.mxu0 %v993
      %v2081 = vpop.f32.mrf.mxu0
      %v2082 = vadd.f32 %v1993, %v2081
      %v2083 = vpop.f32.mrf.mxu0
      %v2084 = vadd.f32 %v1995, %v2083
      %2085 = vmatmul.bf16.gmra.mxu0 %v994
      %v2086 = vpop.f32.mrf.mxu0
      %v2087 = vadd.f32 %v1998, %v2086
      %v2088 = vpop.f32.mrf.mxu0
      %v2089 = vadd.f32 %v2000, %v2088
      %2090 = vmatmul.bf16.gmra.mxu0 %v995
      %v2091 = vpop.f32.mrf.mxu0
      %v2092 = vadd.f32 %v2003, %v2091
      %v2093 = vpop.f32.mrf.mxu0
      %v2094 = vadd.f32 %v2005, %v2093
      %2095 = vmatmul.bf16.gmra.mxu0 %v996
      %v2096 = vpop.f32.mrf.mxu0
      %v2097 = vadd.f32 %v2008, %v2096
      %v2098 = vpop.f32.mrf.mxu0
      %v2099 = vadd.f32 %v2010, %v2098
      %2100 = vmatmul.bf16.gmra.mxu0 %v997
      %v2101 = vpop.f32.mrf.mxu0
      %v2102 = vadd.f32 %v2013, %v2101
      %v2103 = vpop.f32.mrf.mxu0
      %v2104 = vadd.f32 %v2015, %v2103
      %2105 = vmatmul.bf16.gmra.mxu0 %v998
      %v2106 = vpop.f32.mrf.mxu0
      %v2107 = vadd.f32 %v2018, %v2106
      %v2108 = vpop.f32.mrf.mxu0
      %v2109 = vadd.f32 %v2020, %v2108
      %2110 = vmatmul.bf16.gmra.mxu0 %v999
      %v2111 = vpop.f32.mrf.mxu0
      %v2112 = vadd.f32 %v2023, %v2111
      %v2113 = vpop.f32.mrf.mxu0
      %v2114 = vadd.f32 %v2025, %v2113
      %2115 = vmatmul.bf16.gmra.mxu0 %v1000
      %v2116 = vpop.f32.mrf.mxu0
      %v2117 = vadd.f32 %v2028, %v2116
      %v2118 = vpop.f32.mrf.mxu0
      %v2119 = vadd.f32 %v2030, %v2118
      %2120 = vmatmul.bf16.gmra.mxu0 %v1001
      %v2121 = vpop.f32.mrf.mxu0
      %v2122 = vadd.f32 %v2033, %v2121
      %v2123 = vpop.f32.mrf.mxu0
      %v2124 = vadd.f32 %v2035, %v2123
      %2125 = vmatmul.bf16.gmra.mxu0 %v1088
      %v2126 = vpop.f32.mrf.mxu0
      %v2127 = vadd.f32 %v2038, %v2126
      %v2128 = vpop.f32.mrf.mxu0
      %v2129 = vadd.f32 %v2040, %v2128
      %2130 = vdwg.mxu0
      %2131 = vmatpush.bf16.msra.mxu0 %v1589
      %2132 = vmatpush.bf16.msra.mxu0 %v1588
      %2133 = vmatpush.bf16.msra.mxu0 %v1587
      %2134 = vmatpush.bf16.msra.mxu0 %v1586
      %2135 = vmatpush.bf16.msra.mxu0 %v1585
      %2136 = vmatpush.bf16.msra.mxu0 %v1584
      %2137 = vmatpush.bf16.msra.mxu0 %v1583
      %2138 = vmatpush.bf16.msra.mxu0 %v1582
      %2139 = vmatmul.bf16.gmra.mxu0 %v1051
      %v2140 = vpop.f32.mrf.mxu0
      %v2141 = vadd.f32 %v2052, %v2140
      %v2142 = vpop.f32.mrf.mxu0
      %v2143 = vadd.f32 %v2054, %v2142
      %2144 = vmatmul.bf16.gmra.mxu0 %v1052
      %v2145 = vpop.f32.mrf.mxu0
      %v2146 = vadd.f32 %v2057, %v2145
      %v2147 = vpop.f32.mrf.mxu0
      %v2148 = vadd.f32 %v2059, %v2147
      %2149 = vmatmul.bf16.gmra.mxu0 %v1053
      %v2150 = vpop.f32.mrf.mxu0
      %v2151 = vadd.f32 %v2062, %v2150
      %v2152 = vpop.f32.mrf.mxu0
      %v2153 = vadd.f32 %v2064, %v2152
      %2154 = vmatmul.bf16.gmra.mxu0 %v1054
      %v2155 = vpop.f32.mrf.mxu0
      %v2156 = vadd.f32 %v2067, %v2155
      %v2157 = vpop.f32.mrf.mxu0
      %v2158 = vadd.f32 %v2069, %v2157
      %2159 = vmatmul.bf16.gmra.mxu0 %v1055
      %v2160 = vpop.f32.mrf.mxu0
      %v2161 = vadd.f32 %v2072, %v2160
      %v2162 = vpop.f32.mrf.mxu0
      %v2163 = vadd.f32 %v2074, %v2162
      %2164 = vmatmul.bf16.gmra.mxu0 %v1056
      %v2165 = vpop.f32.mrf.mxu0
      %v2166 = vadd.f32 %v2077, %v2165
      %v2167 = vpop.f32.mrf.mxu0
      %v2168 = vadd.f32 %v2079, %v2167
      %2169 = vmatmul.bf16.gmra.mxu0 %v1057
      %v2170 = vpop.f32.mrf.mxu0
      %v2171 = vadd.f32 %v2082, %v2170
      %v2172 = vpop.f32.mrf.mxu0
      %v2173 = vadd.f32 %v2084, %v2172
      %2174 = vmatmul.bf16.gmra.mxu0 %v1058
      %v2175 = vpop.f32.mrf.mxu0
      %v2176 = vadd.f32 %v2087, %v2175
      %v2177 = vpop.f32.mrf.mxu0
      %v2178 = vadd.f32 %v2089, %v2177
      %2179 = vmatmul.bf16.gmra.mxu0 %v1059
      %v2180 = vpop.f32.mrf.mxu0
      %v2181 = vadd.f32 %v2092, %v2180
      %v2182 = vpop.f32.mrf.mxu0
      %v2183 = vadd.f32 %v2094, %v2182
      %2184 = vmatmul.bf16.gmra.mxu0 %v1060
      %v2185 = vpop.f32.mrf.mxu0
      %v2186 = vadd.f32 %v2097, %v2185
      %v2187 = vpop.f32.mrf.mxu0
      %v2188 = vadd.f32 %v2099, %v2187
      %2189 = vmatmul.bf16.gmra.mxu0 %v1061
      %v2190 = vpop.f32.mrf.mxu0
      %v2191 = vadd.f32 %v2102, %v2190
      %v2192 = vpop.f32.mrf.mxu0
      %v2193 = vadd.f32 %v2104, %v2192
      %2194 = vmatmul.bf16.gmra.mxu0 %v1062
      %v2195 = vpop.f32.mrf.mxu0
      %v2196 = vadd.f32 %v2107, %v2195
      %v2197 = vpop.f32.mrf.mxu0
      %v2198 = vadd.f32 %v2109, %v2197
      %2199 = vmatmul.bf16.gmra.mxu0 %v1063
      %v2200 = vpop.f32.mrf.mxu0
      %v2201 = vadd.f32 %v2112, %v2200
      %v2202 = vpop.f32.mrf.mxu0
      %v2203 = vadd.f32 %v2114, %v2202
      %2204 = vmatmul.bf16.gmra.mxu0 %v1064
      %v2205 = vpop.f32.mrf.mxu0
      %v2206 = vadd.f32 %v2117, %v2205
      %v2207 = vpop.f32.mrf.mxu0
      %v2208 = vadd.f32 %v2119, %v2207
      %2209 = vmatmul.bf16.gmra.mxu0 %v1065
      %v2210 = vpop.f32.mrf.mxu0
      %v2211 = vadd.f32 %v2122, %v2210
      %v2212 = vpop.f32.mrf.mxu0
      %v2213 = vadd.f32 %v2124, %v2212
      %2214 = vmatmul.bf16.gmra.mxu0 %v1092
      %v2215 = vpop.f32.mrf.mxu0
      %v2216 = vadd.f32 %v2127, %v2215
      %v2217 = vpop.f32.mrf.mxu0
      %v2218 = vadd.f32 %v2129, %v2217
      %2219 = vdwg.mxu0
      %2220 = vmatpush.bf16.msra.mxu0 %v1597
      %2221 = vmatpush.bf16.msra.mxu0 %v1596
      %2222 = vmatpush.bf16.msra.mxu0 %v1595
      %2223 = vmatpush.bf16.msra.mxu0 %v1594
      %2224 = vmatpush.bf16.msra.mxu0 %v1593
      %2225 = vmatpush.bf16.msra.mxu0 %v1592
      %2226 = vmatpush.bf16.msra.mxu0 %v1591
      %2227 = vmatpush.bf16.msra.mxu0 %v1590
      %2228 = vmatmul.bf16.gmra.mxu0 %v924
      %v2229 = vpop.f32.mrf.mxu0
      %v2230 = vadd.f32 %v2141, %v2229
      %v2231 = vpop.f32.mrf.mxu0
      %v2232 = vadd.f32 %v2143, %v2231
      %2233 = vmatmul.bf16.gmra.mxu0 %v925
      %v2234 = vpop.f32.mrf.mxu0
      %v2235 = vadd.f32 %v2146, %v2234
      %v2236 = vpop.f32.mrf.mxu0
      %v2237 = vadd.f32 %v2148, %v2236
      %2238 = vmatmul.bf16.gmra.mxu0 %v926
      %v2239 = vpop.f32.mrf.mxu0
      %v2240 = vadd.f32 %v2151, %v2239
      %v2241 = vpop.f32.mrf.mxu0
      %v2242 = vadd.f32 %v2153, %v2241
      %2243 = vmatmul.bf16.gmra.mxu0 %v927
      %v2244 = vpop.f32.mrf.mxu0
      %v2245 = vadd.f32 %v2156, %v2244
      %v2246 = vpop.f32.mrf.mxu0
      %v2247 = vadd.f32 %v2158, %v2246
      %2248 = vmatmul.bf16.gmra.mxu0 %v928
      %v2249 = vpop.f32.mrf.mxu0
      %v2250 = vadd.f32 %v2161, %v2249
      %v2251 = vpop.f32.mrf.mxu0
      %v2252 = vadd.f32 %v2163, %v2251
      %2253 = vmatmul.bf16.gmra.mxu0 %v929
      %v2254 = vpop.f32.mrf.mxu0
      %v2255 = vadd.f32 %v2166, %v2254
      %v2256 = vpop.f32.mrf.mxu0
      %v2257 = vadd.f32 %v2168, %v2256
      %2258 = vmatmul.bf16.gmra.mxu0 %v930
      %v2259 = vpop.f32.mrf.mxu0
      %v2260 = vadd.f32 %v2171, %v2259
      %v2261 = vpop.f32.mrf.mxu0
      %v2262 = vadd.f32 %v2173, %v2261
      %2263 = vmatmul.bf16.gmra.mxu0 %v931
      %v2264 = vpop.f32.mrf.mxu0
      %v2265 = vadd.f32 %v2176, %v2264
      %v2266 = vpop.f32.mrf.mxu0
      %v2267 = vadd.f32 %v2178, %v2266
      %2268 = vmatmul.bf16.gmra.mxu0 %v932
      %v2269 = vpop.f32.mrf.mxu0
      %v2270 = vadd.f32 %v2181, %v2269
      %v2271 = vpop.f32.mrf.mxu0
      %v2272 = vadd.f32 %v2183, %v2271
      %2273 = vmatmul.bf16.gmra.mxu0 %v933
      %v2274 = vpop.f32.mrf.mxu0
      %v2275 = vadd.f32 %v2186, %v2274
      %v2276 = vpop.f32.mrf.mxu0
      %v2277 = vadd.f32 %v2188, %v2276
      %2278 = vmatmul.bf16.gmra.mxu0 %v934
      %v2279 = vpop.f32.mrf.mxu0
      %v2280 = vadd.f32 %v2191, %v2279
      %v2281 = vpop.f32.mrf.mxu0
      %v2282 = vadd.f32 %v2193, %v2281
      %2283 = vmatmul.bf16.gmra.mxu0 %v935
      %v2284 = vpop.f32.mrf.mxu0
      %v2285 = vadd.f32 %v2196, %v2284
      %v2286 = vpop.f32.mrf.mxu0
      %v2287 = vadd.f32 %v2198, %v2286
      %2288 = vmatmul.bf16.gmra.mxu0 %v936
      %v2289 = vpop.f32.mrf.mxu0
      %v2290 = vadd.f32 %v2201, %v2289
      %v2291 = vpop.f32.mrf.mxu0
      %v2292 = vadd.f32 %v2203, %v2291
      %2293 = vmatmul.bf16.gmra.mxu0 %v937
      %v2294 = vpop.f32.mrf.mxu0
      %v2295 = vadd.f32 %v2206, %v2294
      %v2296 = vpop.f32.mrf.mxu0
      %v2297 = vadd.f32 %v2208, %v2296
      %2298 = vmatmul.bf16.gmra.mxu0 %v1084
      %v2299 = vpop.f32.mrf.mxu0
      %v2300 = vadd.f32 %v2211, %v2299
      %v2301 = vpop.f32.mrf.mxu0
      %v2302 = vadd.f32 %v2213, %v2301
      %2303 = vmatmul.bf16.gmra.mxu0 %v1096
      %v2304 = vpop.f32.mrf.mxu0
      %v2305 = vadd.f32 %v2216, %v2304
      %v2306 = vpop.f32.mrf.mxu0
      %v2307 = vadd.f32 %v2218, %v2306
      %2308 = vdwg.mxu0
      %2309 = vmatpush.bf16.msra.mxu0 %v1605
      %2310 = vmatpush.bf16.msra.mxu0 %v1604
      %2311 = vmatpush.bf16.msra.mxu0 %v1603
      %2312 = vmatpush.bf16.msra.mxu0 %v1602
      %2313 = vmatpush.bf16.msra.mxu0 %v1601
      %2314 = vmatpush.bf16.msra.mxu0 %v1600
      %2315 = vmatpush.bf16.msra.mxu0 %v1599
      %2316 = vmatpush.bf16.msra.mxu0 %v1598
      %2317 = vmatmul.bf16.gmra.mxu0 %v988
      %v2318 = vpop.f32.mrf.mxu0
      %v2319 = vadd.f32 %v2230, %v2318
      %v2320 = vpop.f32.mrf.mxu0
      %v2321 = vadd.f32 %v2232, %v2320
      %2322 = vmatmul.bf16.gmra.mxu0 %v989
      %v2323 = vpop.f32.mrf.mxu0
      %v2324 = vadd.f32 %v2235, %v2323
      %v2325 = vpop.f32.mrf.mxu0
      %v2326 = vadd.f32 %v2237, %v2325
      %2327 = vmatmul.bf16.gmra.mxu0 %v990
      %v2328 = vpop.f32.mrf.mxu0
      %v2329 = vadd.f32 %v2240, %v2328
      %v2330 = vpop.f32.mrf.mxu0
      %v2331 = vadd.f32 %v2242, %v2330
      %2332 = vmatmul.bf16.gmra.mxu0 %v991
      %v2333 = vpop.f32.mrf.mxu0
      %v2334 = vadd.f32 %v2245, %v2333
      %v2335 = vpop.f32.mrf.mxu0
      %v2336 = vadd.f32 %v2247, %v2335
      %2337 = vmatmul.bf16.gmra.mxu0 %v992
      %v2338 = vpop.f32.mrf.mxu0
      %v2339 = vadd.f32 %v2250, %v2338
      %v2340 = vpop.f32.mrf.mxu0
      %v2341 = vadd.f32 %v2252, %v2340
      %2342 = vmatmul.bf16.gmra.mxu0 %v993
      %v2343 = vpop.f32.mrf.mxu0
      %v2344 = vadd.f32 %v2255, %v2343
      %v2345 = vpop.f32.mrf.mxu0
      %v2346 = vadd.f32 %v2257, %v2345
      %2347 = vmatmul.bf16.gmra.mxu0 %v994
      %v2348 = vpop.f32.mrf.mxu0
      %v2349 = vadd.f32 %v2260, %v2348
      %v2350 = vpop.f32.mrf.mxu0
      %v2351 = vadd.f32 %v2262, %v2350
      %2352 = vmatmul.bf16.gmra.mxu0 %v995
      %v2353 = vpop.f32.mrf.mxu0
      %v2354 = vadd.f32 %v2265, %v2353
      %v2355 = vpop.f32.mrf.mxu0
      %v2356 = vadd.f32 %v2267, %v2355
      %2357 = vmatmul.bf16.gmra.mxu0 %v996
      %v2358 = vpop.f32.mrf.mxu0
      %v2359 = vadd.f32 %v2270, %v2358
      %v2360 = vpop.f32.mrf.mxu0
      %v2361 = vadd.f32 %v2272, %v2360
      %2362 = vmatmul.bf16.gmra.mxu0 %v997
      %v2363 = vpop.f32.mrf.mxu0
      %v2364 = vadd.f32 %v2275, %v2363
      %v2365 = vpop.f32.mrf.mxu0
      %v2366 = vadd.f32 %v2277, %v2365
      %2367 = vmatmul.bf16.gmra.mxu0 %v998
      %v2368 = vpop.f32.mrf.mxu0
      %v2369 = vadd.f32 %v2280, %v2368
      %v2370 = vpop.f32.mrf.mxu0
      %v2371 = vadd.f32 %v2282, %v2370
      %2372 = vmatmul.bf16.gmra.mxu0 %v999
      %v2373 = vpop.f32.mrf.mxu0
      %v2374 = vadd.f32 %v2285, %v2373
      %v2375 = vpop.f32.mrf.mxu0
      %v2376 = vadd.f32 %v2287, %v2375
      %2377 = vmatmul.bf16.gmra.mxu0 %v1000
      %v2378 = vpop.f32.mrf.mxu0
      %v2379 = vadd.f32 %v2290, %v2378
      %v2380 = vpop.f32.mrf.mxu0
      %v2381 = vadd.f32 %v2292, %v2380
      %2382 = vmatmul.bf16.gmra.mxu0 %v1001
      %v2383 = vpop.f32.mrf.mxu0
      %v2384 = vadd.f32 %v2295, %v2383
      %v2385 = vpop.f32.mrf.mxu0
      %v2386 = vadd.f32 %v2297, %v2385
      %2387 = vmatmul.bf16.gmra.mxu0 %v1088
      %v2388 = vpop.f32.mrf.mxu0
      %v2389 = vadd.f32 %v2300, %v2388
      %v2390 = vpop.f32.mrf.mxu0
      %v2391 = vadd.f32 %v2302, %v2390
      %2392 = vmatmul.bf16.gmra.mxu0 %v1100
      %v2393 = vpop.f32.mrf.mxu0
      %v2394 = vadd.f32 %v2305, %v2393
      %v2395 = vpop.f32.mrf.mxu0
      %v2396 = vadd.f32 %v2307, %v2395
      %2397 = vdwg.mxu0
      %2398 = vmatpush.bf16.msra.mxu0 %v1613
      %2399 = vmatpush.bf16.msra.mxu0 %v1612
      %2400 = vmatpush.bf16.msra.mxu0 %v1611
      %2401 = vmatpush.bf16.msra.mxu0 %v1610
      %2402 = vmatpush.bf16.msra.mxu0 %v1609
      %2403 = vmatpush.bf16.msra.mxu0 %v1608
      %2404 = vmatpush.bf16.msra.mxu0 %v1607
      %2405 = vmatpush.bf16.msra.mxu0 %v1606
      %2406 = vmatmul.bf16.gmra.mxu0 %v1052
      %v2407 = vpop.f32.mrf.mxu0
      %v2408 = vadd.f32 %v2319, %v2407
      %v2409 = vpop.f32.mrf.mxu0
      %v2410 = vadd.f32 %v2321, %v2409
      %2411 = vmatmul.bf16.gmra.mxu0 %v1053
      %v2412 = vpop.f32.mrf.mxu0
      %v2413 = vadd.f32 %v2324, %v2412
      %v2414 = vpop.f32.mrf.mxu0
      %v2415 = vadd.f32 %v2326, %v2414
      %2416 = vmatmul.bf16.gmra.mxu0 %v1054
      %v2417 = vpop.f32.mrf.mxu0
      %v2418 = vadd.f32 %v2329, %v2417
      %v2419 = vpop.f32.mrf.mxu0
      %v2420 = vadd.f32 %v2331, %v2419
      %2421 = vmatmul.bf16.gmra.mxu0 %v1055
      %v2422 = vpop.f32.mrf.mxu0
      %v2423 = vadd.f32 %v2334, %v2422
      %v2424 = vpop.f32.mrf.mxu0
      %v2425 = vadd.f32 %v2336, %v2424
      %2426 = vmatmul.bf16.gmra.mxu0 %v1056
      %v2427 = vpop.f32.mrf.mxu0
      %v2428 = vadd.f32 %v2339, %v2427
      %v2429 = vpop.f32.mrf.mxu0
      %v2430 = vadd.f32 %v2341, %v2429
      %2431 = vmatmul.bf16.gmra.mxu0 %v1057
      %v2432 = vpop.f32.mrf.mxu0
      %v2433 = vadd.f32 %v2344, %v2432
      %v2434 = vpop.f32.mrf.mxu0
      %v2435 = vadd.f32 %v2346, %v2434
      %2436 = vmatmul.bf16.gmra.mxu0 %v1058
      %v2437 = vpop.f32.mrf.mxu0
      %v2438 = vadd.f32 %v2349, %v2437
      %v2439 = vpop.f32.mrf.mxu0
      %v2440 = vadd.f32 %v2351, %v2439
      %2441 = vmatmul.bf16.gmra.mxu0 %v1059
      %v2442 = vpop.f32.mrf.mxu0
      %v2443 = vadd.f32 %v2354, %v2442
      %v2444 = vpop.f32.mrf.mxu0
      %v2445 = vadd.f32 %v2356, %v2444
      %2446 = vmatmul.bf16.gmra.mxu0 %v1060
      %v2447 = vpop.f32.mrf.mxu0
      %v2448 = vadd.f32 %v2359, %v2447
      %v2449 = vpop.f32.mrf.mxu0
      %v2450 = vadd.f32 %v2361, %v2449
      %2451 = vmatmul.bf16.gmra.mxu0 %v1061
      %v2452 = vpop.f32.mrf.mxu0
      %v2453 = vadd.f32 %v2364, %v2452
      %v2454 = vpop.f32.mrf.mxu0
      %v2455 = vadd.f32 %v2366, %v2454
      %2456 = vmatmul.bf16.gmra.mxu0 %v1062
      %v2457 = vpop.f32.mrf.mxu0
      %v2458 = vadd.f32 %v2369, %v2457
      %v2459 = vpop.f32.mrf.mxu0
      %v2460 = vadd.f32 %v2371, %v2459
      %2461 = vmatmul.bf16.gmra.mxu0 %v1063
      %v2462 = vpop.f32.mrf.mxu0
      %v2463 = vadd.f32 %v2374, %v2462
      %v2464 = vpop.f32.mrf.mxu0
      %v2465 = vadd.f32 %v2376, %v2464
      %2466 = vmatmul.bf16.gmra.mxu0 %v1064
      %v2467 = vpop.f32.mrf.mxu0
      %v2468 = vadd.f32 %v2379, %v2467
      %v2469 = vpop.f32.mrf.mxu0
      %v2470 = vadd.f32 %v2381, %v2469
      %2471 = vmatmul.bf16.gmra.mxu0 %v1065
      %v2472 = vpop.f32.mrf.mxu0
      %v2473 = vadd.f32 %v2384, %v2472
      %v2474 = vpop.f32.mrf.mxu0
      %v2475 = vadd.f32 %v2386, %v2474
      %2476 = vmatmul.bf16.gmra.mxu0 %v1092
      %v2477 = vpop.f32.mrf.mxu0
      %v2478 = vadd.f32 %v2389, %v2477
      %v2479 = vpop.f32.mrf.mxu0
      %v2480 = vadd.f32 %v2391, %v2479
      %2481 = vmatmul.bf16.gmra.mxu0 %v1104
      %v2482 = vpop.f32.mrf.mxu0
      %v2483 = vadd.f32 %v2394, %v2482
      %v2484 = vpop.f32.mrf.mxu0
      %v2485 = vadd.f32 %v2396, %v2484
      %2486 = vdwg.mxu0
      %v2487 = vld [vmem:[%s212] sm:$0xf]
      %v2488 = vld [vmem:[%s212 + $0x4] sm:$0xf]
      %v2489 = vld [vmem:[%s212 + $0x8] sm:$0xf]
      %v2490 = vld [vmem:[%s212 + $0xc] sm:$0xf]
      %v2491 = vld [vmem:[%s212 + $0x10] sm:$0xf]
      %v2492 = vld [vmem:[%s212 + $0x14] sm:$0xf]
      %v2493 = vld [vmem:[%s212 + $0x18] sm:$0xf]
      %v2494 = vld [vmem:[%s212 + $0x1c] sm:$0xf]
      %v2495 = vld [vmem:[%s212 + $0x20] sm:$0xf]
      %v2496 = vld [vmem:[%s212 + $0x24] sm:$0xf]
      %v2497 = vld [vmem:[%s212 + $0x28] sm:$0xf]
      %v2498 = vld [vmem:[%s212 + $0x2c] sm:$0xf]
      %v2499 = vld [vmem:[%s212 + $0x30] sm:$0xf]
      %v2500 = vld [vmem:[%s212 + $0x34] sm:$0xf]
      %v2501 = vld [vmem:[%s212 + $0x38] sm:$0xf]
      %v2502 = vld [vmem:[%s212 + $0x3c] sm:$0xf]
      %v2503 = vld [vmem:[%s212 + $0x40] sm:$0xf]
      %v2504 = vld [vmem:[%s212 + $0x44] sm:$0xf]
      %v2505 = vld [vmem:[%s212 + $0x48] sm:$0xf]
      %v2506 = vld [vmem:[%s212 + $0x4c] sm:$0xf]
      %v2507 = vld [vmem:[%s212 + $0x50] sm:$0xf]
      %v2508 = vld [vmem:[%s212 + $0x54] sm:$0xf]
      %v2509 = vld [vmem:[%s212 + $0x58] sm:$0xf]
      %v2510 = vld [vmem:[%s212 + $0x5c] sm:$0xf]
      %v2511 = vld [vmem:[%s212 + $0x60] sm:$0xf]
      %v2512 = vld [vmem:[%s212 + $0x64] sm:$0xf]
      %v2513 = vld [vmem:[%s212 + $0x68] sm:$0xf]
      %v2514 = vld [vmem:[%s212 + $0x6c] sm:$0xf]
      %v2515 = vld [vmem:[%s212 + $0x70] sm:$0xf]
      %v2516 = vld [vmem:[%s212 + $0x74] sm:$0xf]
      %v2517 = vld [vmem:[%s212 + $0x78] sm:$0xf]
      %v2518 = vld [vmem:[%s212 + $0x7c] sm:$0xf]
      %v2519 = vunpack.c.l.bf16 %v2487
      %v2520 = vunpack.c.l.bf16 %v2488
      %v2521 = vunpack.c.l.bf16 %v2489
      %v2522 = vunpack.c.l.bf16 %v2490
      %v2523 = vunpack.c.l.bf16 %v2491
      %v2524 = vunpack.c.l.bf16 %v2492
      %v2525 = vunpack.c.l.bf16 %v2493
      %v2526 = vunpack.c.l.bf16 %v2494
      %v2527 = vunpack.c.l.bf16 %v2495
      %v2528 = vunpack.c.l.bf16 %v2496
      %v2529 = vunpack.c.l.bf16 %v2497
      %v2530 = vunpack.c.l.bf16 %v2498
      %v2531 = vunpack.c.l.bf16 %v2499
      %v2532 = vunpack.c.l.bf16 %v2500
      %v2533 = vunpack.c.l.bf16 %v2501
      %v2534 = vunpack.c.l.bf16 %v2502
      %v2535 = vunpack.c.l.bf16 %v2503
      %v2536 = vunpack.c.l.bf16 %v2504
      %v2537 = vunpack.c.l.bf16 %v2505
      %v2538 = vunpack.c.l.bf16 %v2506
      %v2539 = vunpack.c.l.bf16 %v2507
      %v2540 = vunpack.c.l.bf16 %v2508
      %v2541 = vunpack.c.l.bf16 %v2509
      %v2542 = vunpack.c.l.bf16 %v2510
      %v2543 = vunpack.c.l.bf16 %v2511
      %v2544 = vunpack.c.l.bf16 %v2512
      %v2545 = vunpack.c.l.bf16 %v2513
      %v2546 = vunpack.c.l.bf16 %v2514
      %v2547 = vunpack.c.l.bf16 %v2515
      %v2548 = vunpack.c.l.bf16 %v2516
      %v2549 = vunpack.c.l.bf16 %v2517
      %v2550 = vunpack.c.l.bf16 %v2518
      %v2551 = vadd.f32 %v2408, %v2519
      %v2552 = vadd.f32 %v2410, %v2520
      %v2553 = vadd.f32 %v2413, %v2521
      %v2554 = vadd.f32 %v2415, %v2522
      %v2555 = vadd.f32 %v2418, %v2523
      %v2556 = vadd.f32 %v2420, %v2524
      %v2557 = vadd.f32 %v2423, %v2525
      %v2558 = vadd.f32 %v2425, %v2526
      %v2559 = vadd.f32 %v2428, %v2527
      %v2560 = vadd.f32 %v2430, %v2528
      %v2561 = vadd.f32 %v2433, %v2529
      %v2562 = vadd.f32 %v2435, %v2530
      %v2563 = vadd.f32 %v2438, %v2531
      %v2564 = vadd.f32 %v2440, %v2532
      %v2565 = vadd.f32 %v2443, %v2533
      %v2566 = vadd.f32 %v2445, %v2534
      %v2567 = vadd.f32 %v2448, %v2535
      %v2568 = vadd.f32 %v2450, %v2536
      %v2569 = vadd.f32 %v2453, %v2537
      %v2570 = vadd.f32 %v2455, %v2538
      %v2571 = vadd.f32 %v2458, %v2539
      %v2572 = vadd.f32 %v2460, %v2540
      %v2573 = vadd.f32 %v2463, %v2541
      %v2574 = vadd.f32 %v2465, %v2542
      %v2575 = vadd.f32 %v2468, %v2543
      %v2576 = vadd.f32 %v2470, %v2544
      %v2577 = vadd.f32 %v2473, %v2545
      %v2578 = vadd.f32 %v2475, %v2546
      %v2579 = vadd.f32 %v2478, %v2547
      %v2580 = vadd.f32 %v2480, %v2548
      %v2581 = vadd.f32 %v2483, %v2549
      %v2582 = vadd.f32 %v2485, %v2550
      %v2583 = vmax.f32 %v2551, 0.0
      %v2584 = vmax.f32 %v2552, 0.0
      %v2585 = vmax.f32 %v2553, 0.0
      %v2586 = vmax.f32 %v2554, 0.0
      %v2587 = vmax.f32 %v2555, 0.0
      %v2588 = vmax.f32 %v2556, 0.0
      %v2589 = vmax.f32 %v2557, 0.0
      %v2590 = vmax.f32 %v2558, 0.0
      %v2591 = vmax.f32 %v2559, 0.0
      %v2592 = vmax.f32 %v2560, 0.0
      %v2593 = vmax.f32 %v2561, 0.0
      %v2594 = vmax.f32 %v2562, 0.0
      %v2595 = vmax.f32 %v2563, 0.0
      %v2596 = vmax.f32 %v2564, 0.0
      %v2597 = vmax.f32 %v2565, 0.0
      %v2598 = vmax.f32 %v2566, 0.0
      %v2599 = vmax.f32 %v2567, 0.0
      %v2600 = vmax.f32 %v2568, 0.0
      %v2601 = vmax.f32 %v2569, 0.0
      %v2602 = vmax.f32 %v2570, 0.0
      %v2603 = vmax.f32 %v2571, 0.0
      %v2604 = vmax.f32 %v2572, 0.0
      %v2605 = vmax.f32 %v2573, 0.0
      %v2606 = vmax.f32 %v2574, 0.0
      %v2607 = vmax.f32 %v2575, 0.0
      %v2608 = vmax.f32 %v2576, 0.0
      %v2609 = vmax.f32 %v2577, 0.0
      %v2610 = vmax.f32 %v2578, 0.0
      %v2611 = vmax.f32 %v2579, 0.0
      %v2612 = vmax.f32 %v2580, 0.0
      %v2613 = vmax.f32 %v2581, 0.0
      %v2614 = vmax.f32 %v2582, 0.0
      %2615 = vst [vmem:[%s217] sm:$0xff] %v2583
      %2616 = vst [vmem:[%s217 + $0x8] sm:$0xff] %v2584
      %2617 = vst [vmem:[%s217 + $0x10] sm:$0xff] %v2585
      %2618 = vst [vmem:[%s217 + $0x18] sm:$0xff] %v2586
      %2619 = vst [vmem:[%s217 + $0x20] sm:$0xff] %v2587
      %2620 = vst [vmem:[%s217 + $0x28] sm:$0xff] %v2588
      %2621 = vst [vmem:[%s217 + $0x30] sm:$0xff] %v2589
      %2622 = vst [vmem:[%s217 + $0x38] sm:$0xff] %v2590
      %2623 = vst [vmem:[%s217 + $0x40] sm:$0xff] %v2591
      %2624 = vst [vmem:[%s217 + $0x48] sm:$0xff] %v2592
      %2625 = vst [vmem:[%s217 + $0x50] sm:$0xff] %v2593
      %2626 = vst [vmem:[%s217 + $0x58] sm:$0xff] %v2594
      %2627 = vst [vmem:[%s217 + $0x60] sm:$0xff] %v2595
      %2628 = vst [vmem:[%s217 + $0x68] sm:$0xff] %v2596
      %2629 = vst [vmem:[%s217 + $0x70] sm:$0xff] %v2597
      %2630 = vst [vmem:[%s217 + $0x78] sm:$0xff] %v2598
      %2631 = vst [vmem:[%s217 + $0x80] sm:$0xff] %v2599
      %2632 = vst [vmem:[%s217 + $0x88] sm:$0xff] %v2600
      %2633 = vst [vmem:[%s217 + $0x90] sm:$0xff] %v2601
      %2634 = vst [vmem:[%s217 + $0x98] sm:$0xff] %v2602
      %2635 = vst [vmem:[%s217 + $0xa0] sm:$0xff] %v2603
      %2636 = vst [vmem:[%s217 + $0xa8] sm:$0xff] %v2604
      %2637 = vst [vmem:[%s217 + $0xb0] sm:$0xff] %v2605
      %2638 = vst [vmem:[%s217 + $0xb8] sm:$0xff] %v2606
      %2639 = vst [vmem:[%s217 + $0xc0] sm:$0xff] %v2607
      %2640 = vst [vmem:[%s217 + $0xc8] sm:$0xff] %v2608
      %2641 = vst [vmem:[%s217 + $0xd0] sm:$0xff] %v2609
      %2642 = vst [vmem:[%s217 + $0xd8] sm:$0xff] %v2610
      %2643 = vst [vmem:[%s217 + $0xe0] sm:$0xff] %v2611
      %2644 = vst [vmem:[%s217 + $0xe8] sm:$0xff] %v2612
      %2645 = vst [vmem:[%s217 + $0xf0] sm:$0xff] %v2613
      %2646 = vst [vmem:[%s217 + $0xf8] sm:$0xff] %v2614
      %p2647 = scmp.lt.s32.totalorder %s15, 1
      %s2648 = scalar_select %p2647, %s15, 1
      %s2649 = smul.addr %s2648, 32
      %s2650 = smul.addr %s2649, 8
      %s2651 = scalar_lea.vmem %s4, %s2650
      // Predicated region
      $region37: #{basic_block_forward.3} parent=35 // pred_check
        %p2652 = pneg %p127
      $region38: #{basic_block_forward.3} parent=35 // pred_check_branch
        %2654 = sbr.rel (%p2652) target = $region40
      $region39: #{basic_block_forward.3} parent=35 // pred_region
        _
      $region40: #{basic_block_forward.3} parent=35 // pred_fallthru
        _
    $region36: #{basic_block_forward.3} parent=5 // pred_fallthru
      _
    %p2655 = scmp.le.s32.totalorder 2, %s10
    // Predicated region
    $region41: #{basic_block_forward.3} parent=5 // pred_check
      %p2656 = pneg %p2655
    $region42: #{basic_block_forward.3} parent=5 // pred_check_branch
      %2658 = sbr.rel (%p2656) target = $region44
    $region43: #{basic_block_forward.3} parent=5 // pred_region
      %s2659 = ssub.s32 %s10, 2
      // Predicated region
      $region45: #{basic_block_forward.3} parent=43 // pred_check
        %p2660 = pneg %p133
      $region46: #{basic_block_forward.3} parent=43 // pred_check_branch
        %2662 = sbr.rel (%p2660) target = $region48
      $region47: #{basic_block_forward.3} parent=43 // pred_region
        %p2663 = scmp.lt.s32.totalorder %s16, 1
        %s2664 = scalar_select %p2663, %s16, 1
        %s2665 = smul.addr %s2664, 32
        %s2666 = smul.addr %s2665, 8
        %s2667 = scalar_lea.vmem %s4, %s2666
      $region48: #{basic_block_forward.3} parent=43 // pred_fallthru
        _
    $region44: #{basic_block_forward.3} parent=5 // pred_fallthru
      _
  $region6: #{basic_block_forward.3} parent=0 // loop_footer
    %s14 = sadd.s32 1, %s10
  $region7: #{basic_block_forward.3} parent=0 // loop_footer_branch
    %9 = sbr.rel target = $region3
  $region8: #{basic_block_forward.3} parent=0 // loop_exit
    _

</llo_original>
